<compile_context>
chip_gen: v6e
topology: v6e:2x2x1
jax: 0.10.0
libtpu: 0.0.40
codegen_flags: <defaults>
</compile_context>

<pallas_src>
import functools
import math

import jax
import jax.numpy as jnp
from jax.experimental import pallas as pl
from jax.experimental.pallas import tpu as pltpu


def _pick_unroll(L):
    # modest unroll that divides the trip count exactly (keeps LLO visibility,
    # bounds vreg pressure)
    for u in (8, 4, 2, 1):
        if L % u == 0:
            return u
    return 1


# ----------------------------------------------------------------------------
# Pallas kernel: one bidirectional LSTM layer, whole sequence in one invocation.
# ----------------------------------------------------------------------------
def _bilstm_layer_kernel(L, B, H, len_ref, x_ref, w_in_ref, w_hh_ref, b_ref,
                         out_ref, gx_scr):
    D = x_ref.shape[-1]
    H2 = 2 * H
    G = 8 * H                        # gates for both directions, interleaved per gate

    # ---- hoisted input projection for all timesteps, both directions (bias folded in)
    x2d = x_ref[...].reshape(L * B, D)
    proj = (jnp.dot(x2d, w_in_ref[...], preferred_element_type=jnp.float32)
            + b_ref[...])                                   # (L*B, 8H)
    gx_scr[...] = proj.reshape(L, B, G)

    lens = len_ref[...]              # (B, 1) int32, loaded once
    w_hh = w_hh_ref[...]             # (2H, 8H) block-structured recurrent weights
    # hoisted per-lane direction masks: second H lanes of each 2H gate pair = backward
    back8 = (jax.lax.broadcasted_iota(jnp.int32, (B, G), 1) % H2) >= H
    back2 = jax.lax.broadcasted_iota(jnp.int32, (B, H2), 1) >= H

    def step(s, carry):
        h, c = carry                 # h = [h_fwd | h_bwd], c likewise, (B, 2H) f32
        t_b = L - 1 - s              # backward-direction time index at this step

        # forward gate columns take the projection of x_s, backward take x_{L-1-s};
        # this select does not depend on h/c so it hides under the recurrent matmul.
        gates_x = jnp.where(back8, gx_scr[t_b], gx_scr[s])
        gates = gates_x + jnp.dot(h, w_hh, preferred_element_type=jnp.float32)

        sig = jax.nn.sigmoid(gates[:, 0:3 * H2])            # [i_f i_b f_f f_b o_f o_b]
        i_g = sig[:, 0:H2]
        f_g = sig[:, H2:2 * H2]
        o_g = sig[:, 2 * H2:3 * H2]
        g_g = jnp.tanh(gates[:, 3 * H2:4 * H2])              # [g_f g_b]

        c_new = f_g * c + i_g * g_g
        h_new = o_g * jnp.tanh(c_new)

        # packed-sequence validity: forward half uses time s, backward half time L-1-s
        t_eff = jnp.where(back2, t_b, s)
        mask = t_eff < lens                                  # (B, 2H) bool
        h = jnp.where(mask, h_new, h)
        c = jnp.where(mask, c_new, c)
        out = h_new * mask.astype(jnp.float32)               # zeros at padded timesteps

        out_ref[s, :, 0:H] = out[:, 0:H]                     # forward half @ time s
        out_ref[t_b, :, H:H2] = out[:, H:H2]                 # backward half @ time L-1-s
        return h, c

    h0 = jnp.zeros((B, H2), jnp.float32)
    c0 = jnp.zeros((B, H2), jnp.float32)
    jax.lax.fori_loop(0, L, step, (h0, c0), unroll=_pick_unroll(L))


def bilstm_layer(x, len2d, w_in, w_hh, b, L, B, H):
    """x: (L, B, D) f32; len2d: (B, 1) int32; returns (L, B, 2H)."""
    D = x.shape[-1]
    G = 8 * H
    # explicit scoped-VMEM budget from actual block sizes (x + out double-buffered,
    # weights, gx scratch) with headroom; capped well below physical VMEM.
    need = 4 * (L * B * (D + 2 * H + G) + D * G + 2 * H * G + G + B)
    vmem_limit = int(min(110 * 2 ** 20, max(32 * 2 ** 20, 2 * need + (4 << 20))))

    kernel = functools.partial(_bilstm_layer_kernel, L, B, H)
    return pl.pallas_call(
        kernel,
        out_shape=jax.ShapeDtypeStruct((L, B, 2 * H), jnp.float32),
        grid=(1,),
        in_specs=[
            pl.BlockSpec((B, 1), lambda i: (0, 0)),              # lengths
            pl.BlockSpec((L, B, D), lambda i: (0, 0, 0)),        # layer input
            pl.BlockSpec((D, G), lambda i: (0, 0)),              # dense W_ih (both dirs)
            pl.BlockSpec((2 * H, G), lambda i: (0, 0)),          # block-diag W_hh
            pl.BlockSpec((1, G), lambda i: (0, 0)),              # combined bias
        ],
        out_specs=pl.BlockSpec((L, B, 2 * H), lambda i: (0, 0, 0)),
        scratch_shapes=[pltpu.VMEM((L, B, G), jnp.float32)],     # precomputed x-gates
        compiler_params=pltpu.CompilerParams(
            dimension_semantics=("arbitrary",),
            vmem_limit_bytes=vmem_limit),
    )(len2d, x, w_in, w_hh, b)


# ----------------------------------------------------------------------------
# Pallas kernel: final Linear(2H -> 3), row-tiled, output padded to 128 lanes
# (dense stores); padding sliced away outside.
# ----------------------------------------------------------------------------
def _fc_kernel(x_ref, w_ref, b_ref, o_ref):
    o_ref[...] = (jnp.dot(x_ref[...], w_ref[...],
                          preferred_element_type=jnp.float32) + b_ref[...])


def fc_pallas(x2d, w_pad, b_pad):
    N, D = x2d.shape
    O = w_pad.shape[1]               # 128 (padded)
    TILE = 512
    if N <= TILE:
        TILE = N
        n_pad = N
    else:
        n_pad = ((N + TILE - 1) // TILE) * TILE
        if n_pad != N:
            x2d = jnp.pad(x2d, ((0, n_pad - N), (0, 0)))
    out = pl.pallas_call(
        _fc_kernel,
        out_shape=jax.ShapeDtypeStruct((n_pad, O), jnp.float32),
        grid=(n_pad // TILE,),
        in_specs=[pl.BlockSpec((TILE, D), lambda i: (i, 0)),
                  pl.BlockSpec((D, O), lambda i: (0, 0)),
                  pl.BlockSpec((1, O), lambda i: (0, 0))],
        out_specs=pl.BlockSpec((TILE, O), lambda i: (i, 0)),
        compiler_params=pltpu.CompilerParams(
            dimension_semantics=("parallel",)),
    )(x2d, w_pad, b_pad)
    return out[:N]


# ----------------------------------------------------------------------------
# Parameter init (deterministic; same shapes/init range as nn.LSTM / nn.Linear),
# pre-packed into the fused layout used by the kernel.
# ----------------------------------------------------------------------------
def init_params(key, hidden_size=32, n_layers=2, input_size=41):
    H = hidden_size
    bound = 1.0 / math.sqrt(H)
    keys = iter(jax.random.split(key, n_layers * 8 + 2))

    def u(k, shape):
        return jax.random.uniform(k, shape, jnp.float32, -bound, bound)

    def combine_cols(m_f, m_b):
        # m_f/m_b: (R, 4H) with PyTorch gate order (i, f, g, o).
        # Result columns: [i_f, i_b, f_f, f_b, o_f, o_b, g_f, g_b]  (each H wide),
        # i.e. sigmoid gates first (contiguous 6H lanes), tanh gate last (2H lanes).
        order = (0, 1, 3, 2)   # i, f, o, g
        parts = []
        for g in order:
            parts.append(m_f[:, g * H:(g + 1) * H])
            parts.append(m_b[:, g * H:(g + 1) * H])
        return jnp.concatenate(parts, axis=1)

    layers = []
    for layer in range(n_layers):
        in_dim = input_size if layer == 0 else 2 * H
        wf_ih = u(next(keys), (4 * H, in_dim)); wf_hh = u(next(keys), (4 * H, H))
        bf_ih = u(next(keys), (4 * H,));        bf_hh = u(next(keys), (4 * H,))
        wb_ih = u(next(keys), (4 * H, in_dim)); wb_hh = u(next(keys), (4 * H, H))
        bb_ih = u(next(keys), (4 * H,));        bb_hh = u(next(keys), (4 * H,))

        # dense input weight: both directions project the same x_t (time offset handled
        # in the recurrence), so no zero blocks and no duplicated input features.
        w_in = combine_cols(wf_ih.T, wb_ih.T)                             # (in_dim, 8H)
        zH = jnp.zeros((H, 4 * H), jnp.float32)
        # rows [:H] multiply h_fwd (forward gate cols only), rows [H:] multiply h_bwd
        w_hh = combine_cols(jnp.concatenate([wf_hh.T, zH], axis=0),
                            jnp.concatenate([zH, wb_hh.T], axis=0))       # (2H, 8H)
        b = combine_cols((bf_ih + bf_hh)[None, :],
                         (bb_ih + bb_hh)[None, :])                         # (1, 8H)
        layers.append({"w_in": w_in, "w_hh": w_hh, "b": b})

    fc_bound = 1.0 / math.sqrt(2 * H)
    fc_w = jax.random.uniform(next(keys), (3, 2 * H), jnp.float32, -fc_bound, fc_bound)
    fc_b = jax.random.uniform(next(keys), (3,), jnp.float32, -fc_bound, fc_bound)
    fc_w_pad = jnp.zeros((2 * H, 128), jnp.float32).at[:, :3].set(fc_w.T)
    fc_b_pad = jnp.zeros((1, 128), jnp.float32).at[:, :3].set(fc_b)
    return {"hidden_size": H, "n_layers": n_layers, "layers": layers,
            "fc_w_pad": fc_w_pad, "fc_b_pad": fc_b_pad}


# ----------------------------------------------------------------------------
# Forward pass (glue in plain JAX, hot paths in Pallas)
# ----------------------------------------------------------------------------
def psifold_lstm_forward(params, seq, pssm, lengths):
    L, B = seq.shape
    H = params["hidden_size"]

    one_hot = jax.nn.one_hot(seq, 20, dtype=pssm.dtype)        # (L, B, 20)
    x = jnp.concatenate([one_hot, pssm], axis=2)               # (L, B, 41)

    # pad batch to a sublane multiple once; padded rows have length 0 -> zero outputs
    B_pad = ((B + 7) // 8) * 8
    lengths = lengths.astype(jnp.int32)
    if B_pad != B:
        x = jnp.pad(x, ((0, 0), (0, B_pad - B), (0, 0)))
        lengths = jnp.pad(lengths, (0, B_pad - B))
    len2d = lengths.reshape(B_pad, 1)

    for layer in range(params["n_layers"]):
        p = params["layers"][layer]
        x = bilstm_layer(x, len2d, p["w_in"], p["w_hh"], p["b"], L, B_pad, H)
        # TODO(synk): nn.LSTM inter-layer dropout (p=0.5) is training-only and
        # stochastic; eval-mode semantics (identity) are implemented here.

    fc_out = fc_pallas(x.reshape(L * B_pad, 2 * H),
                       params["fc_w_pad"], params["fc_b_pad"])    # (L*B_pad, 128)
    srf = fc_out[:, :3].reshape(L, B_pad, 3)[:, :B, :]
    return srf


if __name__ == "__main__":
    key = jax.random.PRNGKey(0)
    L, B = 8, 2
    hidden_size, n_layers = 32, 2

    k1, k2, k3 = jax.random.split(key, 3)
    seq = jax.random.randint(k1, (L, B), 0, 20, dtype=jnp.int32)
    pssm = jax.random.uniform(k2, (L, B, 21), dtype=jnp.float32)
    lengths = jnp.array([8, 5], dtype=jnp.int32)   # sorted descending (packed)

    params = init_params(k3, hidden_size=hidden_size, n_layers=n_layers)
    fwd = jax.jit(functools.partial(psifold_lstm_forward, params))
    srf = fwd(seq, pssm, lengths)
    jax.block_until_ready(srf)
    assert srf.shape == (L, B, 3) and srf.dtype == jnp.float32
    print("KERNEL_OK")
</pallas_src>

<mosaic_0001>
module attributes {stable_mosaic.version = 11 : i64} {
  func.func @_fc_kernel(%arg0: i32, %arg1: memref<64x64xf32, #tpu.memory_space<vmem>>, %arg2: memref<64x128xf32, #tpu.memory_space<vmem>>, %arg3: memref<1x128xf32, #tpu.memory_space<vmem>>, %arg4: memref<64x128xf32, #tpu.memory_space<vmem>>) attributes {dimension_semantics = [#tpu.dimension_semantics<parallel>], iteration_bounds = array<i64: 1>, scalar_prefetch = 0 : i64, scratch_operands = 0 : i64, tpu.core_type = #tpu.core_type<tc>, window_params = [{transform_indices = @transform_0, window_bounds = array<i64: 64, 64>}, {pipeline_mode = #tpu.pipeline_mode<synchronous>, transform_indices = @transform_1, window_bounds = array<i64: 64, 128>}, {pipeline_mode = #tpu.pipeline_mode<synchronous>, transform_indices = @transform_2, window_bounds = array<i64: 1, 128>}, {transform_indices = @transform_3, window_bounds = array<i64: 64, 128>}]} {
    %c0 = arith.constant 0 : index
    %c0_0 = arith.constant 0 : index
    %0 = vector.load %arg1[%c0, %c0_0] : memref<64x64xf32, #tpu.memory_space<vmem>>, vector<64x64xf32>
    %c0_1 = arith.constant 0 : index
    %c0_2 = arith.constant 0 : index
    %1 = vector.load %arg2[%c0_1, %c0_2] : memref<64x128xf32, #tpu.memory_space<vmem>>, vector<64x128xf32>
    %cst = arith.constant dense<0.000000e+00> : vector<64x128xf32>
    %2 = tpu.matmul %0, %1, %cst {dimension_numbers = #tpu.dot_dimension_numbers<[1], [0], [0], [1], [0, 0, 1, 1], [], []>} : vector<64x64xf32>, vector<64x128xf32>, vector<64x128xf32> -> vector<64x128xf32>
    %c0_3 = arith.constant 0 : index
    %c0_4 = arith.constant 0 : index
    %3 = vector.load %arg3[%c0_3, %c0_4] : memref<1x128xf32, #tpu.memory_space<vmem>>, vector<1x128xf32>
    %4 = vector.broadcast %3 : vector<1x128xf32> to vector<64x128xf32>
    %5 = arith.addf %2, %4 : vector<64x128xf32>
    %c0_5 = arith.constant 0 : index
    %c0_6 = arith.constant 0 : index
    %6 = vector.load %arg4[%c0_5, %c0_6] : memref<64x128xf32, #tpu.memory_space<vmem>>, vector<64x128xf32>
    tpu.vector_store %arg4[%c0_5, %c0_6], %5 {strides = array<i32>} : memref<64x128xf32, #tpu.memory_space<vmem>>, vector<64x128xf32>,
    return
  }
  func.func @transform_0(%arg0: i32) -> (i32, i32) {
    %c0_i32 = arith.constant 0 : i32
    %c0_i32_0 = arith.constant 0 : i32
    return %arg0, %c0_i32 : i32, i32
  }
  func.func @transform_1(%arg0: i32) -> (i32, i32) {
    %c0_i32 = arith.constant 0 : i32
    %c0_i32_0 = arith.constant 0 : i32
    %c0_i32_1 = arith.constant 0 : i32
    return %c0_i32, %c0_i32_0 : i32, i32
  }
  func.func @transform_2(%arg0: i32) -> (i32, i32) {
    %c0_i32 = arith.constant 0 : i32
    %c0_i32_0 = arith.constant 0 : i32
    %c0_i32_1 = arith.constant 0 : i32
    return %c0_i32, %c0_i32_0 : i32, i32
  }
  func.func @transform_3(%arg0: i32) -> (i32, i32) {
    %c0_i32 = arith.constant 0 : i32
    %c0_i32_0 = arith.constant 0 : i32
    return %arg0, %c0_i32 : i32, i32
  }
}

module attributes {stable_mosaic.version = 11 : i64} {
  func.func @_bilstm_layer_kernel(%arg0: i32, %arg1: memref<8x1xi32, #tpu.memory_space<vmem>>, %arg2: memref<8x8x41xf32, #tpu.memory_space<vmem>>, %arg3: memref<41x256xf32, #tpu.memory_space<vmem>>, %arg4: memref<64x256xf32, #tpu.memory_space<vmem>>, %arg5: memref<1x256xf32, #tpu.memory_space<vmem>>, %arg6: memref<8x8x64xf32, #tpu.memory_space<vmem>>, %arg7: memref<8x8x256xf32, #tpu.memory_space<vmem>>) attributes {dimension_semantics = [#tpu.dimension_semantics<arbitrary>], iteration_bounds = array<i64: 1>, scalar_prefetch = 0 : i64, scratch_operands = 1 : i64, tpu.core_type = #tpu.core_type<tc>, window_params = [{pipeline_mode = #tpu.pipeline_mode<synchronous>, transform_indices = @transform_0, window_bounds = array<i64: 8, 1>}, {pipeline_mode = #tpu.pipeline_mode<synchronous>, transform_indices = @transform_1, window_bounds = array<i64: 8, 8, 41>}, {pipeline_mode = #tpu.pipeline_mode<synchronous>, transform_indices = @transform_2, window_bounds = array<i64: 41, 256>}, {pipeline_mode = #tpu.pipeline_mode<synchronous>, transform_indices = @transform_3, window_bounds = array<i64: 64, 256>}, {pipeline_mode = #tpu.pipeline_mode<synchronous>, transform_indices = @transform_4, window_bounds = array<i64: 1, 256>}, {pipeline_mode = #tpu.pipeline_mode<synchronous>, transform_indices = @transform_5, window_bounds = array<i64: 8, 8, 64>}]} {
    %c0 = arith.constant 0 : index
    %c0_0 = arith.constant 0 : index
    %c0_1 = arith.constant 0 : index
    %0 = vector.load %arg2[%c0, %c0_0, %c0_1] : memref<8x8x41xf32, #tpu.memory_space<vmem>>, vector<8x8x41xf32>
    %1 = vector.shape_cast %0 : vector<8x8x41xf32> to vector<64x41xf32>
    %c0_2 = arith.constant 0 : index
    %c0_3 = arith.constant 0 : index
    %2 = vector.load %arg3[%c0_2, %c0_3] : memref<41x256xf32, #tpu.memory_space<vmem>>, vector<41x256xf32>
    %cst = arith.constant dense<0.000000e+00> : vector<64x256xf32>
    %3 = tpu.matmul %1, %2, %cst {dimension_numbers = #tpu.dot_dimension_numbers<[1], [0], [0], [1], [0, 0, 1, 1], [], []>} : vector<64x41xf32>, vector<41x256xf32>, vector<64x256xf32> -> vector<64x256xf32>
    %c0_4 = arith.constant 0 : index
    %c0_5 = arith.constant 0 : index
    %4 = vector.load %arg5[%c0_4, %c0_5] : memref<1x256xf32, #tpu.memory_space<vmem>>, vector<1x256xf32>
    %5 = vector.broadcast %4 : vector<1x256xf32> to vector<64x256xf32>
    %6 = arith.addf %3, %5 : vector<64x256xf32>
    %7 = vector.shape_cast %6 : vector<64x256xf32> to vector<8x8x256xf32>
    %c0_6 = arith.constant 0 : index
    %c0_7 = arith.constant 0 : index
    %c0_8 = arith.constant 0 : index
    %8 = vector.load %arg7[%c0_6, %c0_7, %c0_8] : memref<8x8x256xf32, #tpu.memory_space<vmem>>, vector<8x8x256xf32>
    tpu.vector_store %arg7[%c0_6, %c0_7, %c0_8], %7 {strides = array<i32>} : memref<8x8x256xf32, #tpu.memory_space<vmem>>, vector<8x8x256xf32>,
    %c0_9 = arith.constant 0 : index
    %c0_10 = arith.constant 0 : index
    %9 = vector.load %arg1[%c0_9, %c0_10] : memref<8x1xi32, #tpu.memory_space<vmem>>, vector<8x1xi32>
    %c0_11 = arith.constant 0 : index
    %c0_12 = arith.constant 0 : index
    %10 = vector.load %arg4[%c0_11, %c0_12] : memref<64x256xf32, #tpu.memory_space<vmem>>, vector<64x256xf32>
    %11 = tpu.iota {dimensions = array<i32: 1>} : vector<8x256xi32>
    %c64_i32 = arith.constant 64 : i32
    %c0_i32 = arith.constant 0 : i32
    %12 = arith.cmpi eq, %c64_i32, %c0_i32 : i32
    %c1_i32 = arith.constant 1 : i32
    %13 = arith.select %12, %c1_i32, %c64_i32 : i32
    %14 = vector.broadcast %13 : i32 to vector<8x256xi32>
    %15 = arith.remsi %11, %14 : vector<8x256xi32>
    %c0_i32_13 = arith.constant 0 : i32
    %16 = vector.broadcast %c0_i32_13 : i32 to vector<8x256xi32>
    %17 = arith.cmpi ne, %15, %16 : vector<8x256xi32>
    %c0_i32_14 = arith.constant 0 : i32
    %18 = vector.broadcast %c0_i32_14 : i32 to vector<8x256xi32>
    %19 = arith.cmpi slt, %15, %18 : vector<8x256xi32>
    %c0_i32_15 = arith.constant 0 : i32
    %20 = arith.cmpi slt, %13, %c0_i32_15 : i32
    %21 = vector.broadcast %20 : i1 to vector<8x256xi1>
    %22 = vector.broadcast %21 : vector<8x256xi1> to vector<8x256xi1>
    %23 = arith.xori %19, %22 : vector<8x256xi1>
    %24 = arith.andi %23, %17 : vector<8x256xi1>
    %25 = vector.broadcast %13 : i32 to vector<8x256xi32>
    %26 = arith.addi %15, %25 : vector<8x256xi32>
    %27 = arith.select %24, %26, %15 : vector<8x256xi1>, vector<8x256xi32>
    %c32_i32 = arith.constant 32 : i32
    %28 = vector.broadcast %c32_i32 : i32 to vector<8x256xi32>
    %29 = arith.cmpi sge, %27, %28 : vector<8x256xi32>
    %30 = tpu.iota {dimensions = array<i32: 1>} : vector<8x64xi32>
    %c32_i32_16 = arith.constant 32 : i32
    %31 = vector.broadcast %c32_i32_16 : i32 to vector<8x64xi32>
    %32 = arith.cmpi sge, %30, %31 : vector<8x64xi32>
    %cst_17 = arith.constant 0.000000e+00 : f32
    %33 = vector.broadcast %cst_17 : f32 to vector<8x64xf32>
    %cst_18 = arith.constant 0.000000e+00 : f32
    %34 = vector.broadcast %cst_18 : f32 to vector<8x64xf32>
    %c0_i32_19 = arith.constant 0 : i32
    %c7_i32 = arith.constant 7 : i32
    %35 = arith.subi %c7_i32, %c0_i32_19 : i32
    %36 = arith.index_cast %35 : i32 to index
    %c0_20 = arith.constant 0 : index
    %c0_21 = arith.constant 0 : index
    %37 = vector.load %arg7[%36, %c0_20, %c0_21] : memref<8x8x256xf32, #tpu.memory_space<vmem>>, vector<1x8x256xf32>
    %38 = vector.shape_cast %37 : vector<1x8x256xf32> to vector<8x256xf32>
    %39 = arith.index_cast %c0_i32_19 : i32 to index
    %c0_22 = arith.constant 0 : index
    %c0_23 = arith.constant 0 : index
    %40 = vector.load %arg7[%39, %c0_22, %c0_23] : memref<8x8x256xf32, #tpu.memory_space<vmem>>, vector<1x8x256xf32>
    %41 = vector.shape_cast %40 : vector<1x8x256xf32> to vector<8x256xf32>
    %42 = arith.select %29, %38, %41 : vector<8x256xi1>, vector<8x256xf32>
    %cst_24 = arith.constant dense<0.000000e+00> : vector<8x256xf32>
    %43 = tpu.matmul %33, %10, %cst_24 {dimension_numbers = #tpu.dot_dimension_numbers<[1], [0], [0], [1], [0, 0, 1, 1], [], []>} : vector<8x64xf32>, vector<64x256xf32>, vector<8x256xf32> -> vector<8x256xf32>
    %44 = arith.addf %42, %43 : vector<8x256xf32>
    %45 = vector.extract_strided_slice %44 {offsets = [0, 0], sizes = [8, 192], strides = [1, 1]} : vector<8x256xf32> to vector<8x192xf32>
    %46 = arith.negf %45 : vector<8x192xf32>
    %47 = math.exp %46 : vector<8x192xf32>
    %cst_25 = arith.constant 1.000000e+00 : f32
    %48 = vector.broadcast %cst_25 : f32 to vector<8x192xf32>
    %49 = arith.addf %48, %47 : vector<8x192xf32>
    %50 = arith.divf %48, %49 : vector<8x192xf32>
    %51 = vector.extract_strided_slice %50 {offsets = [0, 0], sizes = [8, 64], strides = [1, 1]} : vector<8x192xf32> to vector<8x64xf32>
    %52 = vector.extract_strided_slice %50 {offsets = [0, 64], sizes = [8, 64], strides = [1, 1]} : vector<8x192xf32> to vector<8x64xf32>
    %53 = vector.extract_strided_slice %50 {offsets = [0, 128], sizes = [8, 64], strides = [1, 1]} : vector<8x192xf32> to vector<8x64xf32>
    %54 = vector.extract_strided_slice %44 {offsets = [0, 192], sizes = [8, 64], strides = [1, 1]} : vector<8x256xf32> to vector<8x64xf32>
    %55 = math.tanh %54 : vector<8x64xf32>
    %56 = arith.mulf %52, %34 : vector<8x64xf32>
    %57 = arith.mulf %51, %55 : vector<8x64xf32>
    %58 = arith.addf %56, %57 : vector<8x64xf32>
    %59 = math.tanh %58 : vector<8x64xf32>
    %60 = arith.mulf %53, %59 : vector<8x64xf32>
    %61 = vector.broadcast %35 : i32 to vector<8x64xi32>
    %62 = vector.broadcast %c0_i32_19 : i32 to vector<8x64xi32>
    %63 = arith.select %32, %61, %62 : vector<8x64xi1>, vector<8x64xi32>
    %64 = vector.broadcast %9 : vector<8x1xi32> to vector<8x64xi32>
    %65 = arith.cmpi slt, %63, %64 : vector<8x64xi32>
    %66 = arith.select %65, %60, %33 : vector<8x64xi1>, vector<8x64xf32>
    %67 = arith.select %65, %58, %34 : vector<8x64xi1>, vector<8x64xf32>
    %68 = arith.extui %65 : vector<8x64xi1> to vector<8x64xi32>
    %69 = arith.sitofp %68 : vector<8x64xi32> to vector<8x64xf32>
    %70 = arith.mulf %60, %69 : vector<8x64xf32>
    %71 = vector.extract_strided_slice %70 {offsets = [0, 0], sizes = [8, 32], strides = [1, 1]} : vector<8x64xf32> to vector<8x32xf32>
    %72 = arith.index_cast %c0_i32_19 : i32 to index
    %c0_26 = arith.constant 0 : index
    %c0_27 = arith.constant 0 : index
    %73 = vector.load %arg6[%72, %c0_26, %c0_27] : memref<8x8x64xf32, #tpu.memory_space<vmem>>, vector<1x8x32xf32>
    %74 = vector.shape_cast %73 : vector<1x8x32xf32> to vector<8x32xf32>
    %75 = vector.shape_cast %71 : vector<8x32xf32> to vector<1x8x32xf32>
    tpu.vector_store %arg6[%72, %c0_26, %c0_27], %75 {strides = array<i32>} : memref<8x8x64xf32, #tpu.memory_space<vmem>>, vector<1x8x32xf32>,
    %76 = vector.extract_strided_slice %70 {offsets = [0, 32], sizes = [8, 32], strides = [1, 1]} : vector<8x64xf32> to vector<8x32xf32>
    %77 = arith.index_cast %35 : i32 to index
    %c0_28 = arith.constant 0 : index
    %c32 = arith.constant 32 : index
    %78 = vector.load %arg6[%77, %c0_28, %c32] : memref<8x8x64xf32, #tpu.memory_space<vmem>>, vector<1x8x32xf32>
    %79 = vector.shape_cast %78 : vector<1x8x32xf32> to vector<8x32xf32>
    %80 = vector.shape_cast %76 : vector<8x32xf32> to vector<1x8x32xf32>
    tpu.vector_store %arg6[%77, %c0_28, %c32], %80 {strides = array<i32>} : memref<8x8x64xf32, #tpu.memory_space<vmem>>, vector<1x8x32xf32>,
    %c1_i32_29 = arith.constant 1 : i32
    %c7_i32_30 = arith.constant 7 : i32
    %81 = arith.subi %c7_i32_30, %c1_i32_29 : i32
    %82 = arith.index_cast %81 : i32 to index
    %c0_31 = arith.constant 0 : index
    %c0_32 = arith.constant 0 : index
    %83 = vector.load %arg7[%82, %c0_31, %c0_32] : memref<8x8x256xf32, #tpu.memory_space<vmem>>, vector<1x8x256xf32>
    %84 = vector.shape_cast %83 : vector<1x8x256xf32> to vector<8x256xf32>
    %85 = arith.index_cast %c1_i32_29 : i32 to index
    %c0_33 = arith.constant 0 : index
    %c0_34 = arith.constant 0 : index
    %86 = vector.load %arg7[%85, %c0_33, %c0_34] : memref<8x8x256xf32, #tpu.memory_space<vmem>>, vector<1x8x256xf32>
    %87 = vector.shape_cast %86 : vector<1x8x256xf32> to vector<8x256xf32>
    %88 = arith.select %29, %84, %87 : vector<8x256xi1>, vector<8x256xf32>
    %cst_35 = arith.constant dense<0.000000e+00> : vector<8x256xf32>
    %89 = tpu.matmul %66, %10, %cst_35 {dimension_numbers = #tpu.dot_dimension_numbers<[1], [0], [0], [1], [0, 0, 1, 1], [], []>} : vector<8x64xf32>, vector<64x256xf32>, vector<8x256xf32> -> vector<8x256xf32>
    %90 = arith.addf %88, %89 : vector<8x256xf32>
    %91 = vector.extract_strided_slice %90 {offsets = [0, 0], sizes = [8, 192], strides = [1, 1]} : vector<8x256xf32> to vector<8x192xf32>
    %92 = arith.negf %91 : vector<8x192xf32>
    %93 = math.exp %92 : vector<8x192xf32>
    %cst_36 = arith.constant 1.000000e+00 : f32
    %94 = vector.broadcast %cst_36 : f32 to vector<8x192xf32>
    %95 = arith.addf %94, %93 : vector<8x192xf32>
    %96 = arith.divf %94, %95 : vector<8x192xf32>
    %97 = vector.extract_strided_slice %96 {offsets = [0, 0], sizes = [8, 64], strides = [1, 1]} : vector<8x192xf32> to vector<8x64xf32>
    %98 = vector.extract_strided_slice %96 {offsets = [0, 64], sizes = [8, 64], strides = [1, 1]} : vector<8x192xf32> to vector<8x64xf32>
    %99 = vector.extract_strided_slice %96 {offsets = [0, 128], sizes = [8, 64], strides = [1, 1]} : vector<8x192xf32> to vector<8x64xf32>
    %100 = vector.extract_strided_slice %90 {offsets = [0, 192], sizes = [8, 64], strides = [1, 1]} : vector<8x256xf32> to vector<8x64xf32>
    %101 = math.tanh %100 : vector<8x64xf32>
    %102 = arith.mulf %98, %67 : vector<8x64xf32>
    %103 = arith.mulf %97, %101 : vector<8x64xf32>
    %104 = arith.addf %102, %103 : vector<8x64xf32>
    %105 = math.tanh %104 : vector<8x64xf32>
    %106 = arith.mulf %99, %105 : vector<8x64xf32>
    %107 = vector.broadcast %81 : i32 to vector<8x64xi32>
    %108 = vector.broadcast %c1_i32_29 : i32 to vector<8x64xi32>
    %109 = arith.select %32, %107, %108 : vector<8x64xi1>, vector<8x64xi32>
    %110 = vector.broadcast %9 : vector<8x1xi32> to vector<8x64xi32>
    %111 = arith.cmpi slt, %109, %110 : vector<8x64xi32>
    %112 = arith.select %111, %106, %66 : vector<8x64xi1>, vector<8x64xf32>
    %113 = arith.select %111, %104, %67 : vector<8x64xi1>, vector<8x64xf32>
    %114 = arith.extui %111 : vector<8x64xi1> to vector<8x64xi32>
    %115 = arith.sitofp %114 : vector<8x64xi32> to vector<8x64xf32>
    %116 = arith.mulf %106, %115 : vector<8x64xf32>
    %117 = vector.extract_strided_slice %116 {offsets = [0, 0], sizes = [8, 32], strides = [1, 1]} : vector<8x64xf32> to vector<8x32xf32>
    %118 = arith.index_cast %c1_i32_29 : i32 to index
    %c0_37 = arith.constant 0 : index
    %c0_38 = arith.constant 0 : index
    %119 = vector.load %arg6[%118, %c0_37, %c0_38] : memref<8x8x64xf32, #tpu.memory_space<vmem>>, vector<1x8x32xf32>
    %120 = vector.shape_cast %119 : vector<1x8x32xf32> to vector<8x32xf32>
    %121 = vector.shape_cast %117 : vector<8x32xf32> to vector<1x8x32xf32>
    tpu.vector_store %arg6[%118, %c0_37, %c0_38], %121 {strides = array<i32>} : memref<8x8x64xf32, #tpu.memory_space<vmem>>, vector<1x8x32xf32>,
    %122 = vector.extract_strided_slice %116 {offsets = [0, 32], sizes = [8, 32], strides = [1, 1]} : vector<8x64xf32> to vector<8x32xf32>
    %123 = arith.index_cast %81 : i32 to index
    %c0_39 = arith.constant 0 : index
    %c32_40 = arith.constant 32 : index
    %124 = vector.load %arg6[%123, %c0_39, %c32_40] : memref<8x8x64xf32, #tpu.memory_space<vmem>>, vector<1x8x32xf32>
    %125 = vector.shape_cast %124 : vector<1x8x32xf32> to vector<8x32xf32>
    %126 = vector.shape_cast %122 : vector<8x32xf32> to vector<1x8x32xf32>
    tpu.vector_store %arg6[%123, %c0_39, %c32_40], %126 {strides = array<i32>} : memref<8x8x64xf32, #tpu.memory_space<vmem>>, vector<1x8x32xf32>,
    %c2_i32 = arith.constant 2 : i32
    %c7_i32_41 = arith.constant 7 : i32
    %127 = arith.subi %c7_i32_41, %c2_i32 : i32
    %128 = arith.index_cast %127 : i32 to index
    %c0_42 = arith.constant 0 : index
    %c0_43 = arith.constant 0 : index
    %129 = vector.load %arg7[%128, %c0_42, %c0_43] : memref<8x8x256xf32, #tpu.memory_space<vmem>>, vector<1x8x256xf32>
    %130 = vector.shape_cast %129 : vector<1x8x256xf32> to vector<8x256xf32>
    %131 = arith.index_cast %c2_i32 : i32 to index
    %c0_44 = arith.constant 0 : index
    %c0_45 = arith.constant 0 : index
    %132 = vector.load %arg7[%131, %c0_44, %c0_45] : memref<8x8x256xf32, #tpu.memory_space<vmem>>, vector<1x8x256xf32>
    %133 = vector.shape_cast %132 : vector<1x8x256xf32> to vector<8x256xf32>
    %134 = arith.select %29, %130, %133 : vector<8x256xi1>, vector<8x256xf32>
    %cst_46 = arith.constant dense<0.000000e+00> : vector<8x256xf32>
    %135 = tpu.matmul %112, %10, %cst_46 {dimension_numbers = #tpu.dot_dimension_numbers<[1], [0], [0], [1], [0, 0, 1, 1], [], []>} : vector<8x64xf32>, vector<64x256xf32>, vector<8x256xf32> -> vector<8x256xf32>
    %136 = arith.addf %134, %135 : vector<8x256xf32>
    %137 = vector.extract_strided_slice %136 {offsets = [0, 0], sizes = [8, 192], strides = [1, 1]} : vector<8x256xf32> to vector<8x192xf32>
    %138 = arith.negf %137 : vector<8x192xf32>
    %139 = math.exp %138 : vector<8x192xf32>
    %cst_47 = arith.constant 1.000000e+00 : f32
    %140 = vector.broadcast %cst_47 : f32 to vector<8x192xf32>
    %141 = arith.addf %140, %139 : vector<8x192xf32>
    %142 = arith.divf %140, %141 : vector<8x192xf32>
    %143 = vector.extract_strided_slice %142 {offsets = [0, 0], sizes = [8, 64], strides = [1, 1]} : vector<8x192xf32> to vector<8x64xf32>
    %144 = vector.extract_strided_slice %142 {offsets = [0, 64], sizes = [8, 64], strides = [1, 1]} : vector<8x192xf32> to vector<8x64xf32>
    %145 = vector.extract_strided_slice %142 {offsets = [0, 128], sizes = [8, 64], strides = [1, 1]} : vector<8x192xf32> to vector<8x64xf32>
    %146 = vector.extract_strided_slice %136 {offsets = [0, 192], sizes = [8, 64], strides = [1, 1]} : vector<8x256xf32> to vector<8x64xf32>
    %147 = math.tanh %146 : vector<8x64xf32>
    %148 = arith.mulf %144, %113 : vector<8x64xf32>
    %149 = arith.mulf %143, %147 : vector<8x64xf32>
    %150 = arith.addf %148, %149 : vector<8x64xf32>
    %151 = math.tanh %150 : vector<8x64xf32>
    %152 = arith.mulf %145, %151 : vector<8x64xf32>
    %153 = vector.broadcast %127 : i32 to vector<8x64xi32>
    %154 = vector.broadcast %c2_i32 : i32 to vector<8x64xi32>
    %155 = arith.select %32, %153, %154 : vector<8x64xi1>, vector<8x64xi32>
    %156 = vector.broadcast %9 : vector<8x1xi32> to vector<8x64xi32>
    %157 = arith.cmpi slt, %155, %156 : vector<8x64xi32>
    %158 = arith.select %157, %152, %112 : vector<8x64xi1>, vector<8x64xf32>
    %159 = arith.select %157, %150, %113 : vector<8x64xi1>, vector<8x64xf32>
    %160 = arith.extui %157 : vector<8x64xi1> to vector<8x64xi32>
    %161 = arith.sitofp %160 : vector<8x64xi32> to vector<8x64xf32>
    %162 = arith.mulf %152, %161 : vector<8x64xf32>
    %163 = vector.extract_strided_slice %162 {offsets = [0, 0], sizes = [8, 32], strides = [1, 1]} : vector<8x64xf32> to vector<8x32xf32>
    %164 = arith.index_cast %c2_i32 : i32 to index
    %c0_48 = arith.constant 0 : index
    %c0_49 = arith.constant 0 : index
    %165 = vector.load %arg6[%164, %c0_48, %c0_49] : memref<8x8x64xf32, #tpu.memory_space<vmem>>, vector<1x8x32xf32>
    %166 = vector.shape_cast %165 : vector<1x8x32xf32> to vector<8x32xf32>
    %167 = vector.shape_cast %163 : vector<8x32xf32> to vector<1x8x32xf32>
    tpu.vector_store %arg6[%164, %c0_48, %c0_49], %167 {strides = array<i32>} : memref<8x8x64xf32, #tpu.memory_space<vmem>>, vector<1x8x32xf32>,
    %168 = vector.extract_strided_slice %162 {offsets = [0, 32], sizes = [8, 32], strides = [1, 1]} : vector<8x64xf32> to vector<8x32xf32>
    %169 = arith.index_cast %127 : i32 to index
    %c0_50 = arith.constant 0 : index
    %c32_51 = arith.constant 32 : index
    %170 = vector.load %arg6[%169, %c0_50, %c32_51] : memref<8x8x64xf32, #tpu.memory_space<vmem>>, vector<1x8x32xf32>
    %171 = vector.shape_cast %170 : vector<1x8x32xf32> to vector<8x32xf32>
    %172 = vector.shape_cast %168 : vector<8x32xf32> to vector<1x8x32xf32>
    tpu.vector_store %arg6[%169, %c0_50, %c32_51], %172 {strides = array<i32>} : memref<8x8x64xf32, #tpu.memory_space<vmem>>, vector<1x8x32xf32>,
    %c3_i32 = arith.constant 3 : i32
    %c7_i32_52 = arith.constant 7 : i32
    %173 = arith.subi %c7_i32_52, %c3_i32 : i32
    %174 = arith.index_cast %173 : i32 to index
    %c0_53 = arith.constant 0 : index
    %c0_54 = arith.constant 0 : index
    %175 = vector.load %arg7[%174, %c0_53, %c0_54] : memref<8x8x256xf32, #tpu.memory_space<vmem>>, vector<1x8x256xf32>
    %176 = vector.shape_cast %175 : vector<1x8x256xf32> to vector<8x256xf32>
    %177 = arith.index_cast %c3_i32 : i32 to index
    %c0_55 = arith.constant 0 : index
    %c0_56 = arith.constant 0 : index
    %178 = vector.load %arg7[%177, %c0_55, %c0_56] : memref<8x8x256xf32, #tpu.memory_space<vmem>>, vector<1x8x256xf32>
    %179 = vector.shape_cast %178 : vector<1x8x256xf32> to vector<8x256xf32>
    %180 = arith.select %29, %176, %179 : vector<8x256xi1>, vector<8x256xf32>
    %cst_57 = arith.constant dense<0.000000e+00> : vector<8x256xf32>
    %181 = tpu.matmul %158, %10, %cst_57 {dimension_numbers = #tpu.dot_dimension_numbers<[1], [0], [0], [1], [0, 0, 1, 1], [], []>} : vector<8x64xf32>, vector<64x256xf32>, vector<8x256xf32> -> vector<8x256xf32>
    %182 = arith.addf %180, %181 : vector<8x256xf32>
    %183 = vector.extract_strided_slice %182 {offsets = [0, 0], sizes = [8, 192], strides = [1, 1]} : vector<8x256xf32> to vector<8x192xf32>
    %184 = arith.negf %183 : vector<8x192xf32>
    %185 = math.exp %184 : vector<8x192xf32>
    %cst_58 = arith.constant 1.000000e+00 : f32
    %186 = vector.broadcast %cst_58 : f32 to vector<8x192xf32>
    %187 = arith.addf %186, %185 : vector<8x192xf32>
    %188 = arith.divf %186, %187 : vector<8x192xf32>
    %189 = vector.extract_strided_slice %188 {offsets = [0, 0], sizes = [8, 64], strides = [1, 1]} : vector<8x192xf32> to vector<8x64xf32>
    %190 = vector.extract_strided_slice %188 {offsets = [0, 64], sizes = [8, 64], strides = [1, 1]} : vector<8x192xf32> to vector<8x64xf32>
    %191 = vector.extract_strided_slice %188 {offsets = [0, 128], sizes = [8, 64], strides = [1, 1]} : vector<8x192xf32> to vector<8x64xf32>
    %192 = vector.extract_strided_slice %182 {offsets = [0, 192], sizes = [8, 64], strides = [1, 1]} : vector<8x256xf32> to vector<8x64xf32>
    %193 = math.tanh %192 : vector<8x64xf32>
    %194 = arith.mulf %190, %159 : vector<8x64xf32>
    %195 = arith.mulf %189, %193 : vector<8x64xf32>
    %196 = arith.addf %194, %195 : vector<8x64xf32>
    %197 = math.tanh %196 : vector<8x64xf32>
    %198 = arith.mulf %191, %197 : vector<8x64xf32>
    %199 = vector.broadcast %173 : i32 to vector<8x64xi32>
    %200 = vector.broadcast %c3_i32 : i32 to vector<8x64xi32>
    %201 = arith.select %32, %199, %200 : vector<8x64xi1>, vector<8x64xi32>
    %202 = vector.broadcast %9 : vector<8x1xi32> to vector<8x64xi32>
    %203 = arith.cmpi slt, %201, %202 : vector<8x64xi32>
    %204 = arith.select %203, %198, %158 : vector<8x64xi1>, vector<8x64xf32>
    %205 = arith.select %203, %196, %159 : vector<8x64xi1>, vector<8x64xf32>
    %206 = arith.extui %203 : vector<8x64xi1> to vector<8x64xi32>
    %207 = arith.sitofp %206 : vector<8x64xi32> to vector<8x64xf32>
    %208 = arith.mulf %198, %207 : vector<8x64xf32>
    %209 = vector.extract_strided_slice %208 {offsets = [0, 0], sizes = [8, 32], strides = [1, 1]} : vector<8x64xf32> to vector<8x32xf32>
    %210 = arith.index_cast %c3_i32 : i32 to index
    %c0_59 = arith.constant 0 : index
    %c0_60 = arith.constant 0 : index
    %211 = vector.load %arg6[%210, %c0_59, %c0_60] : memref<8x8x64xf32, #tpu.memory_space<vmem>>, vector<1x8x32xf32>
    %212 = vector.shape_cast %211 : vector<1x8x32xf32> to vector<8x32xf32>
    %213 = vector.shape_cast %209 : vector<8x32xf32> to vector<1x8x32xf32>
    tpu.vector_store %arg6[%210, %c0_59, %c0_60], %213 {strides = array<i32>} : memref<8x8x64xf32, #tpu.memory_space<vmem>>, vector<1x8x32xf32>,
    %214 = vector.extract_strided_slice %208 {offsets = [0, 32], sizes = [8, 32], strides = [1, 1]} : vector<8x64xf32> to vector<8x32xf32>
    %215 = arith.index_cast %173 : i32 to index
    %c0_61 = arith.constant 0 : index
    %c32_62 = arith.constant 32 : index
    %216 = vector.load %arg6[%215, %c0_61, %c32_62] : memref<8x8x64xf32, #tpu.memory_space<vmem>>, vector<1x8x32xf32>
    %217 = vector.shape_cast %216 : vector<1x8x32xf32> to vector<8x32xf32>
    %218 = vector.shape_cast %214 : vector<8x32xf32> to vector<1x8x32xf32>
    tpu.vector_store %arg6[%215, %c0_61, %c32_62], %218 {strides = array<i32>} : memref<8x8x64xf32, #tpu.memory_space<vmem>>, vector<1x8x32xf32>,
    %c4_i32 = arith.constant 4 : i32
    %c7_i32_63 = arith.constant 7 : i32
    %219 = arith.subi %c7_i32_63, %c4_i32 : i32
    %220 = arith.index_cast %219 : i32 to index
    %c0_64 = arith.constant 0 : index
    %c0_65 = arith.constant 0 : index
    %221 = vector.load %arg7[%220, %c0_64, %c0_65] : memref<8x8x256xf32, #tpu.memory_space<vmem>>, vector<1x8x256xf32>
    %222 = vector.shape_cast %221 : vector<1x8x256xf32> to vector<8x256xf32>
    %223 = arith.index_cast %c4_i32 : i32 to index
    %c0_66 = arith.constant 0 : index
    %c0_67 = arith.constant 0 : index
    %224 = vector.load %arg7[%223, %c0_66, %c0_67] : memref<8x8x256xf32, #tpu.memory_space<vmem>>, vector<1x8x256xf32>
    %225 = vector.shape_cast %224 : vector<1x8x256xf32> to vector<8x256xf32>
    %226 = arith.select %29, %222, %225 : vector<8x256xi1>, vector<8x256xf32>
    %cst_68 = arith.constant dense<0.000000e+00> : vector<8x256xf32>
    %227 = tpu.matmul %204, %10, %cst_68 {dimension_numbers = #tpu.dot_dimension_numbers<[1], [0], [0], [1], [0, 0, 1, 1], [], []>} : vector<8x64xf32>, vector<64x256xf32>, vector<8x256xf32> -> vector<8x256xf32>
    %228 = arith.addf %226, %227 : vector<8x256xf32>
    %229 = vector.extract_strided_slice %228 {offsets = [0, 0], sizes = [8, 192], strides = [1, 1]} : vector<8x256xf32> to vector<8x192xf32>
    %230 = arith.negf %229 : vector<8x192xf32>
    %231 = math.exp %230 : vector<8x192xf32>
    %cst_69 = arith.constant 1.000000e+00 : f32
    %232 = vector.broadcast %cst_69 : f32 to vector<8x192xf32>
    %233 = arith.addf %232, %231 : vector<8x192xf32>
    %234 = arith.divf %232, %233 : vector<8x192xf32>
    %235 = vector.extract_strided_slice %234 {offsets = [0, 0], sizes = [8, 64], strides = [1, 1]} : vector<8x192xf32> to vector<8x64xf32>
    %236 = vector.extract_strided_slice %234 {offsets = [0, 64], sizes = [8, 64], strides = [1, 1]} : vector<8x192xf32> to vector<8x64xf32>
    %237 = vector.extract_strided_slice %234 {offsets = [0, 128], sizes = [8, 64], strides = [1, 1]} : vector<8x192xf32> to vector<8x64xf32>
    %238 = vector.extract_strided_slice %228 {offsets = [0, 192], sizes = [8, 64], strides = [1, 1]} : vector<8x256xf32> to vector<8x64xf32>
    %239 = math.tanh %238 : vector<8x64xf32>
    %240 = arith.mulf %236, %205 : vector<8x64xf32>
    %241 = arith.mulf %235, %239 : vector<8x64xf32>
    %242 = arith.addf %240, %241 : vector<8x64xf32>
    %243 = math.tanh %242 : vector<8x64xf32>
    %244 = arith.mulf %237, %243 : vector<8x64xf32>
    %245 = vector.broadcast %219 : i32 to vector<8x64xi32>
    %246 = vector.broadcast %c4_i32 : i32 to vector<8x64xi32>
    %247 = arith.select %32, %245, %246 : vector<8x64xi1>, vector<8x64xi32>
    %248 = vector.broadcast %9 : vector<8x1xi32> to vector<8x64xi32>
    %249 = arith.cmpi slt, %247, %248 : vector<8x64xi32>
    %250 = arith.select %249, %244, %204 : vector<8x64xi1>, vector<8x64xf32>
    %251 = arith.select %249, %242, %205 : vector<8x64xi1>, vector<8x64xf32>
    %252 = arith.extui %249 : vector<8x64xi1> to vector<8x64xi32>
    %253 = arith.sitofp %252 : vector<8x64xi32> to vector<8x64xf32>
    %254 = arith.mulf %244, %253 : vector<8x64xf32>
    %255 = vector.extract_strided_slice %254 {offsets = [0, 0], sizes = [8, 32], strides = [1, 1]} : vector<8x64xf32> to vector<8x32xf32>
    %256 = arith.index_cast %c4_i32 : i32 to index
    %c0_70 = arith.constant 0 : index
    %c0_71 = arith.constant 0 : index
    %257 = vector.load %arg6[%256, %c0_70, %c0_71] : memref<8x8x64xf32, #tpu.memory_space<vmem>>, vector<1x8x32xf32>
    %258 = vector.shape_cast %257 : vector<1x8x32xf32> to vector<8x32xf32>
    %259 = vector.shape_cast %255 : vector<8x32xf32> to vector<1x8x32xf32>
    tpu.vector_store %arg6[%256, %c0_70, %c0_71], %259 {strides = array<i32>} : memref<8x8x64xf32, #tpu.memory_space<vmem>>, vector<1x8x32xf32>,
    %260 = vector.extract_strided_slice %254 {offsets = [0, 32], sizes = [8, 32], strides = [1, 1]} : vector<8x64xf32> to vector<8x32xf32>
    %261 = arith.index_cast %219 : i32 to index
    %c0_72 = arith.constant 0 : index
    %c32_73 = arith.constant 32 : index
    %262 = vector.load %arg6[%261, %c0_72, %c32_73] : memref<8x8x64xf32, #tpu.memory_space<vmem>>, vector<1x8x32xf32>
    %263 = vector.shape_cast %262 : vector<1x8x32xf32> to vector<8x32xf32>
    %264 = vector.shape_cast %260 : vector<8x32xf32> to vector<1x8x32xf32>
    tpu.vector_store %arg6[%261, %c0_72, %c32_73], %264 {strides = array<i32>} : memref<8x8x64xf32, #tpu.memory_space<vmem>>, vector<1x8x32xf32>,
    %c5_i32 = arith.constant 5 : i32
    %c7_i32_74 = arith.constant 7 : i32
    %265 = arith.subi %c7_i32_74, %c5_i32 : i32
    %266 = arith.index_cast %265 : i32 to index
    %c0_75 = arith.constant 0 : index
    %c0_76 = arith.constant 0 : index
    %267 = vector.load %arg7[%266, %c0_75, %c0_76] : memref<8x8x256xf32, #tpu.memory_space<vmem>>, vector<1x8x256xf32>
    %268 = vector.shape_cast %267 : vector<1x8x256xf32> to vector<8x256xf32>
    %269 = arith.index_cast %c5_i32 : i32 to index
    %c0_77 = arith.constant 0 : index
    %c0_78 = arith.constant 0 : index
    %270 = vector.load %arg7[%269, %c0_77, %c0_78] : memref<8x8x256xf32, #tpu.memory_space<vmem>>, vector<1x8x256xf32>
    %271 = vector.shape_cast %270 : vector<1x8x256xf32> to vector<8x256xf32>
    %272 = arith.select %29, %268, %271 : vector<8x256xi1>, vector<8x256xf32>
    %cst_79 = arith.constant dense<0.000000e+00> : vector<8x256xf32>
    %273 = tpu.matmul %250, %10, %cst_79 {dimension_numbers = #tpu.dot_dimension_numbers<[1], [0], [0], [1], [0, 0, 1, 1], [], []>} : vector<8x64xf32>, vector<64x256xf32>, vector<8x256xf32> -> vector<8x256xf32>
    %274 = arith.addf %272, %273 : vector<8x256xf32>
    %275 = vector.extract_strided_slice %274 {offsets = [0, 0], sizes = [8, 192], strides = [1, 1]} : vector<8x256xf32> to vector<8x192xf32>
    %276 = arith.negf %275 : vector<8x192xf32>
    %277 = math.exp %276 : vector<8x192xf32>
    %cst_80 = arith.constant 1.000000e+00 : f32
    %278 = vector.broadcast %cst_80 : f32 to vector<8x192xf32>
    %279 = arith.addf %278, %277 : vector<8x192xf32>
    %280 = arith.divf %278, %279 : vector<8x192xf32>
    %281 = vector.extract_strided_slice %280 {offsets = [0, 0], sizes = [8, 64], strides = [1, 1]} : vector<8x192xf32> to vector<8x64xf32>
    %282 = vector.extract_strided_slice %280 {offsets = [0, 64], sizes = [8, 64], strides = [1, 1]} : vector<8x192xf32> to vector<8x64xf32>
    %283 = vector.extract_strided_slice %280 {offsets = [0, 128], sizes = [8, 64], strides = [1, 1]} : vector<8x192xf32> to vector<8x64xf32>
    %284 = vector.extract_strided_slice %274 {offsets = [0, 192], sizes = [8, 64], strides = [1, 1]} : vector<8x256xf32> to vector<8x64xf32>
    %285 = math.tanh %284 : vector<8x64xf32>
    %286 = arith.mulf %282, %251 : vector<8x64xf32>
    %287 = arith.mulf %281, %285 : vector<8x64xf32>
    %288 = arith.addf %286, %287 : vector<8x64xf32>
    %289 = math.tanh %288 : vector<8x64xf32>
    %290 = arith.mulf %283, %289 : vector<8x64xf32>
    %291 = vector.broadcast %265 : i32 to vector<8x64xi32>
    %292 = vector.broadcast %c5_i32 : i32 to vector<8x64xi32>
    %293 = arith.select %32, %291, %292 : vector<8x64xi1>, vector<8x64xi32>
    %294 = vector.broadcast %9 : vector<8x1xi32> to vector<8x64xi32>
    %295 = arith.cmpi slt, %293, %294 : vector<8x64xi32>
    %296 = arith.select %295, %290, %250 : vector<8x64xi1>, vector<8x64xf32>
    %297 = arith.select %295, %288, %251 : vector<8x64xi1>, vector<8x64xf32>
    %298 = arith.extui %295 : vector<8x64xi1> to vector<8x64xi32>
    %299 = arith.sitofp %298 : vector<8x64xi32> to vector<8x64xf32>
    %300 = arith.mulf %290, %299 : vector<8x64xf32>
    %301 = vector.extract_strided_slice %300 {offsets = [0, 0], sizes = [8, 32], strides = [1, 1]} : vector<8x64xf32> to vector<8x32xf32>
    %302 = arith.index_cast %c5_i32 : i32 to index
    %c0_81 = arith.constant 0 : index
    %c0_82 = arith.constant 0 : index
    %303 = vector.load %arg6[%302, %c0_81, %c0_82] : memref<8x8x64xf32, #tpu.memory_space<vmem>>, vector<1x8x32xf32>
    %304 = vector.shape_cast %303 : vector<1x8x32xf32> to vector<8x32xf32>
    %305 = vector.shape_cast %301 : vector<8x32xf32> to vector<1x8x32xf32>
    tpu.vector_store %arg6[%302, %c0_81, %c0_82], %305 {strides = array<i32>} : memref<8x8x64xf32, #tpu.memory_space<vmem>>, vector<1x8x32xf32>,
    %306 = vector.extract_strided_slice %300 {offsets = [0, 32], sizes = [8, 32], strides = [1, 1]} : vector<8x64xf32> to vector<8x32xf32>
    %307 = arith.index_cast %265 : i32 to index
    %c0_83 = arith.constant 0 : index
    %c32_84 = arith.constant 32 : index
    %308 = vector.load %arg6[%307, %c0_83, %c32_84] : memref<8x8x64xf32, #tpu.memory_space<vmem>>, vector<1x8x32xf32>
    %309 = vector.shape_cast %308 : vector<1x8x32xf32> to vector<8x32xf32>
    %310 = vector.shape_cast %306 : vector<8x32xf32> to vector<1x8x32xf32>
    tpu.vector_store %arg6[%307, %c0_83, %c32_84], %310 {strides = array<i32>} : memref<8x8x64xf32, #tpu.memory_space<vmem>>, vector<1x8x32xf32>,
    %c6_i32 = arith.constant 6 : i32
    %c7_i32_85 = arith.constant 7 : i32
    %311 = arith.subi %c7_i32_85, %c6_i32 : i32
    %312 = arith.index_cast %311 : i32 to index
    %c0_86 = arith.constant 0 : index
    %c0_87 = arith.constant 0 : index
    %313 = vector.load %arg7[%312, %c0_86, %c0_87] : memref<8x8x256xf32, #tpu.memory_space<vmem>>, vector<1x8x256xf32>
    %314 = vector.shape_cast %313 : vector<1x8x256xf32> to vector<8x256xf32>
    %315 = arith.index_cast %c6_i32 : i32 to index
    %c0_88 = arith.constant 0 : index
    %c0_89 = arith.constant 0 : index
    %316 = vector.load %arg7[%315, %c0_88, %c0_89] : memref<8x8x256xf32, #tpu.memory_space<vmem>>, vector<1x8x256xf32>
    %317 = vector.shape_cast %316 : vector<1x8x256xf32> to vector<8x256xf32>
    %318 = arith.select %29, %314, %317 : vector<8x256xi1>, vector<8x256xf32>
    %cst_90 = arith.constant dense<0.000000e+00> : vector<8x256xf32>
    %319 = tpu.matmul %296, %10, %cst_90 {dimension_numbers = #tpu.dot_dimension_numbers<[1], [0], [0], [1], [0, 0, 1, 1], [], []>} : vector<8x64xf32>, vector<64x256xf32>, vector<8x256xf32> -> vector<8x256xf32>
    %320 = arith.addf %318, %319 : vector<8x256xf32>
    %321 = vector.extract_strided_slice %320 {offsets = [0, 0], sizes = [8, 192], strides = [1, 1]} : vector<8x256xf32> to vector<8x192xf32>
    %322 = arith.negf %321 : vector<8x192xf32>
    %323 = math.exp %322 : vector<8x192xf32>
    %cst_91 = arith.constant 1.000000e+00 : f32
    %324 = vector.broadcast %cst_91 : f32 to vector<8x192xf32>
    %325 = arith.addf %324, %323 : vector<8x192xf32>
    %326 = arith.divf %324, %325 : vector<8x192xf32>
    %327 = vector.extract_strided_slice %326 {offsets = [0, 0], sizes = [8, 64], strides = [1, 1]} : vector<8x192xf32> to vector<8x64xf32>
    %328 = vector.extract_strided_slice %326 {offsets = [0, 64], sizes = [8, 64], strides = [1, 1]} : vector<8x192xf32> to vector<8x64xf32>
    %329 = vector.extract_strided_slice %326 {offsets = [0, 128], sizes = [8, 64], strides = [1, 1]} : vector<8x192xf32> to vector<8x64xf32>
    %330 = vector.extract_strided_slice %320 {offsets = [0, 192], sizes = [8, 64], strides = [1, 1]} : vector<8x256xf32> to vector<8x64xf32>
    %331 = math.tanh %330 : vector<8x64xf32>
    %332 = arith.mulf %328, %297 : vector<8x64xf32>
    %333 = arith.mulf %327, %331 : vector<8x64xf32>
    %334 = arith.addf %332, %333 : vector<8x64xf32>
    %335 = math.tanh %334 : vector<8x64xf32>
    %336 = arith.mulf %329, %335 : vector<8x64xf32>
    %337 = vector.broadcast %311 : i32 to vector<8x64xi32>
    %338 = vector.broadcast %c6_i32 : i32 to vector<8x64xi32>
    %339 = arith.select %32, %337, %338 : vector<8x64xi1>, vector<8x64xi32>
    %340 = vector.broadcast %9 : vector<8x1xi32> to vector<8x64xi32>
    %341 = arith.cmpi slt, %339, %340 : vector<8x64xi32>
    %342 = arith.select %341, %336, %296 : vector<8x64xi1>, vector<8x64xf32>
    %343 = arith.select %341, %334, %297 : vector<8x64xi1>, vector<8x64xf32>
    %344 = arith.extui %341 : vector<8x64xi1> to vector<8x64xi32>
    %345 = arith.sitofp %344 : vector<8x64xi32> to vector<8x64xf32>
    %346 = arith.mulf %336, %345 : vector<8x64xf32>
    %347 = vector.extract_strided_slice %346 {offsets = [0, 0], sizes = [8, 32], strides = [1, 1]} : vector<8x64xf32> to vector<8x32xf32>
    %348 = arith.index_cast %c6_i32 : i32 to index
    %c0_92 = arith.constant 0 : index
    %c0_93 = arith.constant 0 : index
    %349 = vector.load %arg6[%348, %c0_92, %c0_93] : memref<8x8x64xf32, #tpu.memory_space<vmem>>, vector<1x8x32xf32>
    %350 = vector.shape_cast %349 : vector<1x8x32xf32> to vector<8x32xf32>
    %351 = vector.shape_cast %347 : vector<8x32xf32> to vector<1x8x32xf32>
    tpu.vector_store %arg6[%348, %c0_92, %c0_93], %351 {strides = array<i32>} : memref<8x8x64xf32, #tpu.memory_space<vmem>>, vector<1x8x32xf32>,
    %352 = vector.extract_strided_slice %346 {offsets = [0, 32], sizes = [8, 32], strides = [1, 1]} : vector<8x64xf32> to vector<8x32xf32>
    %353 = arith.index_cast %311 : i32 to index
    %c0_94 = arith.constant 0 : index
    %c32_95 = arith.constant 32 : index
    %354 = vector.load %arg6[%353, %c0_94, %c32_95] : memref<8x8x64xf32, #tpu.memory_space<vmem>>, vector<1x8x32xf32>
    %355 = vector.shape_cast %354 : vector<1x8x32xf32> to vector<8x32xf32>
    %356 = vector.shape_cast %352 : vector<8x32xf32> to vector<1x8x32xf32>
    tpu.vector_store %arg6[%353, %c0_94, %c32_95], %356 {strides = array<i32>} : memref<8x8x64xf32, #tpu.memory_space<vmem>>, vector<1x8x32xf32>,
    %c7_i32_96 = arith.constant 7 : i32
    %c7_i32_97 = arith.constant 7 : i32
    %357 = arith.subi %c7_i32_97, %c7_i32_96 : i32
    %358 = arith.index_cast %357 : i32 to index
    %c0_98 = arith.constant 0 : index
    %c0_99 = arith.constant 0 : index
    %359 = vector.load %arg7[%358, %c0_98, %c0_99] : memref<8x8x256xf32, #tpu.memory_space<vmem>>, vector<1x8x256xf32>
    %360 = vector.shape_cast %359 : vector<1x8x256xf32> to vector<8x256xf32>
    %361 = arith.index_cast %c7_i32_96 : i32 to index
    %c0_100 = arith.constant 0 : index
    %c0_101 = arith.constant 0 : index
    %362 = vector.load %arg7[%361, %c0_100, %c0_101] : memref<8x8x256xf32, #tpu.memory_space<vmem>>, vector<1x8x256xf32>
    %363 = vector.shape_cast %362 : vector<1x8x256xf32> to vector<8x256xf32>
    %364 = arith.select %29, %360, %363 : vector<8x256xi1>, vector<8x256xf32>
    %cst_102 = arith.constant dense<0.000000e+00> : vector<8x256xf32>
    %365 = tpu.matmul %342, %10, %cst_102 {dimension_numbers = #tpu.dot_dimension_numbers<[1], [0], [0], [1], [0, 0, 1, 1], [], []>} : vector<8x64xf32>, vector<64x256xf32>, vector<8x256xf32> -> vector<8x256xf32>
    %366 = arith.addf %364, %365 : vector<8x256xf32>
    %367 = vector.extract_strided_slice %366 {offsets = [0, 0], sizes = [8, 192], strides = [1, 1]} : vector<8x256xf32> to vector<8x192xf32>
    %368 = arith.negf %367 : vector<8x192xf32>
    %369 = math.exp %368 : vector<8x192xf32>
    %cst_103 = arith.constant 1.000000e+00 : f32
    %370 = vector.broadcast %cst_103 : f32 to vector<8x192xf32>
    %371 = arith.addf %370, %369 : vector<8x192xf32>
    %372 = arith.divf %370, %371 : vector<8x192xf32>
    %373 = vector.extract_strided_slice %372 {offsets = [0, 0], sizes = [8, 64], strides = [1, 1]} : vector<8x192xf32> to vector<8x64xf32>
    %374 = vector.extract_strided_slice %372 {offsets = [0, 64], sizes = [8, 64], strides = [1, 1]} : vector<8x192xf32> to vector<8x64xf32>
    %375 = vector.extract_strided_slice %372 {offsets = [0, 128], sizes = [8, 64], strides = [1, 1]} : vector<8x192xf32> to vector<8x64xf32>
    %376 = vector.extract_strided_slice %366 {offsets = [0, 192], sizes = [8, 64], strides = [1, 1]} : vector<8x256xf32> to vector<8x64xf32>
    %377 = math.tanh %376 : vector<8x64xf32>
    %378 = arith.mulf %374, %343 : vector<8x64xf32>
    %379 = arith.mulf %373, %377 : vector<8x64xf32>
    %380 = arith.addf %378, %379 : vector<8x64xf32>
    %381 = math.tanh %380 : vector<8x64xf32>
    %382 = arith.mulf %375, %381 : vector<8x64xf32>
    %383 = vector.broadcast %357 : i32 to vector<8x64xi32>
    %384 = vector.broadcast %c7_i32_96 : i32 to vector<8x64xi32>
    %385 = arith.select %32, %383, %384 : vector<8x64xi1>, vector<8x64xi32>
    %386 = vector.broadcast %9 : vector<8x1xi32> to vector<8x64xi32>
    %387 = arith.cmpi slt, %385, %386 : vector<8x64xi32>
    %388 = arith.select %387, %382, %342 : vector<8x64xi1>, vector<8x64xf32>
    %389 = arith.select %387, %380, %343 : vector<8x64xi1>, vector<8x64xf32>
    %390 = arith.extui %387 : vector<8x64xi1> to vector<8x64xi32>
    %391 = arith.sitofp %390 : vector<8x64xi32> to vector<8x64xf32>
    %392 = arith.mulf %382, %391 : vector<8x64xf32>
    %393 = vector.extract_strided_slice %392 {offsets = [0, 0], sizes = [8, 32], strides = [1, 1]} : vector<8x64xf32> to vector<8x32xf32>
    %394 = arith.index_cast %c7_i32_96 : i32 to index
    %c0_104 = arith.constant 0 : index
    %c0_105 = arith.constant 0 : index
    %395 = vector.load %arg6[%394, %c0_104, %c0_105] : memref<8x8x64xf32, #tpu.memory_space<vmem>>, vector<1x8x32xf32>
    %396 = vector.shape_cast %395 : vector<1x8x32xf32> to vector<8x32xf32>
    %397 = vector.shape_cast %393 : vector<8x32xf32> to vector<1x8x32xf32>
    tpu.vector_store %arg6[%394, %c0_104, %c0_105], %397 {strides = array<i32>} : memref<8x8x64xf32, #tpu.memory_space<vmem>>, vector<1x8x32xf32>,
    %398 = vector.extract_strided_slice %392 {offsets = [0, 32], sizes = [8, 32], strides = [1, 1]} : vector<8x64xf32> to vector<8x32xf32>
    %399 = arith.index_cast %357 : i32 to index
    %c0_106 = arith.constant 0 : index
    %c32_107 = arith.constant 32 : index
    %400 = vector.load %arg6[%399, %c0_106, %c32_107] : memref<8x8x64xf32, #tpu.memory_space<vmem>>, vector<1x8x32xf32>
    %401 = vector.shape_cast %400 : vector<1x8x32xf32> to vector<8x32xf32>
    %402 = vector.shape_cast %398 : vector<8x32xf32> to vector<1x8x32xf32>
    tpu.vector_store %arg6[%399, %c0_106, %c32_107], %402 {strides = array<i32>} : memref<8x8x64xf32, #tpu.memory_space<vmem>>, vector<1x8x32xf32>,
    %c8_i32 = arith.constant 8 : i32
    return
  }
  func.func @transform_0(%arg0: i32) -> (i32, i32) {
    %c0_i32 = arith.constant 0 : i32
    %c0_i32_0 = arith.constant 0 : i32
    %c0_i32_1 = arith.constant 0 : i32
    return %c0_i32, %c0_i32_0 : i32, i32
  }
  func.func @transform_1(%arg0: i32) -> (i32, i32, i32) {
    %c0_i32 = arith.constant 0 : i32
    %c0_i32_0 = arith.constant 0 : i32
    %c0_i32_1 = arith.constant 0 : i32
    %c0_i32_2 = arith.constant 0 : i32
    return %c0_i32, %c0_i32_0, %c0_i32_1 : i32, i32, i32
  }
  func.func @transform_2(%arg0: i32) -> (i32, i32) {
    %c0_i32 = arith.constant 0 : i32
    %c0_i32_0 = arith.constant 0 : i32
    %c0_i32_1 = arith.constant 0 : i32
    return %c0_i32, %c0_i32_0 : i32, i32
  }
  func.func @transform_3(%arg0: i32) -> (i32, i32) {
    %c0_i32 = arith.constant 0 : i32
    %c0_i32_0 = arith.constant 0 : i32
    %c0_i32_1 = arith.constant 0 : i32
    return %c0_i32, %c0_i32_0 : i32, i32
  }
  func.func @transform_4(%arg0: i32) -> (i32, i32) {
    %c0_i32 = arith.constant 0 : i32
    %c0_i32_0 = arith.constant 0 : i32
    %c0_i32_1 = arith.constant 0 : i32
    return %c0_i32, %c0_i32_0 : i32, i32
  }
  func.func @transform_5(%arg0: i32) -> (i32, i32, i32) {
    %c0_i32 = arith.constant 0 : i32
    %c0_i32_0 = arith.constant 0 : i32
    %c0_i32_1 = arith.constant 0 : i32
    %c0_i32_2 = arith.constant 0 : i32
    return %c0_i32, %c0_i32_0, %c0_i32_1 : i32, i32, i32
  }
}

module attributes {stable_mosaic.version = 11 : i64} {
  func.func @_bilstm_layer_kernel(%arg0: i32, %arg1: memref<8x1xi32, #tpu.memory_space<vmem>>, %arg2: memref<8x8x64xf32, #tpu.memory_space<vmem>>, %arg3: memref<64x256xf32, #tpu.memory_space<vmem>>, %arg4: memref<64x256xf32, #tpu.memory_space<vmem>>, %arg5: memref<1x256xf32, #tpu.memory_space<vmem>>, %arg6: memref<8x8x64xf32, #tpu.memory_space<vmem>>, %arg7: memref<8x8x256xf32, #tpu.memory_space<vmem>>) attributes {dimension_semantics = [#tpu.dimension_semantics<arbitrary>], iteration_bounds = array<i64: 1>, scalar_prefetch = 0 : i64, scratch_operands = 1 : i64, tpu.core_type = #tpu.core_type<tc>, window_params = [{pipeline_mode = #tpu.pipeline_mode<synchronous>, transform_indices = @transform_0, window_bounds = array<i64: 8, 1>}, {pipeline_mode = #tpu.pipeline_mode<synchronous>, transform_indices = @transform_1, window_bounds = array<i64: 8, 8, 64>}, {pipeline_mode = #tpu.pipeline_mode<synchronous>, transform_indices = @transform_2, window_bounds = array<i64: 64, 256>}, {pipeline_mode = #tpu.pipeline_mode<synchronous>, transform_indices = @transform_3, window_bounds = array<i64: 64, 256>}, {pipeline_mode = #tpu.pipeline_mode<synchronous>, transform_indices = @transform_4, window_bounds = array<i64: 1, 256>}, {pipeline_mode = #tpu.pipeline_mode<synchronous>, transform_indices = @transform_5, window_bounds = array<i64: 8, 8, 64>}]} {
    %c0 = arith.constant 0 : index
    %c0_0 = arith.constant 0 : index
    %c0_1 = arith.constant 0 : index
    %0 = vector.load %arg2[%c0, %c0_0, %c0_1] : memref<8x8x64xf32, #tpu.memory_space<vmem>>, vector<8x8x64xf32>
    %1 = vector.shape_cast %0 : vector<8x8x64xf32> to vector<64x64xf32>
    %c0_2 = arith.constant 0 : index
    %c0_3 = arith.constant 0 : index
    %2 = vector.load %arg3[%c0_2, %c0_3] : memref<64x256xf32, #tpu.memory_space<vmem>>, vector<64x256xf32>
    %cst = arith.constant dense<0.000000e+00> : vector<64x256xf32>
    %3 = tpu.matmul %1, %2, %cst {dimension_numbers = #tpu.dot_dimension_numbers<[1], [0], [0], [1], [0, 0, 1, 1], [], []>} : vector<64x64xf32>, vector<64x256xf32>, vector<64x256xf32> -> vector<64x256xf32>
    %c0_4 = arith.constant 0 : index
    %c0_5 = arith.constant 0 : index
    %4 = vector.load %arg5[%c0_4, %c0_5] : memref<1x256xf32, #tpu.memory_space<vmem>>, vector<1x256xf32>
    %5 = vector.broadcast %4 : vector<1x256xf32> to vector<64x256xf32>
    %6 = arith.addf %3, %5 : vector<64x256xf32>
    %7 = vector.shape_cast %6 : vector<64x256xf32> to vector<8x8x256xf32>
    %c0_6 = arith.constant 0 : index
    %c0_7 = arith.constant 0 : index
    %c0_8 = arith.constant 0 : index
    %8 = vector.load %arg7[%c0_6, %c0_7, %c0_8] : memref<8x8x256xf32, #tpu.memory_space<vmem>>, vector<8x8x256xf32>
    tpu.vector_store %arg7[%c0_6, %c0_7, %c0_8], %7 {strides = array<i32>} : memref<8x8x256xf32, #tpu.memory_space<vmem>>, vector<8x8x256xf32>,
    %c0_9 = arith.constant 0 : index
    %c0_10 = arith.constant 0 : index
    %9 = vector.load %arg1[%c0_9, %c0_10] : memref<8x1xi32, #tpu.memory_space<vmem>>, vector<8x1xi32>
    %c0_11 = arith.constant 0 : index
    %c0_12 = arith.constant 0 : index
    %10 = vector.load %arg4[%c0_11, %c0_12] : memref<64x256xf32, #tpu.memory_space<vmem>>, vector<64x256xf32>
    %11 = tpu.iota {dimensions = array<i32: 1>} : vector<8x256xi32>
    %c64_i32 = arith.constant 64 : i32
    %c0_i32 = arith.constant 0 : i32
    %12 = arith.cmpi eq, %c64_i32, %c0_i32 : i32
    %c1_i32 = arith.constant 1 : i32
    %13 = arith.select %12, %c1_i32, %c64_i32 : i32
    %14 = vector.broadcast %13 : i32 to vector<8x256xi32>
    %15 = arith.remsi %11, %14 : vector<8x256xi32>
    %c0_i32_13 = arith.constant 0 : i32
    %16 = vector.broadcast %c0_i32_13 : i32 to vector<8x256xi32>
    %17 = arith.cmpi ne, %15, %16 : vector<8x256xi32>
    %c0_i32_14 = arith.constant 0 : i32
    %18 = vector.broadcast %c0_i32_14 : i32 to vector<8x256xi32>
    %19 = arith.cmpi slt, %15, %18 : vector<8x256xi32>
    %c0_i32_15 = arith.constant 0 : i32
    %20 = arith.cmpi slt, %13, %c0_i32_15 : i32
    %21 = vector.broadcast %20 : i1 to vector<8x256xi1>
    %22 = vector.broadcast %21 : vector<8x256xi1> to vector<8x256xi1>
    %23 = arith.xori %19, %22 : vector<8x256xi1>
    %24 = arith.andi %23, %17 : vector<8x256xi1>
    %25 = vector.broadcast %13 : i32 to vector<8x256xi32>
    %26 = arith.addi %15, %25 : vector<8x256xi32>
    %27 = arith.select %24, %26, %15 : vector<8x256xi1>, vector<8x256xi32>
    %c32_i32 = arith.constant 32 : i32
    %28 = vector.broadcast %c32_i32 : i32 to vector<8x256xi32>
    %29 = arith.cmpi sge, %27, %28 : vector<8x256xi32>
    %30 = tpu.iota {dimensions = array<i32: 1>} : vector<8x64xi32>
    %c32_i32_16 = arith.constant 32 : i32
    %31 = vector.broadcast %c32_i32_16 : i32 to vector<8x64xi32>
    %32 = arith.cmpi sge, %30, %31 : vector<8x64xi32>
    %cst_17 = arith.constant 0.000000e+00 : f32
    %33 = vector.broadcast %cst_17 : f32 to vector<8x64xf32>
    %cst_18 = arith.constant 0.000000e+00 : f32
    %34 = vector.broadcast %cst_18 : f32 to vector<8x64xf32>
    %c0_i32_19 = arith.constant 0 : i32
    %c7_i32 = arith.constant 7 : i32
    %35 = arith.subi %c7_i32, %c0_i32_19 : i32
    %36 = arith.index_cast %35 : i32 to index
    %c0_20 = arith.constant 0 : index
    %c0_21 = arith.constant 0 : index
    %37 = vector.load %arg7[%36, %c0_20, %c0_21] : memref<8x8x256xf32, #tpu.memory_space<vmem>>, vector<1x8x256xf32>
    %38 = vector.shape_cast %37 : vector<1x8x256xf32> to vector<8x256xf32>
    %39 = arith.index_cast %c0_i32_19 : i32 to index
    %c0_22 = arith.constant 0 : index
    %c0_23 = arith.constant 0 : index
    %40 = vector.load %arg7[%39, %c0_22, %c0_23] : memref<8x8x256xf32, #tpu.memory_space<vmem>>, vector<1x8x256xf32>
    %41 = vector.shape_cast %40 : vector<1x8x256xf32> to vector<8x256xf32>
    %42 = arith.select %29, %38, %41 : vector<8x256xi1>, vector<8x256xf32>
    %cst_24 = arith.constant dense<0.000000e+00> : vector<8x256xf32>
    %43 = tpu.matmul %33, %10, %cst_24 {dimension_numbers = #tpu.dot_dimension_numbers<[1], [0], [0], [1], [0, 0, 1, 1], [], []>} : vector<8x64xf32>, vector<64x256xf32>, vector<8x256xf32> -> vector<8x256xf32>
    %44 = arith.addf %42, %43 : vector<8x256xf32>
    %45 = vector.extract_strided_slice %44 {offsets = [0, 0], sizes = [8, 192], strides = [1, 1]} : vector<8x256xf32> to vector<8x192xf32>
    %46 = arith.negf %45 : vector<8x192xf32>
    %47 = math.exp %46 : vector<8x192xf32>
    %cst_25 = arith.constant 1.000000e+00 : f32
    %48 = vector.broadcast %cst_25 : f32 to vector<8x192xf32>
    %49 = arith.addf %48, %47 : vector<8x192xf32>
    %50 = arith.divf %48, %49 : vector<8x192xf32>
    %51 = vector.extract_strided_slice %50 {offsets = [0, 0], sizes = [8, 64], strides = [1, 1]} : vector<8x192xf32> to vector<8x64xf32>
    %52 = vector.extract_strided_slice %50 {offsets = [0, 64], sizes = [8, 64], strides = [1, 1]} : vector<8x192xf32> to vector<8x64xf32>
    %53 = vector.extract_strided_slice %50 {offsets = [0, 128], sizes = [8, 64], strides = [1, 1]} : vector<8x192xf32> to vector<8x64xf32>
    %54 = vector.extract_strided_slice %44 {offsets = [0, 192], sizes = [8, 64], strides = [1, 1]} : vector<8x256xf32> to vector<8x64xf32>
    %55 = math.tanh %54 : vector<8x64xf32>
    %56 = arith.mulf %52, %34 : vector<8x64xf32>
    %57 = arith.mulf %51, %55 : vector<8x64xf32>
    %58 = arith.addf %56, %57 : vector<8x64xf32>
    %59 = math.tanh %58 : vector<8x64xf32>
    %60 = arith.mulf %53, %59 : vector<8x64xf32>
    %61 = vector.broadcast %35 : i32 to vector<8x64xi32>
    %62 = vector.broadcast %c0_i32_19 : i32 to vector<8x64xi32>
    %63 = arith.select %32, %61, %62 : vector<8x64xi1>, vector<8x64xi32>
    %64 = vector.broadcast %9 : vector<8x1xi32> to vector<8x64xi32>
    %65 = arith.cmpi slt, %63, %64 : vector<8x64xi32>
    %66 = arith.select %65, %60, %33 : vector<8x64xi1>, vector<8x64xf32>
    %67 = arith.select %65, %58, %34 : vector<8x64xi1>, vector<8x64xf32>
    %68 = arith.extui %65 : vector<8x64xi1> to vector<8x64xi32>
    %69 = arith.sitofp %68 : vector<8x64xi32> to vector<8x64xf32>
    %70 = arith.mulf %60, %69 : vector<8x64xf32>
    %71 = vector.extract_strided_slice %70 {offsets = [0, 0], sizes = [8, 32], strides = [1, 1]} : vector<8x64xf32> to vector<8x32xf32>
    %72 = arith.index_cast %c0_i32_19 : i32 to index
    %c0_26 = arith.constant 0 : index
    %c0_27 = arith.constant 0 : index
    %73 = vector.load %arg6[%72, %c0_26, %c0_27] : memref<8x8x64xf32, #tpu.memory_space<vmem>>, vector<1x8x32xf32>
    %74 = vector.shape_cast %73 : vector<1x8x32xf32> to vector<8x32xf32>
    %75 = vector.shape_cast %71 : vector<8x32xf32> to vector<1x8x32xf32>
    tpu.vector_store %arg6[%72, %c0_26, %c0_27], %75 {strides = array<i32>} : memref<8x8x64xf32, #tpu.memory_space<vmem>>, vector<1x8x32xf32>,
    %76 = vector.extract_strided_slice %70 {offsets = [0, 32], sizes = [8, 32], strides = [1, 1]} : vector<8x64xf32> to vector<8x32xf32>
    %77 = arith.index_cast %35 : i32 to index
    %c0_28 = arith.constant 0 : index
    %c32 = arith.constant 32 : index
    %78 = vector.load %arg6[%77, %c0_28, %c32] : memref<8x8x64xf32, #tpu.memory_space<vmem>>, vector<1x8x32xf32>
    %79 = vector.shape_cast %78 : vector<1x8x32xf32> to vector<8x32xf32>
    %80 = vector.shape_cast %76 : vector<8x32xf32> to vector<1x8x32xf32>
    tpu.vector_store %arg6[%77, %c0_28, %c32], %80 {strides = array<i32>} : memref<8x8x64xf32, #tpu.memory_space<vmem>>, vector<1x8x32xf32>,
    %c1_i32_29 = arith.constant 1 : i32
    %c7_i32_30 = arith.constant 7 : i32
    %81 = arith.subi %c7_i32_30, %c1_i32_29 : i32
    %82 = arith.index_cast %81 : i32 to index
    %c0_31 = arith.constant 0 : index
    %c0_32 = arith.constant 0 : index
    %83 = vector.load %arg7[%82, %c0_31, %c0_32] : memref<8x8x256xf32, #tpu.memory_space<vmem>>, vector<1x8x256xf32>
    %84 = vector.shape_cast %83 : vector<1x8x256xf32> to vector<8x256xf32>
    %85 = arith.index_cast %c1_i32_29 : i32 to index
    %c0_33 = arith.constant 0 : index
    %c0_34 = arith.constant 0 : index
    %86 = vector.load %arg7[%85, %c0_33, %c0_34] : memref<8x8x256xf32, #tpu.memory_space<vmem>>, vector<1x8x256xf32>
    %87 = vector.shape_cast %86 : vector<1x8x256xf32> to vector<8x256xf32>
    %88 = arith.select %29, %84, %87 : vector<8x256xi1>, vector<8x256xf32>
    %cst_35 = arith.constant dense<0.000000e+00> : vector<8x256xf32>
    %89 = tpu.matmul %66, %10, %cst_35 {dimension_numbers = #tpu.dot_dimension_numbers<[1], [0], [0], [1], [0, 0, 1, 1], [], []>} : vector<8x64xf32>, vector<64x256xf32>, vector<8x256xf32> -> vector<8x256xf32>
    %90 = arith.addf %88, %89 : vector<8x256xf32>
    %91 = vector.extract_strided_slice %90 {offsets = [0, 0], sizes = [8, 192], strides = [1, 1]} : vector<8x256xf32> to vector<8x192xf32>
    %92 = arith.negf %91 : vector<8x192xf32>
    %93 = math.exp %92 : vector<8x192xf32>
    %cst_36 = arith.constant 1.000000e+00 : f32
    %94 = vector.broadcast %cst_36 : f32 to vector<8x192xf32>
    %95 = arith.addf %94, %93 : vector<8x192xf32>
    %96 = arith.divf %94, %95 : vector<8x192xf32>
    %97 = vector.extract_strided_slice %96 {offsets = [0, 0], sizes = [8, 64], strides = [1, 1]} : vector<8x192xf32> to vector<8x64xf32>
    %98 = vector.extract_strided_slice %96 {offsets = [0, 64], sizes = [8, 64], strides = [1, 1]} : vector<8x192xf32> to vector<8x64xf32>
    %99 = vector.extract_strided_slice %96 {offsets = [0, 128], sizes = [8, 64], strides = [1, 1]} : vector<8x192xf32> to vector<8x64xf32>
    %100 = vector.extract_strided_slice %90 {offsets = [0, 192], sizes = [8, 64], strides = [1, 1]} : vector<8x256xf32> to vector<8x64xf32>
    %101 = math.tanh %100 : vector<8x64xf32>
    %102 = arith.mulf %98, %67 : vector<8x64xf32>
    %103 = arith.mulf %97, %101 : vector<8x64xf32>
    %104 = arith.addf %102, %103 : vector<8x64xf32>
    %105 = math.tanh %104 : vector<8x64xf32>
    %106 = arith.mulf %99, %105 : vector<8x64xf32>
    %107 = vector.broadcast %81 : i32 to vector<8x64xi32>
    %108 = vector.broadcast %c1_i32_29 : i32 to vector<8x64xi32>
    %109 = arith.select %32, %107, %108 : vector<8x64xi1>, vector<8x64xi32>
    %110 = vector.broadcast %9 : vector<8x1xi32> to vector<8x64xi32>
    %111 = arith.cmpi slt, %109, %110 : vector<8x64xi32>
    %112 = arith.select %111, %106, %66 : vector<8x64xi1>, vector<8x64xf32>
    %113 = arith.select %111, %104, %67 : vector<8x64xi1>, vector<8x64xf32>
    %114 = arith.extui %111 : vector<8x64xi1> to vector<8x64xi32>
    %115 = arith.sitofp %114 : vector<8x64xi32> to vector<8x64xf32>
    %116 = arith.mulf %106, %115 : vector<8x64xf32>
    %117 = vector.extract_strided_slice %116 {offsets = [0, 0], sizes = [8, 32], strides = [1, 1]} : vector<8x64xf32> to vector<8x32xf32>
    %118 = arith.index_cast %c1_i32_29 : i32 to index
    %c0_37 = arith.constant 0 : index
    %c0_38 = arith.constant 0 : index
    %119 = vector.load %arg6[%118, %c0_37, %c0_38] : memref<8x8x64xf32, #tpu.memory_space<vmem>>, vector<1x8x32xf32>
    %120 = vector.shape_cast %119 : vector<1x8x32xf32> to vector<8x32xf32>
    %121 = vector.shape_cast %117 : vector<8x32xf32> to vector<1x8x32xf32>
    tpu.vector_store %arg6[%118, %c0_37, %c0_38], %121 {strides = array<i32>} : memref<8x8x64xf32, #tpu.memory_space<vmem>>, vector<1x8x32xf32>,
    %122 = vector.extract_strided_slice %116 {offsets = [0, 32], sizes = [8, 32], strides = [1, 1]} : vector<8x64xf32> to vector<8x32xf32>
    %123 = arith.index_cast %81 : i32 to index
    %c0_39 = arith.constant 0 : index
    %c32_40 = arith.constant 32 : index
    %124 = vector.load %arg6[%123, %c0_39, %c32_40] : memref<8x8x64xf32, #tpu.memory_space<vmem>>, vector<1x8x32xf32>
    %125 = vector.shape_cast %124 : vector<1x8x32xf32> to vector<8x32xf32>
    %126 = vector.shape_cast %122 : vector<8x32xf32> to vector<1x8x32xf32>
    tpu.vector_store %arg6[%123, %c0_39, %c32_40], %126 {strides = array<i32>} : memref<8x8x64xf32, #tpu.memory_space<vmem>>, vector<1x8x32xf32>,
    %c2_i32 = arith.constant 2 : i32
    %c7_i32_41 = arith.constant 7 : i32
    %127 = arith.subi %c7_i32_41, %c2_i32 : i32
    %128 = arith.index_cast %127 : i32 to index
    %c0_42 = arith.constant 0 : index
    %c0_43 = arith.constant 0 : index
    %129 = vector.load %arg7[%128, %c0_42, %c0_43] : memref<8x8x256xf32, #tpu.memory_space<vmem>>, vector<1x8x256xf32>
    %130 = vector.shape_cast %129 : vector<1x8x256xf32> to vector<8x256xf32>
    %131 = arith.index_cast %c2_i32 : i32 to index
    %c0_44 = arith.constant 0 : index
    %c0_45 = arith.constant 0 : index
    %132 = vector.load %arg7[%131, %c0_44, %c0_45] : memref<8x8x256xf32, #tpu.memory_space<vmem>>, vector<1x8x256xf32>
    %133 = vector.shape_cast %132 : vector<1x8x256xf32> to vector<8x256xf32>
    %134 = arith.select %29, %130, %133 : vector<8x256xi1>, vector<8x256xf32>
    %cst_46 = arith.constant dense<0.000000e+00> : vector<8x256xf32>
    %135 = tpu.matmul %112, %10, %cst_46 {dimension_numbers = #tpu.dot_dimension_numbers<[1], [0], [0], [1], [0, 0, 1, 1], [], []>} : vector<8x64xf32>, vector<64x256xf32>, vector<8x256xf32> -> vector<8x256xf32>
    %136 = arith.addf %134, %135 : vector<8x256xf32>
    %137 = vector.extract_strided_slice %136 {offsets = [0, 0], sizes = [8, 192], strides = [1, 1]} : vector<8x256xf32> to vector<8x192xf32>
    %138 = arith.negf %137 : vector<8x192xf32>
    %139 = math.exp %138 : vector<8x192xf32>
    %cst_47 = arith.constant 1.000000e+00 : f32
    %140 = vector.broadcast %cst_47 : f32 to vector<8x192xf32>
    %141 = arith.addf %140, %139 : vector<8x192xf32>
    %142 = arith.divf %140, %141 : vector<8x192xf32>
    %143 = vector.extract_strided_slice %142 {offsets = [0, 0], sizes = [8, 64], strides = [1, 1]} : vector<8x192xf32> to vector<8x64xf32>
    %144 = vector.extract_strided_slice %142 {offsets = [0, 64], sizes = [8, 64], strides = [1, 1]} : vector<8x192xf32> to vector<8x64xf32>
    %145 = vector.extract_strided_slice %142 {offsets = [0, 128], sizes = [8, 64], strides = [1, 1]} : vector<8x192xf32> to vector<8x64xf32>
    %146 = vector.extract_strided_slice %136 {offsets = [0, 192], sizes = [8, 64], strides = [1, 1]} : vector<8x256xf32> to vector<8x64xf32>
    %147 = math.tanh %146 : vector<8x64xf32>
    %148 = arith.mulf %144, %113 : vector<8x64xf32>
    %149 = arith.mulf %143, %147 : vector<8x64xf32>
    %150 = arith.addf %148, %149 : vector<8x64xf32>
    %151 = math.tanh %150 : vector<8x64xf32>
    %152 = arith.mulf %145, %151 : vector<8x64xf32>
    %153 = vector.broadcast %127 : i32 to vector<8x64xi32>
    %154 = vector.broadcast %c2_i32 : i32 to vector<8x64xi32>
    %155 = arith.select %32, %153, %154 : vector<8x64xi1>, vector<8x64xi32>
    %156 = vector.broadcast %9 : vector<8x1xi32> to vector<8x64xi32>
    %157 = arith.cmpi slt, %155, %156 : vector<8x64xi32>
    %158 = arith.select %157, %152, %112 : vector<8x64xi1>, vector<8x64xf32>
    %159 = arith.select %157, %150, %113 : vector<8x64xi1>, vector<8x64xf32>
    %160 = arith.extui %157 : vector<8x64xi1> to vector<8x64xi32>
    %161 = arith.sitofp %160 : vector<8x64xi32> to vector<8x64xf32>
    %162 = arith.mulf %152, %161 : vector<8x64xf32>
    %163 = vector.extract_strided_slice %162 {offsets = [0, 0], sizes = [8, 32], strides = [1, 1]} : vector<8x64xf32> to vector<8x32xf32>
    %164 = arith.index_cast %c2_i32 : i32 to index
    %c0_48 = arith.constant 0 : index
    %c0_49 = arith.constant 0 : index
    %165 = vector.load %arg6[%164, %c0_48, %c0_49] : memref<8x8x64xf32, #tpu.memory_space<vmem>>, vector<1x8x32xf32>
    %166 = vector.shape_cast %165 : vector<1x8x32xf32> to vector<8x32xf32>
    %167 = vector.shape_cast %163 : vector<8x32xf32> to vector<1x8x32xf32>
    tpu.vector_store %arg6[%164, %c0_48, %c0_49], %167 {strides = array<i32>} : memref<8x8x64xf32, #tpu.memory_space<vmem>>, vector<1x8x32xf32>,
    %168 = vector.extract_strided_slice %162 {offsets = [0, 32], sizes = [8, 32], strides = [1, 1]} : vector<8x64xf32> to vector<8x32xf32>
    %169 = arith.index_cast %127 : i32 to index
    %c0_50 = arith.constant 0 : index
    %c32_51 = arith.constant 32 : index
    %170 = vector.load %arg6[%169, %c0_50, %c32_51] : memref<8x8x64xf32, #tpu.memory_space<vmem>>, vector<1x8x32xf32>
    %171 = vector.shape_cast %170 : vector<1x8x32xf32> to vector<8x32xf32>
    %172 = vector.shape_cast %168 : vector<8x32xf32> to vector<1x8x32xf32>
    tpu.vector_store %arg6[%169, %c0_50, %c32_51], %172 {strides = array<i32>} : memref<8x8x64xf32, #tpu.memory_space<vmem>>, vector<1x8x32xf32>,
    %c3_i32 = arith.constant 3 : i32
    %c7_i32_52 = arith.constant 7 : i32
    %173 = arith.subi %c7_i32_52, %c3_i32 : i32
    %174 = arith.index_cast %173 : i32 to index
    %c0_53 = arith.constant 0 : index
    %c0_54 = arith.constant 0 : index
    %175 = vector.load %arg7[%174, %c0_53, %c0_54] : memref<8x8x256xf32, #tpu.memory_space<vmem>>, vector<1x8x256xf32>
    %176 = vector.shape_cast %175 : vector<1x8x256xf32> to vector<8x256xf32>
    %177 = arith.index_cast %c3_i32 : i32 to index
    %c0_55 = arith.constant 0 : index
    %c0_56 = arith.constant 0 : index
    %178 = vector.load %arg7[%177, %c0_55, %c0_56] : memref<8x8x256xf32, #tpu.memory_space<vmem>>, vector<1x8x256xf32>
    %179 = vector.shape_cast %178 : vector<1x8x256xf32> to vector<8x256xf32>
    %180 = arith.select %29, %176, %179 : vector<8x256xi1>, vector<8x256xf32>
    %cst_57 = arith.constant dense<0.000000e+00> : vector<8x256xf32>
    %181 = tpu.matmul %158, %10, %cst_57 {dimension_numbers = #tpu.dot_dimension_numbers<[1], [0], [0], [1], [0, 0, 1, 1], [], []>} : vector<8x64xf32>, vector<64x256xf32>, vector<8x256xf32> -> vector<8x256xf32>
    %182 = arith.addf %180, %181 : vector<8x256xf32>
    %183 = vector.extract_strided_slice %182 {offsets = [0, 0], sizes = [8, 192], strides = [1, 1]} : vector<8x256xf32> to vector<8x192xf32>
    %184 = arith.negf %183 : vector<8x192xf32>
    %185 = math.exp %184 : vector<8x192xf32>
    %cst_58 = arith.constant 1.000000e+00 : f32
    %186 = vector.broadcast %cst_58 : f32 to vector<8x192xf32>
    %187 = arith.addf %186, %185 : vector<8x192xf32>
    %188 = arith.divf %186, %187 : vector<8x192xf32>
    %189 = vector.extract_strided_slice %188 {offsets = [0, 0], sizes = [8, 64], strides = [1, 1]} : vector<8x192xf32> to vector<8x64xf32>
    %190 = vector.extract_strided_slice %188 {offsets = [0, 64], sizes = [8, 64], strides = [1, 1]} : vector<8x192xf32> to vector<8x64xf32>
    %191 = vector.extract_strided_slice %188 {offsets = [0, 128], sizes = [8, 64], strides = [1, 1]} : vector<8x192xf32> to vector<8x64xf32>
    %192 = vector.extract_strided_slice %182 {offsets = [0, 192], sizes = [8, 64], strides = [1, 1]} : vector<8x256xf32> to vector<8x64xf32>
    %193 = math.tanh %192 : vector<8x64xf32>
    %194 = arith.mulf %190, %159 : vector<8x64xf32>
    %195 = arith.mulf %189, %193 : vector<8x64xf32>
    %196 = arith.addf %194, %195 : vector<8x64xf32>
    %197 = math.tanh %196 : vector<8x64xf32>
    %198 = arith.mulf %191, %197 : vector<8x64xf32>
    %199 = vector.broadcast %173 : i32 to vector<8x64xi32>
    %200 = vector.broadcast %c3_i32 : i32 to vector<8x64xi32>
    %201 = arith.select %32, %199, %200 : vector<8x64xi1>, vector<8x64xi32>
    %202 = vector.broadcast %9 : vector<8x1xi32> to vector<8x64xi32>
    %203 = arith.cmpi slt, %201, %202 : vector<8x64xi32>
    %204 = arith.select %203, %198, %158 : vector<8x64xi1>, vector<8x64xf32>
    %205 = arith.select %203, %196, %159 : vector<8x64xi1>, vector<8x64xf32>
    %206 = arith.extui %203 : vector<8x64xi1> to vector<8x64xi32>
    %207 = arith.sitofp %206 : vector<8x64xi32> to vector<8x64xf32>
    %208 = arith.mulf %198, %207 : vector<8x64xf32>
    %209 = vector.extract_strided_slice %208 {offsets = [0, 0], sizes = [8, 32], strides = [1, 1]} : vector<8x64xf32> to vector<8x32xf32>
    %210 = arith.index_cast %c3_i32 : i32 to index
    %c0_59 = arith.constant 0 : index
    %c0_60 = arith.constant 0 : index
    %211 = vector.load %arg6[%210, %c0_59, %c0_60] : memref<8x8x64xf32, #tpu.memory_space<vmem>>, vector<1x8x32xf32>
    %212 = vector.shape_cast %211 : vector<1x8x32xf32> to vector<8x32xf32>
    %213 = vector.shape_cast %209 : vector<8x32xf32> to vector<1x8x32xf32>
    tpu.vector_store %arg6[%210, %c0_59, %c0_60], %213 {strides = array<i32>} : memref<8x8x64xf32, #tpu.memory_space<vmem>>, vector<1x8x32xf32>,
    %214 = vector.extract_strided_slice %208 {offsets = [0, 32], sizes = [8, 32], strides = [1, 1]} : vector<8x64xf32> to vector<8x32xf32>
    %215 = arith.index_cast %173 : i32 to index
    %c0_61 = arith.constant 0 : index
    %c32_62 = arith.constant 32 : index
    %216 = vector.load %arg6[%215, %c0_61, %c32_62] : memref<8x8x64xf32, #tpu.memory_space<vmem>>, vector<1x8x32xf32>
    %217 = vector.shape_cast %216 : vector<1x8x32xf32> to vector<8x32xf32>
    %218 = vector.shape_cast %214 : vector<8x32xf32> to vector<1x8x32xf32>
    tpu.vector_store %arg6[%215, %c0_61, %c32_62], %218 {strides = array<i32>} : memref<8x8x64xf32, #tpu.memory_space<vmem>>, vector<1x8x32xf32>,
    %c4_i32 = arith.constant 4 : i32
    %c7_i32_63 = arith.constant 7 : i32
    %219 = arith.subi %c7_i32_63, %c4_i32 : i32
    %220 = arith.index_cast %219 : i32 to index
    %c0_64 = arith.constant 0 : index
    %c0_65 = arith.constant 0 : index
    %221 = vector.load %arg7[%220, %c0_64, %c0_65] : memref<8x8x256xf32, #tpu.memory_space<vmem>>, vector<1x8x256xf32>
    %222 = vector.shape_cast %221 : vector<1x8x256xf32> to vector<8x256xf32>
    %223 = arith.index_cast %c4_i32 : i32 to index
    %c0_66 = arith.constant 0 : index
    %c0_67 = arith.constant 0 : index
    %224 = vector.load %arg7[%223, %c0_66, %c0_67] : memref<8x8x256xf32, #tpu.memory_space<vmem>>, vector<1x8x256xf32>
    %225 = vector.shape_cast %224 : vector<1x8x256xf32> to vector<8x256xf32>
    %226 = arith.select %29, %222, %225 : vector<8x256xi1>, vector<8x256xf32>
    %cst_68 = arith.constant dense<0.000000e+00> : vector<8x256xf32>
    %227 = tpu.matmul %204, %10, %cst_68 {dimension_numbers = #tpu.dot_dimension_numbers<[1], [0], [0], [1], [0, 0, 1, 1], [], []>} : vector<8x64xf32>, vector<64x256xf32>, vector<8x256xf32> -> vector<8x256xf32>
    %228 = arith.addf %226, %227 : vector<8x256xf32>
    %229 = vector.extract_strided_slice %228 {offsets = [0, 0], sizes = [8, 192], strides = [1, 1]} : vector<8x256xf32> to vector<8x192xf32>
    %230 = arith.negf %229 : vector<8x192xf32>
    %231 = math.exp %230 : vector<8x192xf32>
    %cst_69 = arith.constant 1.000000e+00 : f32
    %232 = vector.broadcast %cst_69 : f32 to vector<8x192xf32>
    %233 = arith.addf %232, %231 : vector<8x192xf32>
    %234 = arith.divf %232, %233 : vector<8x192xf32>
    %235 = vector.extract_strided_slice %234 {offsets = [0, 0], sizes = [8, 64], strides = [1, 1]} : vector<8x192xf32> to vector<8x64xf32>
    %236 = vector.extract_strided_slice %234 {offsets = [0, 64], sizes = [8, 64], strides = [1, 1]} : vector<8x192xf32> to vector<8x64xf32>
    %237 = vector.extract_strided_slice %234 {offsets = [0, 128], sizes = [8, 64], strides = [1, 1]} : vector<8x192xf32> to vector<8x64xf32>
    %238 = vector.extract_strided_slice %228 {offsets = [0, 192], sizes = [8, 64], strides = [1, 1]} : vector<8x256xf32> to vector<8x64xf32>
    %239 = math.tanh %238 : vector<8x64xf32>
    %240 = arith.mulf %236, %205 : vector<8x64xf32>
    %241 = arith.mulf %235, %239 : vector<8x64xf32>
    %242 = arith.addf %240, %241 : vector<8x64xf32>
    %243 = math.tanh %242 : vector<8x64xf32>
    %244 = arith.mulf %237, %243 : vector<8x64xf32>
    %245 = vector.broadcast %219 : i32 to vector<8x64xi32>
    %246 = vector.broadcast %c4_i32 : i32 to vector<8x64xi32>
    %247 = arith.select %32, %245, %246 : vector<8x64xi1>, vector<8x64xi32>
    %248 = vector.broadcast %9 : vector<8x1xi32> to vector<8x64xi32>
    %249 = arith.cmpi slt, %247, %248 : vector<8x64xi32>
    %250 = arith.select %249, %244, %204 : vector<8x64xi1>, vector<8x64xf32>
    %251 = arith.select %249, %242, %205 : vector<8x64xi1>, vector<8x64xf32>
    %252 = arith.extui %249 : vector<8x64xi1> to vector<8x64xi32>
    %253 = arith.sitofp %252 : vector<8x64xi32> to vector<8x64xf32>
    %254 = arith.mulf %244, %253 : vector<8x64xf32>
    %255 = vector.extract_strided_slice %254 {offsets = [0, 0], sizes = [8, 32], strides = [1, 1]} : vector<8x64xf32> to vector<8x32xf32>
    %256 = arith.index_cast %c4_i32 : i32 to index
    %c0_70 = arith.constant 0 : index
    %c0_71 = arith.constant 0 : index
    %257 = vector.load %arg6[%256, %c0_70, %c0_71] : memref<8x8x64xf32, #tpu.memory_space<vmem>>, vector<1x8x32xf32>
    %258 = vector.shape_cast %257 : vector<1x8x32xf32> to vector<8x32xf32>
    %259 = vector.shape_cast %255 : vector<8x32xf32> to vector<1x8x32xf32>
    tpu.vector_store %arg6[%256, %c0_70, %c0_71], %259 {strides = array<i32>} : memref<8x8x64xf32, #tpu.memory_space<vmem>>, vector<1x8x32xf32>,
    %260 = vector.extract_strided_slice %254 {offsets = [0, 32], sizes = [8, 32], strides = [1, 1]} : vector<8x64xf32> to vector<8x32xf32>
    %261 = arith.index_cast %219 : i32 to index
    %c0_72 = arith.constant 0 : index
    %c32_73 = arith.constant 32 : index
    %262 = vector.load %arg6[%261, %c0_72, %c32_73] : memref<8x8x64xf32, #tpu.memory_space<vmem>>, vector<1x8x32xf32>
    %263 = vector.shape_cast %262 : vector<1x8x32xf32> to vector<8x32xf32>
    %264 = vector.shape_cast %260 : vector<8x32xf32> to vector<1x8x32xf32>
    tpu.vector_store %arg6[%261, %c0_72, %c32_73], %264 {strides = array<i32>} : memref<8x8x64xf32, #tpu.memory_space<vmem>>, vector<1x8x32xf32>,
    %c5_i32 = arith.constant 5 : i32
    %c7_i32_74 = arith.constant 7 : i32
    %265 = arith.subi %c7_i32_74, %c5_i32 : i32
    %266 = arith.index_cast %265 : i32 to index
    %c0_75 = arith.constant 0 : index
    %c0_76 = arith.constant 0 : index
    %267 = vector.load %arg7[%266, %c0_75, %c0_76] : memref<8x8x256xf32, #tpu.memory_space<vmem>>, vector<1x8x256xf32>
    %268 = vector.shape_cast %267 : vector<1x8x256xf32> to vector<8x256xf32>
    %269 = arith.index_cast %c5_i32 : i32 to index
    %c0_77 = arith.constant 0 : index
    %c0_78 = arith.constant 0 : index
    %270 = vector.load %arg7[%269, %c0_77, %c0_78] : memref<8x8x256xf32, #tpu.memory_space<vmem>>, vector<1x8x256xf32>
    %271 = vector.shape_cast %270 : vector<1x8x256xf32> to vector<8x256xf32>
    %272 = arith.select %29, %268, %271 : vector<8x256xi1>, vector<8x256xf32>
    %cst_79 = arith.constant dense<0.000000e+00> : vector<8x256xf32>
    %273 = tpu.matmul %250, %10, %cst_79 {dimension_numbers = #tpu.dot_dimension_numbers<[1], [0], [0], [1], [0, 0, 1, 1], [], []>} : vector<8x64xf32>, vector<64x256xf32>, vector<8x256xf32> -> vector<8x256xf32>
    %274 = arith.addf %272, %273 : vector<8x256xf32>
    %275 = vector.extract_strided_slice %274 {offsets = [0, 0], sizes = [8, 192], strides = [1, 1]} : vector<8x256xf32> to vector<8x192xf32>
    %276 = arith.negf %275 : vector<8x192xf32>
    %277 = math.exp %276 : vector<8x192xf32>
    %cst_80 = arith.constant 1.000000e+00 : f32
    %278 = vector.broadcast %cst_80 : f32 to vector<8x192xf32>
    %279 = arith.addf %278, %277 : vector<8x192xf32>
    %280 = arith.divf %278, %279 : vector<8x192xf32>
    %281 = vector.extract_strided_slice %280 {offsets = [0, 0], sizes = [8, 64], strides = [1, 1]} : vector<8x192xf32> to vector<8x64xf32>
    %282 = vector.extract_strided_slice %280 {offsets = [0, 64], sizes = [8, 64], strides = [1, 1]} : vector<8x192xf32> to vector<8x64xf32>
    %283 = vector.extract_strided_slice %280 {offsets = [0, 128], sizes = [8, 64], strides = [1, 1]} : vector<8x192xf32> to vector<8x64xf32>
    %284 = vector.extract_strided_slice %274 {offsets = [0, 192], sizes = [8, 64], strides = [1, 1]} : vector<8x256xf32> to vector<8x64xf32>
    %285 = math.tanh %284 : vector<8x64xf32>
    %286 = arith.mulf %282, %251 : vector<8x64xf32>
    %287 = arith.mulf %281, %285 : vector<8x64xf32>
    %288 = arith.addf %286, %287 : vector<8x64xf32>
    %289 = math.tanh %288 : vector<8x64xf32>
    %290 = arith.mulf %283, %289 : vector<8x64xf32>
    %291 = vector.broadcast %265 : i32 to vector<8x64xi32>
    %292 = vector.broadcast %c5_i32 : i32 to vector<8x64xi32>
    %293 = arith.select %32, %291, %292 : vector<8x64xi1>, vector<8x64xi32>
    %294 = vector.broadcast %9 : vector<8x1xi32> to vector<8x64xi32>
    %295 = arith.cmpi slt, %293, %294 : vector<8x64xi32>
    %296 = arith.select %295, %290, %250 : vector<8x64xi1>, vector<8x64xf32>
    %297 = arith.select %295, %288, %251 : vector<8x64xi1>, vector<8x64xf32>
    %298 = arith.extui %295 : vector<8x64xi1> to vector<8x64xi32>
    %299 = arith.sitofp %298 : vector<8x64xi32> to vector<8x64xf32>
    %300 = arith.mulf %290, %299 : vector<8x64xf32>
    %301 = vector.extract_strided_slice %300 {offsets = [0, 0], sizes = [8, 32], strides = [1, 1]} : vector<8x64xf32> to vector<8x32xf32>
    %302 = arith.index_cast %c5_i32 : i32 to index
    %c0_81 = arith.constant 0 : index
    %c0_82 = arith.constant 0 : index
    %303 = vector.load %arg6[%302, %c0_81, %c0_82] : memref<8x8x64xf32, #tpu.memory_space<vmem>>, vector<1x8x32xf32>
    %304 = vector.shape_cast %303 : vector<1x8x32xf32> to vector<8x32xf32>
    %305 = vector.shape_cast %301 : vector<8x32xf32> to vector<1x8x32xf32>
    tpu.vector_store %arg6[%302, %c0_81, %c0_82], %305 {strides = array<i32>} : memref<8x8x64xf32, #tpu.memory_space<vmem>>, vector<1x8x32xf32>,
    %306 = vector.extract_strided_slice %300 {offsets = [0, 32], sizes = [8, 32], strides = [1, 1]} : vector<8x64xf32> to vector<8x32xf32>
    %307 = arith.index_cast %265 : i32 to index
    %c0_83 = arith.constant 0 : index
    %c32_84 = arith.constant 32 : index
    %308 = vector.load %arg6[%307, %c0_83, %c32_84] : memref<8x8x64xf32, #tpu.memory_space<vmem>>, vector<1x8x32xf32>
    %309 = vector.shape_cast %308 : vector<1x8x32xf32> to vector<8x32xf32>
    %310 = vector.shape_cast %306 : vector<8x32xf32> to vector<1x8x32xf32>
    tpu.vector_store %arg6[%307, %c0_83, %c32_84], %310 {strides = array<i32>} : memref<8x8x64xf32, #tpu.memory_space<vmem>>, vector<1x8x32xf32>,
    %c6_i32 = arith.constant 6 : i32
    %c7_i32_85 = arith.constant 7 : i32
    %311 = arith.subi %c7_i32_85, %c6_i32 : i32
    %312 = arith.index_cast %311 : i32 to index
    %c0_86 = arith.constant 0 : index
    %c0_87 = arith.constant 0 : index
    %313 = vector.load %arg7[%312, %c0_86, %c0_87] : memref<8x8x256xf32, #tpu.memory_space<vmem>>, vector<1x8x256xf32>
    %314 = vector.shape_cast %313 : vector<1x8x256xf32> to vector<8x256xf32>
    %315 = arith.index_cast %c6_i32 : i32 to index
    %c0_88 = arith.constant 0 : index
    %c0_89 = arith.constant 0 : index
    %316 = vector.load %arg7[%315, %c0_88, %c0_89] : memref<8x8x256xf32, #tpu.memory_space<vmem>>, vector<1x8x256xf32>
    %317 = vector.shape_cast %316 : vector<1x8x256xf32> to vector<8x256xf32>
    %318 = arith.select %29, %314, %317 : vector<8x256xi1>, vector<8x256xf32>
    %cst_90 = arith.constant dense<0.000000e+00> : vector<8x256xf32>
    %319 = tpu.matmul %296, %10, %cst_90 {dimension_numbers = #tpu.dot_dimension_numbers<[1], [0], [0], [1], [0, 0, 1, 1], [], []>} : vector<8x64xf32>, vector<64x256xf32>, vector<8x256xf32> -> vector<8x256xf32>
    %320 = arith.addf %318, %319 : vector<8x256xf32>
    %321 = vector.extract_strided_slice %320 {offsets = [0, 0], sizes = [8, 192], strides = [1, 1]} : vector<8x256xf32> to vector<8x192xf32>
    %322 = arith.negf %321 : vector<8x192xf32>
    %323 = math.exp %322 : vector<8x192xf32>
    %cst_91 = arith.constant 1.000000e+00 : f32
    %324 = vector.broadcast %cst_91 : f32 to vector<8x192xf32>
    %325 = arith.addf %324, %323 : vector<8x192xf32>
    %326 = arith.divf %324, %325 : vector<8x192xf32>
    %327 = vector.extract_strided_slice %326 {offsets = [0, 0], sizes = [8, 64], strides = [1, 1]} : vector<8x192xf32> to vector<8x64xf32>
    %328 = vector.extract_strided_slice %326 {offsets = [0, 64], sizes = [8, 64], strides = [1, 1]} : vector<8x192xf32> to vector<8x64xf32>
    %329 = vector.extract_strided_slice %326 {offsets = [0, 128], sizes = [8, 64], strides = [1, 1]} : vector<8x192xf32> to vector<8x64xf32>
    %330 = vector.extract_strided_slice %320 {offsets = [0, 192], sizes = [8, 64], strides = [1, 1]} : vector<8x256xf32> to vector<8x64xf32>
    %331 = math.tanh %330 : vector<8x64xf32>
    %332 = arith.mulf %328, %297 : vector<8x64xf32>
    %333 = arith.mulf %327, %331 : vector<8x64xf32>
    %334 = arith.addf %332, %333 : vector<8x64xf32>
    %335 = math.tanh %334 : vector<8x64xf32>
    %336 = arith.mulf %329, %335 : vector<8x64xf32>
    %337 = vector.broadcast %311 : i32 to vector<8x64xi32>
    %338 = vector.broadcast %c6_i32 : i32 to vector<8x64xi32>
    %339 = arith.select %32, %337, %338 : vector<8x64xi1>, vector<8x64xi32>
    %340 = vector.broadcast %9 : vector<8x1xi32> to vector<8x64xi32>
    %341 = arith.cmpi slt, %339, %340 : vector<8x64xi32>
    %342 = arith.select %341, %336, %296 : vector<8x64xi1>, vector<8x64xf32>
    %343 = arith.select %341, %334, %297 : vector<8x64xi1>, vector<8x64xf32>
    %344 = arith.extui %341 : vector<8x64xi1> to vector<8x64xi32>
    %345 = arith.sitofp %344 : vector<8x64xi32> to vector<8x64xf32>
    %346 = arith.mulf %336, %345 : vector<8x64xf32>
    %347 = vector.extract_strided_slice %346 {offsets = [0, 0], sizes = [8, 32], strides = [1, 1]} : vector<8x64xf32> to vector<8x32xf32>
    %348 = arith.index_cast %c6_i32 : i32 to index
    %c0_92 = arith.constant 0 : index
    %c0_93 = arith.constant 0 : index
    %349 = vector.load %arg6[%348, %c0_92, %c0_93] : memref<8x8x64xf32, #tpu.memory_space<vmem>>, vector<1x8x32xf32>
    %350 = vector.shape_cast %349 : vector<1x8x32xf32> to vector<8x32xf32>
    %351 = vector.shape_cast %347 : vector<8x32xf32> to vector<1x8x32xf32>
    tpu.vector_store %arg6[%348, %c0_92, %c0_93], %351 {strides = array<i32>} : memref<8x8x64xf32, #tpu.memory_space<vmem>>, vector<1x8x32xf32>,
    %352 = vector.extract_strided_slice %346 {offsets = [0, 32], sizes = [8, 32], strides = [1, 1]} : vector<8x64xf32> to vector<8x32xf32>
    %353 = arith.index_cast %311 : i32 to index
    %c0_94 = arith.constant 0 : index
    %c32_95 = arith.constant 32 : index
    %354 = vector.load %arg6[%353, %c0_94, %c32_95] : memref<8x8x64xf32, #tpu.memory_space<vmem>>, vector<1x8x32xf32>
    %355 = vector.shape_cast %354 : vector<1x8x32xf32> to vector<8x32xf32>
    %356 = vector.shape_cast %352 : vector<8x32xf32> to vector<1x8x32xf32>
    tpu.vector_store %arg6[%353, %c0_94, %c32_95], %356 {strides = array<i32>} : memref<8x8x64xf32, #tpu.memory_space<vmem>>, vector<1x8x32xf32>,
    %c7_i32_96 = arith.constant 7 : i32
    %c7_i32_97 = arith.constant 7 : i32
    %357 = arith.subi %c7_i32_97, %c7_i32_96 : i32
    %358 = arith.index_cast %357 : i32 to index
    %c0_98 = arith.constant 0 : index
    %c0_99 = arith.constant 0 : index
    %359 = vector.load %arg7[%358, %c0_98, %c0_99] : memref<8x8x256xf32, #tpu.memory_space<vmem>>, vector<1x8x256xf32>
    %360 = vector.shape_cast %359 : vector<1x8x256xf32> to vector<8x256xf32>
    %361 = arith.index_cast %c7_i32_96 : i32 to index
    %c0_100 = arith.constant 0 : index
    %c0_101 = arith.constant 0 : index
    %362 = vector.load %arg7[%361, %c0_100, %c0_101] : memref<8x8x256xf32, #tpu.memory_space<vmem>>, vector<1x8x256xf32>
    %363 = vector.shape_cast %362 : vector<1x8x256xf32> to vector<8x256xf32>
    %364 = arith.select %29, %360, %363 : vector<8x256xi1>, vector<8x256xf32>
    %cst_102 = arith.constant dense<0.000000e+00> : vector<8x256xf32>
    %365 = tpu.matmul %342, %10, %cst_102 {dimension_numbers = #tpu.dot_dimension_numbers<[1], [0], [0], [1], [0, 0, 1, 1], [], []>} : vector<8x64xf32>, vector<64x256xf32>, vector<8x256xf32> -> vector<8x256xf32>
    %366 = arith.addf %364, %365 : vector<8x256xf32>
    %367 = vector.extract_strided_slice %366 {offsets = [0, 0], sizes = [8, 192], strides = [1, 1]} : vector<8x256xf32> to vector<8x192xf32>
    %368 = arith.negf %367 : vector<8x192xf32>
    %369 = math.exp %368 : vector<8x192xf32>
    %cst_103 = arith.constant 1.000000e+00 : f32
    %370 = vector.broadcast %cst_103 : f32 to vector<8x192xf32>
    %371 = arith.addf %370, %369 : vector<8x192xf32>
    %372 = arith.divf %370, %371 : vector<8x192xf32>
    %373 = vector.extract_strided_slice %372 {offsets = [0, 0], sizes = [8, 64], strides = [1, 1]} : vector<8x192xf32> to vector<8x64xf32>
    %374 = vector.extract_strided_slice %372 {offsets = [0, 64], sizes = [8, 64], strides = [1, 1]} : vector<8x192xf32> to vector<8x64xf32>
    %375 = vector.extract_strided_slice %372 {offsets = [0, 128], sizes = [8, 64], strides = [1, 1]} : vector<8x192xf32> to vector<8x64xf32>
    %376 = vector.extract_strided_slice %366 {offsets = [0, 192], sizes = [8, 64], strides = [1, 1]} : vector<8x256xf32> to vector<8x64xf32>
    %377 = math.tanh %376 : vector<8x64xf32>
    %378 = arith.mulf %374, %343 : vector<8x64xf32>
    %379 = arith.mulf %373, %377 : vector<8x64xf32>
    %380 = arith.addf %378, %379 : vector<8x64xf32>
    %381 = math.tanh %380 : vector<8x64xf32>
    %382 = arith.mulf %375, %381 : vector<8x64xf32>
    %383 = vector.broadcast %357 : i32 to vector<8x64xi32>
    %384 = vector.broadcast %c7_i32_96 : i32 to vector<8x64xi32>
    %385 = arith.select %32, %383, %384 : vector<8x64xi1>, vector<8x64xi32>
    %386 = vector.broadcast %9 : vector<8x1xi32> to vector<8x64xi32>
    %387 = arith.cmpi slt, %385, %386 : vector<8x64xi32>
    %388 = arith.select %387, %382, %342 : vector<8x64xi1>, vector<8x64xf32>
    %389 = arith.select %387, %380, %343 : vector<8x64xi1>, vector<8x64xf32>
    %390 = arith.extui %387 : vector<8x64xi1> to vector<8x64xi32>
    %391 = arith.sitofp %390 : vector<8x64xi32> to vector<8x64xf32>
    %392 = arith.mulf %382, %391 : vector<8x64xf32>
    %393 = vector.extract_strided_slice %392 {offsets = [0, 0], sizes = [8, 32], strides = [1, 1]} : vector<8x64xf32> to vector<8x32xf32>
    %394 = arith.index_cast %c7_i32_96 : i32 to index
    %c0_104 = arith.constant 0 : index
    %c0_105 = arith.constant 0 : index
    %395 = vector.load %arg6[%394, %c0_104, %c0_105] : memref<8x8x64xf32, #tpu.memory_space<vmem>>, vector<1x8x32xf32>
    %396 = vector.shape_cast %395 : vector<1x8x32xf32> to vector<8x32xf32>
    %397 = vector.shape_cast %393 : vector<8x32xf32> to vector<1x8x32xf32>
    tpu.vector_store %arg6[%394, %c0_104, %c0_105], %397 {strides = array<i32>} : memref<8x8x64xf32, #tpu.memory_space<vmem>>, vector<1x8x32xf32>,
    %398 = vector.extract_strided_slice %392 {offsets = [0, 32], sizes = [8, 32], strides = [1, 1]} : vector<8x64xf32> to vector<8x32xf32>
    %399 = arith.index_cast %357 : i32 to index
    %c0_106 = arith.constant 0 : index
    %c32_107 = arith.constant 32 : index
    %400 = vector.load %arg6[%399, %c0_106, %c32_107] : memref<8x8x64xf32, #tpu.memory_space<vmem>>, vector<1x8x32xf32>
    %401 = vector.shape_cast %400 : vector<1x8x32xf32> to vector<8x32xf32>
    %402 = vector.shape_cast %398 : vector<8x32xf32> to vector<1x8x32xf32>
    tpu.vector_store %arg6[%399, %c0_106, %c32_107], %402 {strides = array<i32>} : memref<8x8x64xf32, #tpu.memory_space<vmem>>, vector<1x8x32xf32>,
    %c8_i32 = arith.constant 8 : i32
    return
  }
  func.func @transform_0(%arg0: i32) -> (i32, i32) {
    %c0_i32 = arith.constant 0 : i32
    %c0_i32_0 = arith.constant 0 : i32
    %c0_i32_1 = arith.constant 0 : i32
    return %c0_i32, %c0_i32_0 : i32, i32
  }
  func.func @transform_1(%arg0: i32) -> (i32, i32, i32) {
    %c0_i32 = arith.constant 0 : i32
    %c0_i32_0 = arith.constant 0 : i32
    %c0_i32_1 = arith.constant 0 : i32
    %c0_i32_2 = arith.constant 0 : i32
    return %c0_i32, %c0_i32_0, %c0_i32_1 : i32, i32, i32
  }
  func.func @transform_2(%arg0: i32) -> (i32, i32) {
    %c0_i32 = arith.constant 0 : i32
    %c0_i32_0 = arith.constant 0 : i32
    %c0_i32_1 = arith.constant 0 : i32
    return %c0_i32, %c0_i32_0 : i32, i32
  }
  func.func @transform_3(%arg0: i32) -> (i32, i32) {
    %c0_i32 = arith.constant 0 : i32
    %c0_i32_0 = arith.constant 0 : i32
    %c0_i32_1 = arith.constant 0 : i32
    return %c0_i32, %c0_i32_0 : i32, i32
  }
  func.func @transform_4(%arg0: i32) -> (i32, i32) {
    %c0_i32 = arith.constant 0 : i32
    %c0_i32_0 = arith.constant 0 : i32
    %c0_i32_1 = arith.constant 0 : i32
    return %c0_i32, %c0_i32_0 : i32, i32
  }
  func.func @transform_5(%arg0: i32) -> (i32, i32, i32) {
    %c0_i32 = arith.constant 0 : i32
    %c0_i32_0 = arith.constant 0 : i32
    %c0_i32_1 = arith.constant 0 : i32
    %c0_i32_2 = arith.constant 0 : i32
    return %c0_i32, %c0_i32_0, %c0_i32_1 : i32, i32, i32
  }
}

</mosaic_0001>

<llo_original>
// kernel: psifold_lstm_forward.5
$region0: #{psifold_lstm_forward.5}
  #allocation0 [shape = 'u32[]', space=smem, size = 0x4, offset = 0x4, fixed_abs, tag = 'smem constant byte address 0x4 - core index']
  #allocation1 [shape = 'u32[144,128]{1,0:T(1,128)}', space=vmem, size = 0x12000, scoped, tag = 'internal scratch']
  %s0 = inlined_call_operand.vmem [shape: f32[64,64], index: 0, kind: input, shape index: {}]
  %s1 = inlined_call_operand.vmem [shape: f32[64,128], index: 1, kind: input, shape index: {}]
  %s2 = inlined_call_operand.vmem [shape: f32[1,128], index: 2, kind: input, shape index: {}]
  %s3 = inlined_call_operand.vmem [shape: f32[64,128], index: 3, kind: output, shape index: {}]
  %s4 = sld [smem:[#allocation0]]
  $region22: #{psifold_lstm_forward.5} parent=0
    _
  %s6 = ssub.s32 1, %s4
  %s7 = scalar_select 0, %s6, %s4
  // Predicated region
  $region2: #{psifold_lstm_forward.5} parent=0 // pred_check
    _
  $region3: #{psifold_lstm_forward.5} parent=0 // pred_check_branch
    %9 = sbr.rel (0) target = $region5
  $region4: #{psifold_lstm_forward.5} parent=0 // pred_region
    _
  $region5: #{psifold_lstm_forward.5} parent=0 // pred_fallthru
    _
  // Predicated region
  $region6: #{psifold_lstm_forward.5} parent=0 // pred_check
    _
  $region7: #{psifold_lstm_forward.5} parent=0 // pred_check_branch
    %11 = sbr.rel (0) target = $region9
  $region8: #{psifold_lstm_forward.5} parent=0 // pred_region
    _
  $region9: #{psifold_lstm_forward.5} parent=0 // pred_fallthru
    _
  // Predicated region
  $region10: #{psifold_lstm_forward.5} parent=0 // pred_check
    _
  $region11: #{psifold_lstm_forward.5} parent=0 // pred_check_branch
    %13 = sbr.rel (0) target = $region13
  $region12: #{psifold_lstm_forward.5} parent=0 // pred_region
    _
  $region13: #{psifold_lstm_forward.5} parent=0 // pred_fallthru
    _
  %v14 = vld [vmem:[%s0] sm:$0xff]
  %v15 = vld [vmem:[%s0 + $0x8] sm:$0xff]
  %v16 = vld [vmem:[%s0 + $0x10] sm:$0xff]
  %v17 = vld [vmem:[%s0 + $0x18] sm:$0xff]
  %v18 = vld [vmem:[%s0 + $0x20] sm:$0xff]
  %v19 = vld [vmem:[%s0 + $0x28] sm:$0xff]
  %v20 = vld [vmem:[%s0 + $0x30] sm:$0xff]
  %v21 = vld [vmem:[%s0 + $0x38] sm:$0xff]
  %v22 = vld [vmem:[%s1] sm:$0xff]
  %v23 = vld [vmem:[%s1 + $0x8] sm:$0xff]
  %v24 = vld [vmem:[%s1 + $0x10] sm:$0xff]
  %v25 = vld [vmem:[%s1 + $0x18] sm:$0xff]
  %v26 = vld [vmem:[%s1 + $0x20] sm:$0xff]
  %v27 = vld [vmem:[%s1 + $0x28] sm:$0xff]
  %v28 = vld [vmem:[%s1 + $0x30] sm:$0xff]
  %v29 = vld [vmem:[%s1 + $0x38] sm:$0xff]
  %v30 = vld [vmem:[%s2] sm:$0x1]
  %v32 = vlaneseq
  %v33 = vshrl.u32 %v32, 7
  %v34 = vsub.s32 0, %v33
  %v35 = vrot.slane %v30, %v34
  %vm37 = vcmask 523264
  %v39 = vsel %vm37, %v14, 0
  %v42 = vsel %vm37, %v15, 0
  %v45 = vsel %vm37, %v16, 0
  %v48 = vsel %vm37, %v17, 0
  %v51 = vsel %vm37, %v18, 0
  %v54 = vsel %vm37, %v19, 0
  %v57 = vsel %vm37, %v20, 0
  %v60 = vsel %vm37, %v21, 0
  %62 = vmatprep.subr.mxu0 0.0
  %63 = vmatpush1.msra.mxu0 0.0
  %64 = vmatprep.subr.mxu0 0.0
  %65 = vmatpush1.msra.mxu0 0.0
  %66 = vmatprep.subr.mxu0 0.0
  %67 = vmatpush1.msra.mxu0 0.0
  %68 = vmatprep.subr.mxu0 0.0
  %69 = vmatpush1.msra.mxu0 0.0
  %70 = vmatprep.subr.mxu0 0.0
  %71 = vmatpush1.msra.mxu0 0.0
  %72 = vmatprep.subr.mxu0 0.0
  %73 = vmatpush1.msra.mxu0 0.0
  %74 = vmatprep.subr.mxu0 0.0
  %75 = vmatpush1.msra.mxu0 0.0
  %76 = vmatprep.subr.mxu0 0.0
  %77 = vmatpush1.msra.mxu0 0.0
  %78 = vmatprep.subr.mxu0 0.0
  %79 = vmatpush1.msra.mxu0 %v29
  %80 = vmatprep.subr.mxu0 0.0
  %81 = vmatpush1.msra.mxu0 %v28
  %82 = vmatprep.subr.mxu0 0.0
  %83 = vmatpush1.msra.mxu0 %v27
  %84 = vmatprep.subr.mxu0 0.0
  %85 = vmatpush1.msra.mxu0 %v26
  %86 = vmatprep.subr.mxu0 0.0
  %87 = vmatpush1.msra.mxu0 %v25
  %88 = vmatprep.subr.mxu0 0.0
  %89 = vmatpush1.msra.mxu0 %v24
  %90 = vmatprep.subr.mxu0 0.0
  %91 = vmatpush1.msra.mxu0 %v23
  %92 = vmatprep.subr.mxu0 0.0
  %93 = vmatpush1.msra.mxu0 %v22
  %94 = vmatprep.subr.mxu0 0.0
  %95 = vmatpush2.msra.mxu0 0.0
  %96 = vmatprep.subr.mxu0 0.0
  %97 = vmatpush2.msra.mxu0 0.0
  %98 = vmatprep.subr.mxu0 0.0
  %99 = vmatpush2.msra.mxu0 0.0
  %100 = vmatprep.subr.mxu0 0.0
  %101 = vmatpush2.msra.mxu0 0.0
  %102 = vmatprep.subr.mxu0 0.0
  %103 = vmatpush2.msra.mxu0 0.0
  %104 = vmatprep.subr.mxu0 0.0
  %105 = vmatpush2.msra.mxu0 0.0
  %106 = vmatprep.subr.mxu0 0.0
  %107 = vmatpush2.msra.mxu0 0.0
  %108 = vmatprep.subr.mxu0 0.0
  %109 = vmatpush2.msra.mxu0 0.0
  %110 = vmatprep.subr.mxu0 0.0
  %111 = vmatpush2.msra.mxu0 0.0
  %112 = vmatprep.subr.mxu0 0.0
  %113 = vmatpush2.msra.mxu0 0.0
  %114 = vmatprep.subr.mxu0 0.0
  %115 = vmatpush2.msra.mxu0 0.0
  %116 = vmatprep.subr.mxu0 0.0
  %117 = vmatpush2.msra.mxu0 0.0
  %118 = vmatprep.subr.mxu0 0.0
  %119 = vmatpush2.msra.mxu0 0.0
  %120 = vmatprep.subr.mxu0 0.0
  %121 = vmatpush2.msra.mxu0 0.0
  %122 = vmatprep.subr.mxu0 0.0
  %123 = vmatpush2.msra.mxu0 0.0
  %124 = vmatprep.subr.mxu0 0.0
  %125 = vmatpush2.msra.mxu0 0.0
  %126 = vmatprep.mubr.f32.mxu0 0.0
  %127 = vmatmul.mubr.f32.gmra.mxu0 %v39
  %v128 = vpop.f32.mrf.mxu0
  %v129 = vadd.f32 %v35, %v128
  %v130 = vpop.f32.mrf.mxu0
  %131 = vmatprep.mubr.f32.mxu0 0.0
  %132 = vmatmul.mubr.f32.gmra.mxu0 %v42
  %v133 = vpop.f32.mrf.mxu0
  %v134 = vadd.f32 %v35, %v133
  %v135 = vpop.f32.mrf.mxu0
  %136 = vmatprep.mubr.f32.mxu0 0.0
  %137 = vmatmul.mubr.f32.gmra.mxu0 %v45
  %v138 = vpop.f32.mrf.mxu0
  %v139 = vadd.f32 %v35, %v138
  %v140 = vpop.f32.mrf.mxu0
  %141 = vmatprep.mubr.f32.mxu0 0.0
  %142 = vmatmul.mubr.f32.gmra.mxu0 %v48
  %v143 = vpop.f32.mrf.mxu0
  %v144 = vadd.f32 %v35, %v143
  %v145 = vpop.f32.mrf.mxu0
  %146 = vmatprep.mubr.f32.mxu0 0.0
  %147 = vmatmul.mubr.f32.gmra.mxu0 %v51
  %v148 = vpop.f32.mrf.mxu0
  %v149 = vadd.f32 %v35, %v148
  %v150 = vpop.f32.mrf.mxu0
  %151 = vmatprep.mubr.f32.mxu0 0.0
  %152 = vmatmul.mubr.f32.gmra.mxu0 %v54
  %v153 = vpop.f32.mrf.mxu0
  %v154 = vadd.f32 %v35, %v153
  %v155 = vpop.f32.mrf.mxu0
  %156 = vmatprep.mubr.f32.mxu0 0.0
  %157 = vmatmul.mubr.f32.gmra.mxu0 %v57
  %v158 = vpop.f32.mrf.mxu0
  %v159 = vadd.f32 %v35, %v158
  %v160 = vpop.f32.mrf.mxu0
  %161 = vmatprep.mubr.f32.mxu0 0.0
  %162 = vmatmul.mubr.f32.gmra.mxu0 %v60
  %v163 = vpop.f32.mrf.mxu0
  %v164 = vadd.f32 %v35, %v163
  %v165 = vpop.f32.mrf.mxu0
  %166 = vdwg.mxu0
  %167 = vst [vmem:[%s3] sm:$0xff] %v129
  %168 = vst [vmem:[%s3 + $0x8] sm:$0xff] %v134
  %169 = vst [vmem:[%s3 + $0x10] sm:$0xff] %v139
  %170 = vst [vmem:[%s3 + $0x18] sm:$0xff] %v144
  %171 = vst [vmem:[%s3 + $0x20] sm:$0xff] %v149
  %172 = vst [vmem:[%s3 + $0x28] sm:$0xff] %v154
  %173 = vst [vmem:[%s3 + $0x30] sm:$0xff] %v159
  %174 = vst [vmem:[%s3 + $0x38] sm:$0xff] %v164
  // Predicated region
  $region14: #{psifold_lstm_forward.5} parent=0 // pred_check
    _
  $region15: #{psifold_lstm_forward.5} parent=0 // pred_check_branch
    %176 = sbr.rel (0) target = $region17
  $region16: #{psifold_lstm_forward.5} parent=0 // pred_region
    _
  $region17: #{psifold_lstm_forward.5} parent=0 // pred_fallthru
    _
  // Predicated region
  $region18: #{psifold_lstm_forward.5} parent=0 // pred_check
    _
  $region19: #{psifold_lstm_forward.5} parent=0 // pred_check_branch
    %178 = sbr.rel (0) target = $region21
  $region20: #{psifold_lstm_forward.5} parent=0 // pred_region
    _
  $region21: #{psifold_lstm_forward.5} parent=0 // pred_fallthru
    _

// kernel: psifold_lstm_forward.3
$region0: #{psifold_lstm_forward.3}
  #allocation0 [shape = 'u32[]', space=smem, size = 0x4, offset = 0x4, fixed_abs, tag = 'smem constant byte address 0x4 - core index']
  #allocation1 [shape = 'u32[144,128]{1,0:T(1,128)}', space=vmem, size = 0x12000, scoped, tag = 'internal scratch']
  #allocation2 [shape = 'f32[8,8,256]{2,1,0:T(8,128)}', space=vmem, size = 0x10000, scoped, tag = 'scratch operand']
  %s0 = inlined_call_operand.vmem [shape: s32[8,1], index: 0, kind: input, shape index: {}]
  %s1 = inlined_call_operand.vmem [shape: f32[8,8,41], index: 1, kind: input, shape index: {}]
  %s2 = inlined_call_operand.hbm [shape: f32[41,256], index: 2, kind: input, shape index: {}]
  %s3 = inlined_call_operand.vmem [shape: f32[64,256], index: 3, kind: input, shape index: {}]
  %s4 = inlined_call_operand.vmem [shape: f32[1,256], index: 4, kind: input, shape index: {}]
  %s5 = inlined_call_operand.vmem [shape: f32[8,8,64], index: 5, kind: output, shape index: {}]
  %s6 = sld [smem:[#allocation0]]
  $region34: #{psifold_lstm_forward.3} parent=0
    _
  %s8 = ssub.s32 1, %s6
  %s9 = scalar_select 0, %s8, %s6
  $region1: #{psifold_lstm_forward.3} parent=0
    #allocation3 [shape = 'u8[49152]{0}', space=vmem, size = 0xc000, scoped, tag = 'input window, operand 2, single buffered']
    #allocation4 [shape = 's32[1]{0}', space=sflag, size = 0x4, scoped, tag = 'scoped memory for psifold_lstm_forward.3']
    %10 = vsyncpa [#allocation4], 0
    // Predicated region
    $region2: #{psifold_lstm_forward.3} parent=1 // pred_check
      _
    $region3: #{psifold_lstm_forward.3} parent=1 // pred_check_branch
      %12 = sbr.rel (0) target = $region5
    $region4: #{psifold_lstm_forward.3} parent=1 // pred_region
      _
    $region5: #{psifold_lstm_forward.3} parent=1 // pred_fallthru
      _
    // Predicated region
    $region6: #{psifold_lstm_forward.3} parent=1 // pred_check
      _
    $region7: #{psifold_lstm_forward.3} parent=1 // pred_check_branch
      %14 = sbr.rel (0) target = $region9
    $region8: #{psifold_lstm_forward.3} parent=1 // pred_region
      _
    $region9: #{psifold_lstm_forward.3} parent=1 // pred_fallthru
      _
    // Predicated region
    $region10: #{psifold_lstm_forward.3} parent=1 // pred_check
      _
    $region11: #{psifold_lstm_forward.3} parent=1 // pred_check_branch
      %16 = sbr.rel (0) target = $region13
    $region12: #{psifold_lstm_forward.3} parent=1 // pred_region
      %s18 = ssub.s32 1536, 1536
      %19 = vsyncadd [#allocation4], %s18
      %s20 = sshll.u32 [#allocation3], 4
      %s21 = int_to_ptr.vmem [resolvable:$true] %s20
      %26 = dma.hbm_to_vmem [thread:$0]  %s2, 1536, %s21, [#allocation4], 256, 256, 16
    $region13: #{psifold_lstm_forward.3} parent=1 // pred_fallthru
      _
    // Predicated region
    $region14: #{psifold_lstm_forward.3} parent=1 // pred_check
      _
    $region15: #{psifold_lstm_forward.3} parent=1 // pred_check_branch
      %28 = sbr.rel (0) target = $region17
    $region16: #{psifold_lstm_forward.3} parent=1 // pred_region
      _
    $region17: #{psifold_lstm_forward.3} parent=1 // pred_fallthru
      _
    // Predicated region
    $region18: #{psifold_lstm_forward.3} parent=1 // pred_check
      _
    $region19: #{psifold_lstm_forward.3} parent=1 // pred_check_branch
      %30 = sbr.rel (0) target = $region21
    $region20: #{psifold_lstm_forward.3} parent=1 // pred_region
      _
    $region21: #{psifold_lstm_forward.3} parent=1 // pred_fallthru
      _
    // Predicated region
    $region22: #{psifold_lstm_forward.3} parent=1 // pred_check
      _
    $region23: #{psifold_lstm_forward.3} parent=1 // pred_check_branch
      %32 = sbr.rel (0) target = $region25
    $region24: #{psifold_lstm_forward.3} parent=1 // pred_region
      %33 = dma.done [#allocation4], 1536
    $region25: #{psifold_lstm_forward.3} parent=1 // pred_fallthru
      _
    %v34 = vld [vmem:[%s1] sm:$0xff]
    %v35 = vld [vmem:[%s1 + $0x8] sm:$0xff]
    %v36 = vld [vmem:[%s1 + $0x10] sm:$0xff]
    %v37 = vld [vmem:[%s1 + $0x18] sm:$0xff]
    %v38 = vld [vmem:[%s1 + $0x20] sm:$0xff]
    %v39 = vld [vmem:[%s1 + $0x28] sm:$0xff]
    %v40 = vld [vmem:[%s1 + $0x30] sm:$0xff]
    %v41 = vld [vmem:[%s1 + $0x38] sm:$0xff]
    %v42 = vld [vmem:[#allocation3] sm:$0xff]
    %v43 = vld [vmem:[#allocation3 + $0x8] sm:$0xff]
    %v44 = vld [vmem:[#allocation3 + $0x10] sm:$0xff]
    %v45 = vld [vmem:[#allocation3 + $0x18] sm:$0xff]
    %v46 = vld [vmem:[#allocation3 + $0x20] sm:$0xff]
    %v47 = vld [vmem:[#allocation3 + $0x28] sm:$0xff]
    %v48 = vld [vmem:[#allocation3 + $0x30] sm:$0xff]
    %v49 = vld [vmem:[#allocation3 + $0x38] sm:$0xff]
    %v50 = vld [vmem:[#allocation3 + $0x40] sm:$0xff]
    %v51 = vld [vmem:[#allocation3 + $0x48] sm:$0xff]
    %v52 = vld [vmem:[#allocation3 + $0x50] sm:$0x1]
    %v53 = vld [vmem:[#allocation3 + $0x58] sm:$0x1]
    %v54 = vld [vmem:[%s4] sm:$0x3]
    %v56 = vlaneseq
    %v57 = vshrl.u32 %v56, 7
    %v58 = vsub.s32 0, %v57
    %v59 = vrot.slane %v54, %v58
    %v60 = vlaneseq
    %v61 = vshrl.u32 %v60, 7
    %v62 = vsub.s32 1, %v61
    %v63 = vrot.slane %v54, %v62
    %vm66 = vcmask 334848
    %v68 = vsel %vm66, %v34, 0
    %v71 = vsel %vm66, %v35, 0
    %v74 = vsel %vm66, %v36, 0
    %v77 = vsel %vm66, %v37, 0
    %v80 = vsel %vm66, %v38, 0
    %v83 = vsel %vm66, %v39, 0
    %v86 = vsel %vm66, %v40, 0
    %v89 = vsel %vm66, %v41, 0
    %vm91 = vcmask 1040384
    %v93 = vsel %vm91, %v52, 0
    %v96 = vsel %vm91, %v53, 0
    %98 = vmatprep.subr.mxu0 0.0
    %99 = vmatpush1.msra.mxu0 0.0
    %100 = vmatprep.subr.mxu0 0.0
    %101 = vmatpush1.msra.mxu0 0.0
    %102 = vmatprep.subr.mxu0 0.0
    %103 = vmatpush1.msra.mxu0 0.0
    %104 = vmatprep.subr.mxu0 0.0
    %105 = vmatpush1.msra.mxu0 0.0
    %106 = vmatprep.subr.mxu0 0.0
    %107 = vmatpush1.msra.mxu0 0.0
    %108 = vmatprep.subr.mxu0 0.0
    %109 = vmatpush1.msra.mxu0 0.0
    %110 = vmatprep.subr.mxu0 0.0
    %111 = vmatpush1.msra.mxu0 0.0
    %112 = vmatprep.subr.mxu0 0.0
    %113 = vmatpush1.msra.mxu0 0.0
    %114 = vmatprep.subr.mxu0 0.0
    %115 = vmatpush1.msra.mxu0 0.0
    %116 = vmatprep.subr.mxu0 0.0
    %117 = vmatpush1.msra.mxu0 0.0
    %118 = vmatprep.subr.mxu0 %v96
    %119 = vmatpush1.msra.mxu0 %v93
    %120 = vmatprep.subr.mxu0 %v51
    %121 = vmatpush1.msra.mxu0 %v50
    %122 = vmatprep.subr.mxu0 %v49
    %123 = vmatpush1.msra.mxu0 %v48
    %124 = vmatprep.subr.mxu0 %v47
    %125 = vmatpush1.msra.mxu0 %v46
    %126 = vmatprep.subr.mxu0 %v45
    %127 = vmatpush1.msra.mxu0 %v44
    %128 = vmatprep.subr.mxu0 %v43
    %129 = vmatpush1.msra.mxu0 %v42
    %130 = vmatprep.subr.mxu0 0.0
    %131 = vmatpush2.msra.mxu0 0.0
    %132 = vmatprep.subr.mxu0 0.0
    %133 = vmatpush2.msra.mxu0 0.0
    %134 = vmatprep.subr.mxu0 0.0
    %135 = vmatpush2.msra.mxu0 0.0
    %136 = vmatprep.subr.mxu0 0.0
    %137 = vmatpush2.msra.mxu0 0.0
    %138 = vmatprep.subr.mxu0 0.0
    %139 = vmatpush2.msra.mxu0 0.0
    %140 = vmatprep.subr.mxu0 0.0
    %141 = vmatpush2.msra.mxu0 0.0
    %142 = vmatprep.subr.mxu0 0.0
    %143 = vmatpush2.msra.mxu0 0.0
    %144 = vmatprep.subr.mxu0 0.0
    %145 = vmatpush2.msra.mxu0 0.0
    %146 = vmatprep.subr.mxu0 0.0
    %147 = vmatpush2.msra.mxu0 0.0
    %148 = vmatprep.subr.mxu0 0.0
    %149 = vmatpush2.msra.mxu0 0.0
    %150 = vmatprep.subr.mxu0 0.0
    %151 = vmatpush2.msra.mxu0 0.0
    %152 = vmatprep.subr.mxu0 0.0
    %153 = vmatpush2.msra.mxu0 0.0
    %154 = vmatprep.subr.mxu0 0.0
    %155 = vmatpush2.msra.mxu0 0.0
    %156 = vmatprep.subr.mxu0 0.0
    %157 = vmatpush2.msra.mxu0 0.0
    %158 = vmatprep.subr.mxu0 0.0
    %159 = vmatpush2.msra.mxu0 0.0
    %160 = vmatprep.subr.mxu0 0.0
    %161 = vmatpush2.msra.mxu0 0.0
    %162 = vmatprep.mubr.f32.mxu0 0.0
    %163 = vmatmul.mubr.f32.gmra.mxu0 %v68
    %v164 = vpop.f32.mrf.mxu0
    %v165 = vadd.f32 %v59, %v164
    %v166 = vpop.f32.mrf.mxu0
    %v167 = vadd.f32 %v63, %v166
    %168 = vmatprep.mubr.f32.mxu0 0.0
    %169 = vmatmul.mubr.f32.gmra.mxu0 %v71
    %v170 = vpop.f32.mrf.mxu0
    %v171 = vadd.f32 %v59, %v170
    %v172 = vpop.f32.mrf.mxu0
    %v173 = vadd.f32 %v63, %v172
    %174 = vmatprep.mubr.f32.mxu0 0.0
    %175 = vmatmul.mubr.f32.gmra.mxu0 %v74
    %v176 = vpop.f32.mrf.mxu0
    %v177 = vadd.f32 %v59, %v176
    %v178 = vpop.f32.mrf.mxu0
    %v179 = vadd.f32 %v63, %v178
    %180 = vmatprep.mubr.f32.mxu0 0.0
    %181 = vmatmul.mubr.f32.gmra.mxu0 %v77
    %v182 = vpop.f32.mrf.mxu0
    %v183 = vadd.f32 %v59, %v182
    %v184 = vpop.f32.mrf.mxu0
    %v185 = vadd.f32 %v63, %v184
    %186 = vmatprep.mubr.f32.mxu0 0.0
    %187 = vmatmul.mubr.f32.gmra.mxu0 %v80
    %v188 = vpop.f32.mrf.mxu0
    %v189 = vadd.f32 %v59, %v188
    %v190 = vpop.f32.mrf.mxu0
    %v191 = vadd.f32 %v63, %v190
    %192 = vmatprep.mubr.f32.mxu0 0.0
    %193 = vmatmul.mubr.f32.gmra.mxu0 %v83
    %v194 = vpop.f32.mrf.mxu0
    %v195 = vadd.f32 %v59, %v194
    %v196 = vpop.f32.mrf.mxu0
    %v197 = vadd.f32 %v63, %v196
    %198 = vmatprep.mubr.f32.mxu0 0.0
    %199 = vmatmul.mubr.f32.gmra.mxu0 %v86
    %v200 = vpop.f32.mrf.mxu0
    %v201 = vadd.f32 %v59, %v200
    %v202 = vpop.f32.mrf.mxu0
    %v203 = vadd.f32 %v63, %v202
    %204 = vmatprep.mubr.f32.mxu0 0.0
    %205 = vmatmul.mubr.f32.gmra.mxu0 %v89
    %v206 = vpop.f32.mrf.mxu0
    %v207 = vadd.f32 %v59, %v206
    %v208 = vpop.f32.mrf.mxu0
    %v209 = vadd.f32 %v63, %v208
    %210 = vdwg.mxu0
    %211 = vst [vmem:[#allocation2] sm:$0xff] %v165
    %212 = vst [vmem:[#allocation2 + $0x8] sm:$0xff] %v167
    %213 = vst [vmem:[#allocation2 + $0x10] sm:$0xff] %v171
    %214 = vst [vmem:[#allocation2 + $0x18] sm:$0xff] %v173
    %215 = vst [vmem:[#allocation2 + $0x20] sm:$0xff] %v177
    %216 = vst [vmem:[#allocation2 + $0x28] sm:$0xff] %v179
    %217 = vst [vmem:[#allocation2 + $0x30] sm:$0xff] %v183
    %218 = vst [vmem:[#allocation2 + $0x38] sm:$0xff] %v185
    %219 = vst [vmem:[#allocation2 + $0x40] sm:$0xff] %v189
    %220 = vst [vmem:[#allocation2 + $0x48] sm:$0xff] %v191
    %221 = vst [vmem:[#allocation2 + $0x50] sm:$0xff] %v195
    %222 = vst [vmem:[#allocation2 + $0x58] sm:$0xff] %v197
    %223 = vst [vmem:[#allocation2 + $0x60] sm:$0xff] %v201
    %224 = vst [vmem:[#allocation2 + $0x68] sm:$0xff] %v203
    %225 = vst [vmem:[#allocation2 + $0x70] sm:$0xff] %v207
    %226 = vst [vmem:[#allocation2 + $0x78] sm:$0xff] %v209
    %v227 = vld [vmem:[%s0] sm:$0xff]
    %v228 = vld [vmem:[%s3] sm:$0xff]
    %v229 = vld [vmem:[%s3 + $0x8] sm:$0xff]
    %v230 = vld [vmem:[%s3 + $0x10] sm:$0xff]
    %v231 = vld [vmem:[%s3 + $0x18] sm:$0xff]
    %v232 = vld [vmem:[%s3 + $0x20] sm:$0xff]
    %v233 = vld [vmem:[%s3 + $0x28] sm:$0xff]
    %v234 = vld [vmem:[%s3 + $0x30] sm:$0xff]
    %v235 = vld [vmem:[%s3 + $0x38] sm:$0xff]
    %v236 = vld [vmem:[%s3 + $0x40] sm:$0xff]
    %v237 = vld [vmem:[%s3 + $0x48] sm:$0xff]
    %v238 = vld [vmem:[%s3 + $0x50] sm:$0xff]
    %v239 = vld [vmem:[%s3 + $0x58] sm:$0xff]
    %v240 = vld [vmem:[%s3 + $0x60] sm:$0xff]
    %v241 = vld [vmem:[%s3 + $0x68] sm:$0xff]
    %v242 = vld [vmem:[%s3 + $0x70] sm:$0xff]
    %v243 = vld [vmem:[%s3 + $0x78] sm:$0xff]
    %v244 = vlaneseq
    %v245 = vand.u32 %v244, 127
    %v246 = vadd.s32 %v245, 128
    %vm247 = vcmp.lt.s32.totalorder %v245, 0
    %v248 = vsub.s32 0, %v245
    %v249 = vsel %vm247, %v248, %v245
    %v250 = vshrl.u32 %v249, 6
    %v251 = vand.u32 %v249, 63
    %v252 = vsub.s32 0, %v251
    %v253 = vsel %vm247, %v252, %v251
    %vm254 = vcmp.lt.s32.totalorder %v246, 0
    %v255 = vsub.s32 0, %v246
    %v256 = vsel %vm254, %v255, %v246
    %v257 = vshrl.u32 %v256, 6
    %v258 = vand.u32 %v256, 63
    %v259 = vsub.s32 0, %v258
    %v260 = vsel %vm254, %v259, %v258
    %vm261 = vcmp.ne.s32.totalorder %v253, 0
    %vm262 = vcmp.ne.s32.totalorder %v260, 0
    %vm263 = vcmp.lt.s32.totalorder %v253, 0
    %vm264 = vcmp.lt.s32.totalorder %v260, 0
    %vm265 = vmand %vm263, %vm261
    %vm266 = vmand %vm264, %vm262
    %v267 = vadd.s32 %v253, 64
    %v268 = vadd.s32 %v260, 64
    %v269 = vsel %vm265, %v267, %v253
    %v270 = vsel %vm266, %v268, %v260
    %vm271 = vcmp.ge.s32.totalorder %v269, 32
    %vm272 = vcmp.ge.s32.totalorder %v270, 32
    %vm273 = vcmp.ge.s32.totalorder %v245, 32
    %s274 = scalar_lea.vmem [#allocation2], 112
    %v275 = vld [vmem:[%s274] sm:$0xff]
    %v276 = vld [vmem:[%s274 + $0x8] sm:$0xff]
    %v277 = vld [vmem:[#allocation2] sm:$0xff]
    %v278 = vld [vmem:[#allocation2 + $0x8] sm:$0xff]
    %v279 = vsel %vm271, %v275, %v277
    %v280 = vsel %vm272, %v276, %v278
    %vm281 = vcmask 523264
    %v283 = vsel %vm281, 0.0, 0
    %285 = vmatprep.subr.mxu0 0.0
    %286 = vmatpush1.msra.mxu0 0.0
    %287 = vmatprep.subr.mxu0 0.0
    %288 = vmatpush1.msra.mxu0 0.0
    %289 = vmatprep.subr.mxu0 0.0
    %290 = vmatpush1.msra.mxu0 0.0
    %291 = vmatprep.subr.mxu0 0.0
    %292 = vmatpush1.msra.mxu0 0.0
    %293 = vmatprep.subr.mxu0 0.0
    %294 = vmatpush1.msra.mxu0 0.0
    %295 = vmatprep.subr.mxu0 0.0
    %296 = vmatpush1.msra.mxu0 0.0
    %297 = vmatprep.subr.mxu0 0.0
    %298 = vmatpush1.msra.mxu0 0.0
    %299 = vmatprep.subr.mxu0 0.0
    %300 = vmatpush1.msra.mxu0 0.0
    %301 = vmatprep.subr.mxu0 %v243
    %302 = vmatpush1.msra.mxu0 %v242
    %303 = vmatprep.subr.mxu0 %v241
    %304 = vmatpush1.msra.mxu0 %v240
    %305 = vmatprep.subr.mxu0 %v239
    %306 = vmatpush1.msra.mxu0 %v238
    %307 = vmatprep.subr.mxu0 %v237
    %308 = vmatpush1.msra.mxu0 %v236
    %309 = vmatprep.subr.mxu0 %v235
    %310 = vmatpush1.msra.mxu0 %v234
    %311 = vmatprep.subr.mxu0 %v233
    %312 = vmatpush1.msra.mxu0 %v232
    %313 = vmatprep.subr.mxu0 %v231
    %314 = vmatpush1.msra.mxu0 %v230
    %315 = vmatprep.subr.mxu0 %v229
    %316 = vmatpush1.msra.mxu0 %v228
    %317 = vmatprep.subr.mxu0 0.0
    %318 = vmatpush2.msra.mxu0 0.0
    %319 = vmatprep.subr.mxu0 0.0
    %320 = vmatpush2.msra.mxu0 0.0
    %321 = vmatprep.subr.mxu0 0.0
    %322 = vmatpush2.msra.mxu0 0.0
    %323 = vmatprep.subr.mxu0 0.0
    %324 = vmatpush2.msra.mxu0 0.0
    %325 = vmatprep.subr.mxu0 0.0
    %326 = vmatpush2.msra.mxu0 0.0
    %327 = vmatprep.subr.mxu0 0.0
    %328 = vmatpush2.msra.mxu0 0.0
    %329 = vmatprep.subr.mxu0 0.0
    %330 = vmatpush2.msra.mxu0 0.0
    %331 = vmatprep.subr.mxu0 0.0
    %332 = vmatpush2.msra.mxu0 0.0
    %333 = vmatprep.subr.mxu0 0.0
    %334 = vmatpush2.msra.mxu0 0.0
    %335 = vmatprep.subr.mxu0 0.0
    %336 = vmatpush2.msra.mxu0 0.0
    %337 = vmatprep.subr.mxu0 0.0
    %338 = vmatpush2.msra.mxu0 0.0
    %339 = vmatprep.subr.mxu0 0.0
    %340 = vmatpush2.msra.mxu0 0.0
    %341 = vmatprep.subr.mxu0 0.0
    %342 = vmatpush2.msra.mxu0 0.0
    %343 = vmatprep.subr.mxu0 0.0
    %344 = vmatpush2.msra.mxu0 0.0
    %345 = vmatprep.subr.mxu0 0.0
    %346 = vmatpush2.msra.mxu0 0.0
    %347 = vmatprep.subr.mxu0 0.0
    %348 = vmatpush2.msra.mxu0 0.0
    %349 = vmatprep.mubr.f32.mxu0 0.0
    %350 = vmatmul.mubr.f32.gmra.mxu0 %v283
    %v351 = vpop.f32.mrf.mxu0
    %v352 = vadd.f32 0.0, %v351
    %v353 = vpop.f32.mrf.mxu0
    %v354 = vadd.f32 0.0, %v353
    %355 = vdwg.mxu0
    %v356 = vadd.f32 %v279, %v352
    %v357 = vadd.f32 %v280, %v354
    %v358 = vxor.u32 %v356, 2147483648
    %v359 = vxor.u32 %v357, 2147483648
    %v360 = vmul.f32 %v358, 1.442695
    %v361 = vpow.pop %v360
    %v362 = vmul.f32 %v359, 1.442695
    %v363 = vpow.pop %v362
    %v364 = vadd.f32 %v361, 1.0
    %v365 = vadd.f32 %v363, 1.0
    %v366 = vrcp.pop %v364
    %v367 = vmul.f32 1.0, %v366
    %v368 = vrcp.pop %v365
    %v369 = vmul.f32 1.0, %v368
    %v370 = vtanh.pop %v357
    %v371 = vmul.f32 %v367, 0.0
    %373 = vrot.lane.b32.xlu0 %v370, 64
    %v374 = vpop.permute.xlu0 %373
    %v376 = vmul.f32 %v367, %v374
    %378 = vrot.lane.b32.xlu0 %v376, 64
    %v379 = vpop.permute.xlu0 %378
    %v381 = vadd.f32 %v371, %v379
    %v382 = vtanh.pop %v381
    %384 = vrot.lane.b32.xlu0 %v382, 64
    %v385 = vpop.permute.xlu0 %384
    %v387 = vmul.f32 %v369, %v385
    %v388 = vsel %vm273, 7, 0
    %389 = vset.pattern.permute.xlu0 0
    %390 = vperm.xlu0 %389, %v227
    %v391 = vpop.permute.xlu0 %390
    %vm392 = vcmp.lt.s32.totalorder %v388, %v391
    %v393 = vsel %vm392, %v387, 0.0
    %395 = vrot.lane.b32.xlu0 %v381, 64
    %v396 = vpop.permute.xlu0 %395
    %v398 = vsel %vm392, %v396, 0.0
    %v399 = vsel %vm392, 1, 0
    %v400 = vcvt.s32.f32 %v399
    %v401 = vmul.f32 %v387, %v400
    %vm402 = vcmask 261120
    %403 = vst.msk [vmem:[%s5] sm:$0xff] %vm402, %v401
    %s404 = scalar_lea.vmem %s5, 56
    %vm405 = vcmask 523520
    %406 = vst.msk [vmem:[%s404] sm:$0xff] %vm405, %v401
    %s407 = scalar_lea.vmem [#allocation2], 96
    %v408 = vld [vmem:[%s407] sm:$0xff]
    %v409 = vld [vmem:[%s407 + $0x8] sm:$0xff]
    %s410 = scalar_lea.vmem [#allocation2], 16
    %v411 = vld [vmem:[%s410] sm:$0xff]
    %v412 = vld [vmem:[%s410 + $0x8] sm:$0xff]
    %v413 = vsel %vm271, %v408, %v411
    %v414 = vsel %vm272, %v409, %v412
    %v416 = vsel %vm281, %v393, 0
    %418 = vmatprep.subr.mxu0 0.0
    %419 = vmatpush1.msra.mxu0 0.0
    %420 = vmatprep.subr.mxu0 0.0
    %421 = vmatpush1.msra.mxu0 0.0
    %422 = vmatprep.subr.mxu0 0.0
    %423 = vmatpush1.msra.mxu0 0.0
    %424 = vmatprep.subr.mxu0 0.0
    %425 = vmatpush1.msra.mxu0 0.0
    %426 = vmatprep.subr.mxu0 0.0
    %427 = vmatpush1.msra.mxu0 0.0
    %428 = vmatprep.subr.mxu0 0.0
    %429 = vmatpush1.msra.mxu0 0.0
    %430 = vmatprep.subr.mxu0 0.0
    %431 = vmatpush1.msra.mxu0 0.0
    %432 = vmatprep.subr.mxu0 0.0
    %433 = vmatpush1.msra.mxu0 0.0
    %434 = vmatprep.subr.mxu0 %v243
    %435 = vmatpush1.msra.mxu0 %v242
    %436 = vmatprep.subr.mxu0 %v241
    %437 = vmatpush1.msra.mxu0 %v240
    %438 = vmatprep.subr.mxu0 %v239
    %439 = vmatpush1.msra.mxu0 %v238
    %440 = vmatprep.subr.mxu0 %v237
    %441 = vmatpush1.msra.mxu0 %v236
    %442 = vmatprep.subr.mxu0 %v235
    %443 = vmatpush1.msra.mxu0 %v234
    %444 = vmatprep.subr.mxu0 %v233
    %445 = vmatpush1.msra.mxu0 %v232
    %446 = vmatprep.subr.mxu0 %v231
    %447 = vmatpush1.msra.mxu0 %v230
    %448 = vmatprep.subr.mxu0 %v229
    %449 = vmatpush1.msra.mxu0 %v228
    %450 = vmatprep.subr.mxu0 0.0
    %451 = vmatpush2.msra.mxu0 0.0
    %452 = vmatprep.subr.mxu0 0.0
    %453 = vmatpush2.msra.mxu0 0.0
    %454 = vmatprep.subr.mxu0 0.0
    %455 = vmatpush2.msra.mxu0 0.0
    %456 = vmatprep.subr.mxu0 0.0
    %457 = vmatpush2.msra.mxu0 0.0
    %458 = vmatprep.subr.mxu0 0.0
    %459 = vmatpush2.msra.mxu0 0.0
    %460 = vmatprep.subr.mxu0 0.0
    %461 = vmatpush2.msra.mxu0 0.0
    %462 = vmatprep.subr.mxu0 0.0
    %463 = vmatpush2.msra.mxu0 0.0
    %464 = vmatprep.subr.mxu0 0.0
    %465 = vmatpush2.msra.mxu0 0.0
    %466 = vmatprep.subr.mxu0 0.0
    %467 = vmatpush2.msra.mxu0 0.0
    %468 = vmatprep.subr.mxu0 0.0
    %469 = vmatpush2.msra.mxu0 0.0
    %470 = vmatprep.subr.mxu0 0.0
    %471 = vmatpush2.msra.mxu0 0.0
    %472 = vmatprep.subr.mxu0 0.0
    %473 = vmatpush2.msra.mxu0 0.0
    %474 = vmatprep.subr.mxu0 0.0
    %475 = vmatpush2.msra.mxu0 0.0
    %476 = vmatprep.subr.mxu0 0.0
    %477 = vmatpush2.msra.mxu0 0.0
    %478 = vmatprep.subr.mxu0 0.0
    %479 = vmatpush2.msra.mxu0 0.0
    %480 = vmatprep.subr.mxu0 0.0
    %481 = vmatpush2.msra.mxu0 0.0
    %482 = vmatprep.mubr.f32.mxu0 0.0
    %483 = vmatmul.mubr.f32.gmra.mxu0 %v416
    %v484 = vpop.f32.mrf.mxu0
    %v485 = vadd.f32 0.0, %v484
    %v486 = vpop.f32.mrf.mxu0
    %v487 = vadd.f32 0.0, %v486
    %488 = vdwg.mxu0
    %v489 = vadd.f32 %v413, %v485
    %v490 = vadd.f32 %v414, %v487
    %v491 = vxor.u32 %v489, 2147483648
    %v492 = vxor.u32 %v490, 2147483648
    %v493 = vmul.f32 %v491, 1.442695
    %v494 = vpow.pop %v493
    %v495 = vmul.f32 %v492, 1.442695
    %v496 = vpow.pop %v495
    %v497 = vadd.f32 %v494, 1.0
    %v498 = vadd.f32 %v496, 1.0
    %v499 = vrcp.pop %v497
    %v500 = vmul.f32 1.0, %v499
    %v501 = vrcp.pop %v498
    %v502 = vmul.f32 1.0, %v501
    %v503 = vtanh.pop %v490
    %505 = vrot.lane.b32.xlu0 %v398, 64
    %v506 = vpop.permute.xlu0 %505
    %v508 = vmul.f32 %v500, %v506
    %510 = vrot.lane.b32.xlu0 %v503, 64
    %v511 = vpop.permute.xlu0 %510
    %v513 = vmul.f32 %v500, %v511
    %515 = vrot.lane.b32.xlu0 %v513, 64
    %v516 = vpop.permute.xlu0 %515
    %v518 = vadd.f32 %v508, %v516
    %v519 = vtanh.pop %v518
    %521 = vrot.lane.b32.xlu0 %v519, 64
    %v522 = vpop.permute.xlu0 %521
    %v524 = vmul.f32 %v502, %v522
    %v525 = vsel %vm273, 6, 1
    %vm526 = vcmp.lt.s32.totalorder %v525, %v391
    %v527 = vsel %vm526, %v524, %v393
    %529 = vrot.lane.b32.xlu0 %v518, 64
    %v530 = vpop.permute.xlu0 %529
    %v532 = vsel %vm526, %v530, %v398
    %v533 = vsel %vm526, 1, 0
    %v534 = vcvt.s32.f32 %v533
    %v535 = vmul.f32 %v524, %v534
    %s536 = scalar_lea.vmem %s5, 8
    %537 = vst.msk [vmem:[%s536] sm:$0xff] %vm402, %v535
    %s538 = scalar_lea.vmem %s5, 48
    %539 = vst.msk [vmem:[%s538] sm:$0xff] %vm405, %v535
    %s540 = scalar_lea.vmem [#allocation2], 80
    %v541 = vld [vmem:[%s540] sm:$0xff]
    %v542 = vld [vmem:[%s540 + $0x8] sm:$0xff]
    %s543 = scalar_lea.vmem [#allocation2], 32
    %v544 = vld [vmem:[%s543] sm:$0xff]
    %v545 = vld [vmem:[%s543 + $0x8] sm:$0xff]
    %v546 = vsel %vm271, %v541, %v544
    %v547 = vsel %vm272, %v542, %v545
    %v549 = vsel %vm281, %v527, 0
    %551 = vmatprep.subr.mxu0 0.0
    %552 = vmatpush1.msra.mxu0 0.0
    %553 = vmatprep.subr.mxu0 0.0
    %554 = vmatpush1.msra.mxu0 0.0
    %555 = vmatprep.subr.mxu0 0.0
    %556 = vmatpush1.msra.mxu0 0.0
    %557 = vmatprep.subr.mxu0 0.0
    %558 = vmatpush1.msra.mxu0 0.0
    %559 = vmatprep.subr.mxu0 0.0
    %560 = vmatpush1.msra.mxu0 0.0
    %561 = vmatprep.subr.mxu0 0.0
    %562 = vmatpush1.msra.mxu0 0.0
    %563 = vmatprep.subr.mxu0 0.0
    %564 = vmatpush1.msra.mxu0 0.0
    %565 = vmatprep.subr.mxu0 0.0
    %566 = vmatpush1.msra.mxu0 0.0
    %567 = vmatprep.subr.mxu0 %v243
    %568 = vmatpush1.msra.mxu0 %v242
    %569 = vmatprep.subr.mxu0 %v241
    %570 = vmatpush1.msra.mxu0 %v240
    %571 = vmatprep.subr.mxu0 %v239
    %572 = vmatpush1.msra.mxu0 %v238
    %573 = vmatprep.subr.mxu0 %v237
    %574 = vmatpush1.msra.mxu0 %v236
    %575 = vmatprep.subr.mxu0 %v235
    %576 = vmatpush1.msra.mxu0 %v234
    %577 = vmatprep.subr.mxu0 %v233
    %578 = vmatpush1.msra.mxu0 %v232
    %579 = vmatprep.subr.mxu0 %v231
    %580 = vmatpush1.msra.mxu0 %v230
    %581 = vmatprep.subr.mxu0 %v229
    %582 = vmatpush1.msra.mxu0 %v228
    %583 = vmatprep.subr.mxu0 0.0
    %584 = vmatpush2.msra.mxu0 0.0
    %585 = vmatprep.subr.mxu0 0.0
    %586 = vmatpush2.msra.mxu0 0.0
    %587 = vmatprep.subr.mxu0 0.0
    %588 = vmatpush2.msra.mxu0 0.0
    %589 = vmatprep.subr.mxu0 0.0
    %590 = vmatpush2.msra.mxu0 0.0
    %591 = vmatprep.subr.mxu0 0.0
    %592 = vmatpush2.msra.mxu0 0.0
    %593 = vmatprep.subr.mxu0 0.0
    %594 = vmatpush2.msra.mxu0 0.0
    %595 = vmatprep.subr.mxu0 0.0
    %596 = vmatpush2.msra.mxu0 0.0
    %597 = vmatprep.subr.mxu0 0.0
    %598 = vmatpush2.msra.mxu0 0.0
    %599 = vmatprep.subr.mxu0 0.0
    %600 = vmatpush2.msra.mxu0 0.0
    %601 = vmatprep.subr.mxu0 0.0
    %602 = vmatpush2.msra.mxu0 0.0
    %603 = vmatprep.subr.mxu0 0.0
    %604 = vmatpush2.msra.mxu0 0.0
    %605 = vmatprep.subr.mxu0 0.0
    %606 = vmatpush2.msra.mxu0 0.0
    %607 = vmatprep.subr.mxu0 0.0
    %608 = vmatpush2.msra.mxu0 0.0
    %609 = vmatprep.subr.mxu0 0.0
    %610 = vmatpush2.msra.mxu0 0.0
    %611 = vmatprep.subr.mxu0 0.0
    %612 = vmatpush2.msra.mxu0 0.0
    %613 = vmatprep.subr.mxu0 0.0
    %614 = vmatpush2.msra.mxu0 0.0
    %615 = vmatprep.mubr.f32.mxu0 0.0
    %616 = vmatmul.mubr.f32.gmra.mxu0 %v549
    %v617 = vpop.f32.mrf.mxu0
    %v618 = vadd.f32 0.0, %v617
    %v619 = vpop.f32.mrf.mxu0
    %v620 = vadd.f32 0.0, %v619
    %621 = vdwg.mxu0
    %v622 = vadd.f32 %v546, %v618
    %v623 = vadd.f32 %v547, %v620
    %v624 = vxor.u32 %v622, 2147483648
    %v625 = vxor.u32 %v623, 2147483648
    %v626 = vmul.f32 %v624, 1.442695
    %v627 = vpow.pop %v626
    %v628 = vmul.f32 %v625, 1.442695
    %v629 = vpow.pop %v628
    %v630 = vadd.f32 %v627, 1.0
    %v631 = vadd.f32 %v629, 1.0
    %v632 = vrcp.pop %v630
    %v633 = vmul.f32 1.0, %v632
    %v634 = vrcp.pop %v631
    %v635 = vmul.f32 1.0, %v634
    %v636 = vtanh.pop %v623
    %638 = vrot.lane.b32.xlu0 %v532, 64
    %v639 = vpop.permute.xlu0 %638
    %v641 = vmul.f32 %v633, %v639
    %643 = vrot.lane.b32.xlu0 %v636, 64
    %v644 = vpop.permute.xlu0 %643
    %v646 = vmul.f32 %v633, %v644
    %648 = vrot.lane.b32.xlu0 %v646, 64
    %v649 = vpop.permute.xlu0 %648
    %v651 = vadd.f32 %v641, %v649
    %v652 = vtanh.pop %v651
    %654 = vrot.lane.b32.xlu0 %v652, 64
    %v655 = vpop.permute.xlu0 %654
    %v657 = vmul.f32 %v635, %v655
    %v658 = vsel %vm273, 5, 2
    %vm659 = vcmp.lt.s32.totalorder %v658, %v391
    %v660 = vsel %vm659, %v657, %v527
    %662 = vrot.lane.b32.xlu0 %v651, 64
    %v663 = vpop.permute.xlu0 %662
    %v665 = vsel %vm659, %v663, %v532
    %v666 = vsel %vm659, 1, 0
    %v667 = vcvt.s32.f32 %v666
    %v668 = vmul.f32 %v657, %v667
    %s669 = scalar_lea.vmem %s5, 16
    %670 = vst.msk [vmem:[%s669] sm:$0xff] %vm402, %v668
    %s671 = scalar_lea.vmem %s5, 40
    %672 = vst.msk [vmem:[%s671] sm:$0xff] %vm405, %v668
    %s673 = scalar_lea.vmem [#allocation2], 64
    %v674 = vld [vmem:[%s673] sm:$0xff]
    %v675 = vld [vmem:[%s673 + $0x8] sm:$0xff]
    %s676 = scalar_lea.vmem [#allocation2], 48
    %v677 = vld [vmem:[%s676] sm:$0xff]
    %v678 = vld [vmem:[%s676 + $0x8] sm:$0xff]
    %v679 = vsel %vm271, %v674, %v677
    %v680 = vsel %vm272, %v675, %v678
    %v682 = vsel %vm281, %v660, 0
    %684 = vmatprep.subr.mxu0 0.0
    %685 = vmatpush1.msra.mxu0 0.0
    %686 = vmatprep.subr.mxu0 0.0
    %687 = vmatpush1.msra.mxu0 0.0
    %688 = vmatprep.subr.mxu0 0.0
    %689 = vmatpush1.msra.mxu0 0.0
    %690 = vmatprep.subr.mxu0 0.0
    %691 = vmatpush1.msra.mxu0 0.0
    %692 = vmatprep.subr.mxu0 0.0
    %693 = vmatpush1.msra.mxu0 0.0
    %694 = vmatprep.subr.mxu0 0.0
    %695 = vmatpush1.msra.mxu0 0.0
    %696 = vmatprep.subr.mxu0 0.0
    %697 = vmatpush1.msra.mxu0 0.0
    %698 = vmatprep.subr.mxu0 0.0
    %699 = vmatpush1.msra.mxu0 0.0
    %700 = vmatprep.subr.mxu0 %v243
    %701 = vmatpush1.msra.mxu0 %v242
    %702 = vmatprep.subr.mxu0 %v241
    %703 = vmatpush1.msra.mxu0 %v240
    %704 = vmatprep.subr.mxu0 %v239
    %705 = vmatpush1.msra.mxu0 %v238
    %706 = vmatprep.subr.mxu0 %v237
    %707 = vmatpush1.msra.mxu0 %v236
    %708 = vmatprep.subr.mxu0 %v235
    %709 = vmatpush1.msra.mxu0 %v234
    %710 = vmatprep.subr.mxu0 %v233
    %711 = vmatpush1.msra.mxu0 %v232
    %712 = vmatprep.subr.mxu0 %v231
    %713 = vmatpush1.msra.mxu0 %v230
    %714 = vmatprep.subr.mxu0 %v229
    %715 = vmatpush1.msra.mxu0 %v228
    %716 = vmatprep.subr.mxu0 0.0
    %717 = vmatpush2.msra.mxu0 0.0
    %718 = vmatprep.subr.mxu0 0.0
    %719 = vmatpush2.msra.mxu0 0.0
    %720 = vmatprep.subr.mxu0 0.0
    %721 = vmatpush2.msra.mxu0 0.0
    %722 = vmatprep.subr.mxu0 0.0
    %723 = vmatpush2.msra.mxu0 0.0
    %724 = vmatprep.subr.mxu0 0.0
    %725 = vmatpush2.msra.mxu0 0.0
    %726 = vmatprep.subr.mxu0 0.0
    %727 = vmatpush2.msra.mxu0 0.0
    %728 = vmatprep.subr.mxu0 0.0
    %729 = vmatpush2.msra.mxu0 0.0
    %730 = vmatprep.subr.mxu0 0.0
    %731 = vmatpush2.msra.mxu0 0.0
    %732 = vmatprep.subr.mxu0 0.0
    %733 = vmatpush2.msra.mxu0 0.0
    %734 = vmatprep.subr.mxu0 0.0
    %735 = vmatpush2.msra.mxu0 0.0
    %736 = vmatprep.subr.mxu0 0.0
    %737 = vmatpush2.msra.mxu0 0.0
    %738 = vmatprep.subr.mxu0 0.0
    %739 = vmatpush2.msra.mxu0 0.0
    %740 = vmatprep.subr.mxu0 0.0
    %741 = vmatpush2.msra.mxu0 0.0
    %742 = vmatprep.subr.mxu0 0.0
    %743 = vmatpush2.msra.mxu0 0.0
    %744 = vmatprep.subr.mxu0 0.0
    %745 = vmatpush2.msra.mxu0 0.0
    %746 = vmatprep.subr.mxu0 0.0
    %747 = vmatpush2.msra.mxu0 0.0
    %748 = vmatprep.mubr.f32.mxu0 0.0
    %749 = vmatmul.mubr.f32.gmra.mxu0 %v682
    %v750 = vpop.f32.mrf.mxu0
    %v751 = vadd.f32 0.0, %v750
    %v752 = vpop.f32.mrf.mxu0
    %v753 = vadd.f32 0.0, %v752
    %754 = vdwg.mxu0
    %v755 = vadd.f32 %v679, %v751
    %v756 = vadd.f32 %v680, %v753
    %v757 = vxor.u32 %v755, 2147483648
    %v758 = vxor.u32 %v756, 2147483648
    %v759 = vmul.f32 %v757, 1.442695
    %v760 = vpow.pop %v759
    %v761 = vmul.f32 %v758, 1.442695
    %v762 = vpow.pop %v761
    %v763 = vadd.f32 %v760, 1.0
    %v764 = vadd.f32 %v762, 1.0
    %v765 = vrcp.pop %v763
    %v766 = vmul.f32 1.0, %v765
    %v767 = vrcp.pop %v764
    %v768 = vmul.f32 1.0, %v767
    %v769 = vtanh.pop %v756
    %771 = vrot.lane.b32.xlu0 %v665, 64
    %v772 = vpop.permute.xlu0 %771
    %v774 = vmul.f32 %v766, %v772
    %776 = vrot.lane.b32.xlu0 %v769, 64
    %v777 = vpop.permute.xlu0 %776
    %v779 = vmul.f32 %v766, %v777
    %781 = vrot.lane.b32.xlu0 %v779, 64
    %v782 = vpop.permute.xlu0 %781
    %v784 = vadd.f32 %v774, %v782
    %v785 = vtanh.pop %v784
    %787 = vrot.lane.b32.xlu0 %v785, 64
    %v788 = vpop.permute.xlu0 %787
    %v790 = vmul.f32 %v768, %v788
    %v791 = vsel %vm273, 4, 3
    %vm792 = vcmp.lt.s32.totalorder %v791, %v391
    %v793 = vsel %vm792, %v790, %v660
    %795 = vrot.lane.b32.xlu0 %v784, 64
    %v796 = vpop.permute.xlu0 %795
    %v798 = vsel %vm792, %v796, %v665
    %v799 = vsel %vm792, 1, 0
    %v800 = vcvt.s32.f32 %v799
    %v801 = vmul.f32 %v790, %v800
    %s802 = scalar_lea.vmem %s5, 24
    %803 = vst.msk [vmem:[%s802] sm:$0xff] %vm402, %v801
    %s804 = scalar_lea.vmem %s5, 32
    %805 = vst.msk [vmem:[%s804] sm:$0xff] %vm405, %v801
    %v806 = vld [vmem:[%s676] sm:$0xff]
    %v807 = vld [vmem:[%s676 + $0x8] sm:$0xff]
    %v808 = vld [vmem:[%s673] sm:$0xff]
    %v809 = vld [vmem:[%s673 + $0x8] sm:$0xff]
    %v810 = vsel %vm271, %v806, %v808
    %v811 = vsel %vm272, %v807, %v809
    %v813 = vsel %vm281, %v793, 0
    %815 = vmatprep.subr.mxu0 0.0
    %816 = vmatpush1.msra.mxu0 0.0
    %817 = vmatprep.subr.mxu0 0.0
    %818 = vmatpush1.msra.mxu0 0.0
    %819 = vmatprep.subr.mxu0 0.0
    %820 = vmatpush1.msra.mxu0 0.0
    %821 = vmatprep.subr.mxu0 0.0
    %822 = vmatpush1.msra.mxu0 0.0
    %823 = vmatprep.subr.mxu0 0.0
    %824 = vmatpush1.msra.mxu0 0.0
    %825 = vmatprep.subr.mxu0 0.0
    %826 = vmatpush1.msra.mxu0 0.0
    %827 = vmatprep.subr.mxu0 0.0
    %828 = vmatpush1.msra.mxu0 0.0
    %829 = vmatprep.subr.mxu0 0.0
    %830 = vmatpush1.msra.mxu0 0.0
    %831 = vmatprep.subr.mxu0 %v243
    %832 = vmatpush1.msra.mxu0 %v242
    %833 = vmatprep.subr.mxu0 %v241
    %834 = vmatpush1.msra.mxu0 %v240
    %835 = vmatprep.subr.mxu0 %v239
    %836 = vmatpush1.msra.mxu0 %v238
    %837 = vmatprep.subr.mxu0 %v237
    %838 = vmatpush1.msra.mxu0 %v236
    %839 = vmatprep.subr.mxu0 %v235
    %840 = vmatpush1.msra.mxu0 %v234
    %841 = vmatprep.subr.mxu0 %v233
    %842 = vmatpush1.msra.mxu0 %v232
    %843 = vmatprep.subr.mxu0 %v231
    %844 = vmatpush1.msra.mxu0 %v230
    %845 = vmatprep.subr.mxu0 %v229
    %846 = vmatpush1.msra.mxu0 %v228
    %847 = vmatprep.subr.mxu0 0.0
    %848 = vmatpush2.msra.mxu0 0.0
    %849 = vmatprep.subr.mxu0 0.0
    %850 = vmatpush2.msra.mxu0 0.0
    %851 = vmatprep.subr.mxu0 0.0
    %852 = vmatpush2.msra.mxu0 0.0
    %853 = vmatprep.subr.mxu0 0.0
    %854 = vmatpush2.msra.mxu0 0.0
    %855 = vmatprep.subr.mxu0 0.0
    %856 = vmatpush2.msra.mxu0 0.0
    %857 = vmatprep.subr.mxu0 0.0
    %858 = vmatpush2.msra.mxu0 0.0
    %859 = vmatprep.subr.mxu0 0.0
    %860 = vmatpush2.msra.mxu0 0.0
    %861 = vmatprep.subr.mxu0 0.0
    %862 = vmatpush2.msra.mxu0 0.0
    %863 = vmatprep.subr.mxu0 0.0
    %864 = vmatpush2.msra.mxu0 0.0
    %865 = vmatprep.subr.mxu0 0.0
    %866 = vmatpush2.msra.mxu0 0.0
    %867 = vmatprep.subr.mxu0 0.0
    %868 = vmatpush2.msra.mxu0 0.0
    %869 = vmatprep.subr.mxu0 0.0
    %870 = vmatpush2.msra.mxu0 0.0
    %871 = vmatprep.subr.mxu0 0.0
    %872 = vmatpush2.msra.mxu0 0.0
    %873 = vmatprep.subr.mxu0 0.0
    %874 = vmatpush2.msra.mxu0 0.0
    %875 = vmatprep.subr.mxu0 0.0
    %876 = vmatpush2.msra.mxu0 0.0
    %877 = vmatprep.subr.mxu0 0.0
    %878 = vmatpush2.msra.mxu0 0.0
    %879 = vmatprep.mubr.f32.mxu0 0.0
    %880 = vmatmul.mubr.f32.gmra.mxu0 %v813
    %v881 = vpop.f32.mrf.mxu0
    %v882 = vadd.f32 0.0, %v881
    %v883 = vpop.f32.mrf.mxu0
    %v884 = vadd.f32 0.0, %v883
    %885 = vdwg.mxu0
    %v886 = vadd.f32 %v810, %v882
    %v887 = vadd.f32 %v811, %v884
    %v888 = vxor.u32 %v886, 2147483648
    %v889 = vxor.u32 %v887, 2147483648
    %v890 = vmul.f32 %v888, 1.442695
    %v891 = vpow.pop %v890
    %v892 = vmul.f32 %v889, 1.442695
    %v893 = vpow.pop %v892
    %v894 = vadd.f32 %v891, 1.0
    %v895 = vadd.f32 %v893, 1.0
    %v896 = vrcp.pop %v894
    %v897 = vmul.f32 1.0, %v896
    %v898 = vrcp.pop %v895
    %v899 = vmul.f32 1.0, %v898
    %v900 = vtanh.pop %v887
    %902 = vrot.lane.b32.xlu0 %v798, 64
    %v903 = vpop.permute.xlu0 %902
    %v905 = vmul.f32 %v897, %v903
    %907 = vrot.lane.b32.xlu0 %v900, 64
    %v908 = vpop.permute.xlu0 %907
    %v910 = vmul.f32 %v897, %v908
    %912 = vrot.lane.b32.xlu0 %v910, 64
    %v913 = vpop.permute.xlu0 %912
    %v915 = vadd.f32 %v905, %v913
    %v916 = vtanh.pop %v915
    %918 = vrot.lane.b32.xlu0 %v916, 64
    %v919 = vpop.permute.xlu0 %918
    %v921 = vmul.f32 %v899, %v919
    %v922 = vsel %vm273, 3, 4
    %vm923 = vcmp.lt.s32.totalorder %v922, %v391
    %v924 = vsel %vm923, %v921, %v793
    %926 = vrot.lane.b32.xlu0 %v915, 64
    %v927 = vpop.permute.xlu0 %926
    %v929 = vsel %vm923, %v927, %v798
    %v930 = vsel %vm923, 1, 0
    %v931 = vcvt.s32.f32 %v930
    %v932 = vmul.f32 %v921, %v931
    %933 = vst.msk [vmem:[%s804] sm:$0xff] %vm402, %v932
    %934 = vst.msk [vmem:[%s802] sm:$0xff] %vm405, %v932
    %v935 = vld [vmem:[%s543] sm:$0xff]
    %v936 = vld [vmem:[%s543 + $0x8] sm:$0xff]
    %v937 = vld [vmem:[%s540] sm:$0xff]
    %v938 = vld [vmem:[%s540 + $0x8] sm:$0xff]
    %v939 = vsel %vm271, %v935, %v937
    %v940 = vsel %vm272, %v936, %v938
    %v942 = vsel %vm281, %v924, 0
    %944 = vmatprep.subr.mxu0 0.0
    %945 = vmatpush1.msra.mxu0 0.0
    %946 = vmatprep.subr.mxu0 0.0
    %947 = vmatpush1.msra.mxu0 0.0
    %948 = vmatprep.subr.mxu0 0.0
    %949 = vmatpush1.msra.mxu0 0.0
    %950 = vmatprep.subr.mxu0 0.0
    %951 = vmatpush1.msra.mxu0 0.0
    %952 = vmatprep.subr.mxu0 0.0
    %953 = vmatpush1.msra.mxu0 0.0
    %954 = vmatprep.subr.mxu0 0.0
    %955 = vmatpush1.msra.mxu0 0.0
    %956 = vmatprep.subr.mxu0 0.0
    %957 = vmatpush1.msra.mxu0 0.0
    %958 = vmatprep.subr.mxu0 0.0
    %959 = vmatpush1.msra.mxu0 0.0
    %960 = vmatprep.subr.mxu0 %v243
    %961 = vmatpush1.msra.mxu0 %v242
    %962 = vmatprep.subr.mxu0 %v241
    %963 = vmatpush1.msra.mxu0 %v240
    %964 = vmatprep.subr.mxu0 %v239
    %965 = vmatpush1.msra.mxu0 %v238
    %966 = vmatprep.subr.mxu0 %v237
    %967 = vmatpush1.msra.mxu0 %v236
    %968 = vmatprep.subr.mxu0 %v235
    %969 = vmatpush1.msra.mxu0 %v234
    %970 = vmatprep.subr.mxu0 %v233
    %971 = vmatpush1.msra.mxu0 %v232
    %972 = vmatprep.subr.mxu0 %v231
    %973 = vmatpush1.msra.mxu0 %v230
    %974 = vmatprep.subr.mxu0 %v229
    %975 = vmatpush1.msra.mxu0 %v228
    %976 = vmatprep.subr.mxu0 0.0
    %977 = vmatpush2.msra.mxu0 0.0
    %978 = vmatprep.subr.mxu0 0.0
    %979 = vmatpush2.msra.mxu0 0.0
    %980 = vmatprep.subr.mxu0 0.0
    %981 = vmatpush2.msra.mxu0 0.0
    %982 = vmatprep.subr.mxu0 0.0
    %983 = vmatpush2.msra.mxu0 0.0
    %984 = vmatprep.subr.mxu0 0.0
    %985 = vmatpush2.msra.mxu0 0.0
    %986 = vmatprep.subr.mxu0 0.0
    %987 = vmatpush2.msra.mxu0 0.0
    %988 = vmatprep.subr.mxu0 0.0
    %989 = vmatpush2.msra.mxu0 0.0
    %990 = vmatprep.subr.mxu0 0.0
    %991 = vmatpush2.msra.mxu0 0.0
    %992 = vmatprep.subr.mxu0 0.0
    %993 = vmatpush2.msra.mxu0 0.0
    %994 = vmatprep.subr.mxu0 0.0
    %995 = vmatpush2.msra.mxu0 0.0
    %996 = vmatprep.subr.mxu0 0.0
    %997 = vmatpush2.msra.mxu0 0.0
    %998 = vmatprep.subr.mxu0 0.0
    %999 = vmatpush2.msra.mxu0 0.0
    %1000 = vmatprep.subr.mxu0 0.0
    %1001 = vmatpush2.msra.mxu0 0.0
    %1002 = vmatprep.subr.mxu0 0.0
    %1003 = vmatpush2.msra.mxu0 0.0
    %1004 = vmatprep.subr.mxu0 0.0
    %1005 = vmatpush2.msra.mxu0 0.0
    %1006 = vmatprep.subr.mxu0 0.0
    %1007 = vmatpush2.msra.mxu0 0.0
    %1008 = vmatprep.mubr.f32.mxu0 0.0
    %1009 = vmatmul.mubr.f32.gmra.mxu0 %v942
    %v1010 = vpop.f32.mrf.mxu0
    %v1011 = vadd.f32 0.0, %v1010
    %v1012 = vpop.f32.mrf.mxu0
    %v1013 = vadd.f32 0.0, %v1012
    %1014 = vdwg.mxu0
    %v1015 = vadd.f32 %v939, %v1011
    %v1016 = vadd.f32 %v940, %v1013
    %v1017 = vxor.u32 %v1015, 2147483648
    %v1018 = vxor.u32 %v1016, 2147483648
    %v1019 = vmul.f32 %v1017, 1.442695
    %v1020 = vpow.pop %v1019
    %v1021 = vmul.f32 %v1018, 1.442695
    %v1022 = vpow.pop %v1021
    %v1023 = vadd.f32 %v1020, 1.0
    %v1024 = vadd.f32 %v1022, 1.0
    %v1025 = vrcp.pop %v1023
    %v1026 = vmul.f32 1.0, %v1025
    %v1027 = vrcp.pop %v1024
    %v1028 = vmul.f32 1.0, %v1027
    %v1029 = vtanh.pop %v1016
    %1031 = vrot.lane.b32.xlu0 %v929, 64
    %v1032 = vpop.permute.xlu0 %1031
    %v1034 = vmul.f32 %v1026, %v1032
    %1036 = vrot.lane.b32.xlu0 %v1029, 64
    %v1037 = vpop.permute.xlu0 %1036
    %v1039 = vmul.f32 %v1026, %v1037
    %1041 = vrot.lane.b32.xlu0 %v1039, 64
    %v1042 = vpop.permute.xlu0 %1041
    %v1044 = vadd.f32 %v1034, %v1042
    %v1045 = vtanh.pop %v1044
    %1047 = vrot.lane.b32.xlu0 %v1045, 64
    %v1048 = vpop.permute.xlu0 %1047
    %v1050 = vmul.f32 %v1028, %v1048
    %v1051 = vsel %vm273, 2, 5
    %vm1052 = vcmp.lt.s32.totalorder %v1051, %v391
    %v1053 = vsel %vm1052, %v1050, %v924
    %1055 = vrot.lane.b32.xlu0 %v1044, 64
    %v1056 = vpop.permute.xlu0 %1055
    %v1058 = vsel %vm1052, %v1056, %v929
    %v1059 = vsel %vm1052, 1, 0
    %v1060 = vcvt.s32.f32 %v1059
    %v1061 = vmul.f32 %v1050, %v1060
    %1062 = vst.msk [vmem:[%s671] sm:$0xff] %vm402, %v1061
    %1063 = vst.msk [vmem:[%s669] sm:$0xff] %vm405, %v1061
    %v1064 = vld [vmem:[%s410] sm:$0xff]
    %v1065 = vld [vmem:[%s410 + $0x8] sm:$0xff]
    %v1066 = vld [vmem:[%s407] sm:$0xff]
    %v1067 = vld [vmem:[%s407 + $0x8] sm:$0xff]
    %v1068 = vsel %vm271, %v1064, %v1066
    %v1069 = vsel %vm272, %v1065, %v1067
    %v1071 = vsel %vm281, %v1053, 0
    %1073 = vmatprep.subr.mxu0 0.0
    %1074 = vmatpush1.msra.mxu0 0.0
    %1075 = vmatprep.subr.mxu0 0.0
    %1076 = vmatpush1.msra.mxu0 0.0
    %1077 = vmatprep.subr.mxu0 0.0
    %1078 = vmatpush1.msra.mxu0 0.0
    %1079 = vmatprep.subr.mxu0 0.0
    %1080 = vmatpush1.msra.mxu0 0.0
    %1081 = vmatprep.subr.mxu0 0.0
    %1082 = vmatpush1.msra.mxu0 0.0
    %1083 = vmatprep.subr.mxu0 0.0
    %1084 = vmatpush1.msra.mxu0 0.0
    %1085 = vmatprep.subr.mxu0 0.0
    %1086 = vmatpush1.msra.mxu0 0.0
    %1087 = vmatprep.subr.mxu0 0.0
    %1088 = vmatpush1.msra.mxu0 0.0
    %1089 = vmatprep.subr.mxu0 %v243
    %1090 = vmatpush1.msra.mxu0 %v242
    %1091 = vmatprep.subr.mxu0 %v241
    %1092 = vmatpush1.msra.mxu0 %v240
    %1093 = vmatprep.subr.mxu0 %v239
    %1094 = vmatpush1.msra.mxu0 %v238
    %1095 = vmatprep.subr.mxu0 %v237
    %1096 = vmatpush1.msra.mxu0 %v236
    %1097 = vmatprep.subr.mxu0 %v235
    %1098 = vmatpush1.msra.mxu0 %v234
    %1099 = vmatprep.subr.mxu0 %v233
    %1100 = vmatpush1.msra.mxu0 %v232
    %1101 = vmatprep.subr.mxu0 %v231
    %1102 = vmatpush1.msra.mxu0 %v230
    %1103 = vmatprep.subr.mxu0 %v229
    %1104 = vmatpush1.msra.mxu0 %v228
    %1105 = vmatprep.subr.mxu0 0.0
    %1106 = vmatpush2.msra.mxu0 0.0
    %1107 = vmatprep.subr.mxu0 0.0
    %1108 = vmatpush2.msra.mxu0 0.0
    %1109 = vmatprep.subr.mxu0 0.0
    %1110 = vmatpush2.msra.mxu0 0.0
    %1111 = vmatprep.subr.mxu0 0.0
    %1112 = vmatpush2.msra.mxu0 0.0
    %1113 = vmatprep.subr.mxu0 0.0
    %1114 = vmatpush2.msra.mxu0 0.0
    %1115 = vmatprep.subr.mxu0 0.0
    %1116 = vmatpush2.msra.mxu0 0.0
    %1117 = vmatprep.subr.mxu0 0.0
    %1118 = vmatpush2.msra.mxu0 0.0
    %1119 = vmatprep.subr.mxu0 0.0
    %1120 = vmatpush2.msra.mxu0 0.0
    %1121 = vmatprep.subr.mxu0 0.0
    %1122 = vmatpush2.msra.mxu0 0.0
    %1123 = vmatprep.subr.mxu0 0.0
    %1124 = vmatpush2.msra.mxu0 0.0
    %1125 = vmatprep.subr.mxu0 0.0
    %1126 = vmatpush2.msra.mxu0 0.0
    %1127 = vmatprep.subr.mxu0 0.0
    %1128 = vmatpush2.msra.mxu0 0.0
    %1129 = vmatprep.subr.mxu0 0.0
    %1130 = vmatpush2.msra.mxu0 0.0
    %1131 = vmatprep.subr.mxu0 0.0
    %1132 = vmatpush2.msra.mxu0 0.0
    %1133 = vmatprep.subr.mxu0 0.0
    %1134 = vmatpush2.msra.mxu0 0.0
    %1135 = vmatprep.subr.mxu0 0.0
    %1136 = vmatpush2.msra.mxu0 0.0
    %1137 = vmatprep.mubr.f32.mxu0 0.0
    %1138 = vmatmul.mubr.f32.gmra.mxu0 %v1071
    %v1139 = vpop.f32.mrf.mxu0
    %v1140 = vadd.f32 0.0, %v1139
    %v1141 = vpop.f32.mrf.mxu0
    %v1142 = vadd.f32 0.0, %v1141
    %1143 = vdwg.mxu0
    %v1144 = vadd.f32 %v1068, %v1140
    %v1145 = vadd.f32 %v1069, %v1142
    %v1146 = vxor.u32 %v1144, 2147483648
    %v1147 = vxor.u32 %v1145, 2147483648
    %v1148 = vmul.f32 %v1146, 1.442695
    %v1149 = vpow.pop %v1148
    %v1150 = vmul.f32 %v1147, 1.442695
    %v1151 = vpow.pop %v1150
    %v1152 = vadd.f32 %v1149, 1.0
    %v1153 = vadd.f32 %v1151, 1.0
    %v1154 = vrcp.pop %v1152
    %v1155 = vmul.f32 1.0, %v1154
    %v1156 = vrcp.pop %v1153
    %v1157 = vmul.f32 1.0, %v1156
    %v1158 = vtanh.pop %v1145
    %1160 = vrot.lane.b32.xlu0 %v1058, 64
    %v1161 = vpop.permute.xlu0 %1160
    %v1163 = vmul.f32 %v1155, %v1161
    %1165 = vrot.lane.b32.xlu0 %v1158, 64
    %v1166 = vpop.permute.xlu0 %1165
    %v1168 = vmul.f32 %v1155, %v1166
    %1170 = vrot.lane.b32.xlu0 %v1168, 64
    %v1171 = vpop.permute.xlu0 %1170
    %v1173 = vadd.f32 %v1163, %v1171
    %v1174 = vtanh.pop %v1173
    %1176 = vrot.lane.b32.xlu0 %v1174, 64
    %v1177 = vpop.permute.xlu0 %1176
    %v1179 = vmul.f32 %v1157, %v1177
    %v1180 = vsel %vm273, 1, 6
    %vm1181 = vcmp.lt.s32.totalorder %v1180, %v391
    %v1182 = vsel %vm1181, %v1179, %v1053
    %1184 = vrot.lane.b32.xlu0 %v1173, 64
    %v1185 = vpop.permute.xlu0 %1184
    %v1187 = vsel %vm1181, %v1185, %v1058
    %v1188 = vsel %vm1181, 1, 0
    %v1189 = vcvt.s32.f32 %v1188
    %v1190 = vmul.f32 %v1179, %v1189
    %1191 = vst.msk [vmem:[%s538] sm:$0xff] %vm402, %v1190
    %1192 = vst.msk [vmem:[%s536] sm:$0xff] %vm405, %v1190
    %v1193 = vld [vmem:[#allocation2] sm:$0xff]
    %v1194 = vld [vmem:[#allocation2 + $0x8] sm:$0xff]
    %v1195 = vld [vmem:[%s274] sm:$0xff]
    %v1196 = vld [vmem:[%s274 + $0x8] sm:$0xff]
    %v1197 = vsel %vm271, %v1193, %v1195
    %v1198 = vsel %vm272, %v1194, %v1196
    %v1200 = vsel %vm281, %v1182, 0
    %1202 = vmatprep.subr.mxu0 0.0
    %1203 = vmatpush1.msra.mxu0 0.0
    %1204 = vmatprep.subr.mxu0 0.0
    %1205 = vmatpush1.msra.mxu0 0.0
    %1206 = vmatprep.subr.mxu0 0.0
    %1207 = vmatpush1.msra.mxu0 0.0
    %1208 = vmatprep.subr.mxu0 0.0
    %1209 = vmatpush1.msra.mxu0 0.0
    %1210 = vmatprep.subr.mxu0 0.0
    %1211 = vmatpush1.msra.mxu0 0.0
    %1212 = vmatprep.subr.mxu0 0.0
    %1213 = vmatpush1.msra.mxu0 0.0
    %1214 = vmatprep.subr.mxu0 0.0
    %1215 = vmatpush1.msra.mxu0 0.0
    %1216 = vmatprep.subr.mxu0 0.0
    %1217 = vmatpush1.msra.mxu0 0.0
    %1218 = vmatprep.subr.mxu0 %v243
    %1219 = vmatpush1.msra.mxu0 %v242
    %1220 = vmatprep.subr.mxu0 %v241
    %1221 = vmatpush1.msra.mxu0 %v240
    %1222 = vmatprep.subr.mxu0 %v239
    %1223 = vmatpush1.msra.mxu0 %v238
    %1224 = vmatprep.subr.mxu0 %v237
    %1225 = vmatpush1.msra.mxu0 %v236
    %1226 = vmatprep.subr.mxu0 %v235
    %1227 = vmatpush1.msra.mxu0 %v234
    %1228 = vmatprep.subr.mxu0 %v233
    %1229 = vmatpush1.msra.mxu0 %v232
    %1230 = vmatprep.subr.mxu0 %v231
    %1231 = vmatpush1.msra.mxu0 %v230
    %1232 = vmatprep.subr.mxu0 %v229
    %1233 = vmatpush1.msra.mxu0 %v228
    %1234 = vmatprep.subr.mxu0 0.0
    %1235 = vmatpush2.msra.mxu0 0.0
    %1236 = vmatprep.subr.mxu0 0.0
    %1237 = vmatpush2.msra.mxu0 0.0
    %1238 = vmatprep.subr.mxu0 0.0
    %1239 = vmatpush2.msra.mxu0 0.0
    %1240 = vmatprep.subr.mxu0 0.0
    %1241 = vmatpush2.msra.mxu0 0.0
    %1242 = vmatprep.subr.mxu0 0.0
    %1243 = vmatpush2.msra.mxu0 0.0
    %1244 = vmatprep.subr.mxu0 0.0
    %1245 = vmatpush2.msra.mxu0 0.0
    %1246 = vmatprep.subr.mxu0 0.0
    %1247 = vmatpush2.msra.mxu0 0.0
    %1248 = vmatprep.subr.mxu0 0.0
    %1249 = vmatpush2.msra.mxu0 0.0
    %1250 = vmatprep.subr.mxu0 0.0
    %1251 = vmatpush2.msra.mxu0 0.0
    %1252 = vmatprep.subr.mxu0 0.0
    %1253 = vmatpush2.msra.mxu0 0.0
    %1254 = vmatprep.subr.mxu0 0.0
    %1255 = vmatpush2.msra.mxu0 0.0
    %1256 = vmatprep.subr.mxu0 0.0
    %1257 = vmatpush2.msra.mxu0 0.0
    %1258 = vmatprep.subr.mxu0 0.0
    %1259 = vmatpush2.msra.mxu0 0.0
    %1260 = vmatprep.subr.mxu0 0.0
    %1261 = vmatpush2.msra.mxu0 0.0
    %1262 = vmatprep.subr.mxu0 0.0
    %1263 = vmatpush2.msra.mxu0 0.0
    %1264 = vmatprep.subr.mxu0 0.0
    %1265 = vmatpush2.msra.mxu0 0.0
    %1266 = vmatprep.mubr.f32.mxu0 0.0
    %1267 = vmatmul.mubr.f32.gmra.mxu0 %v1200
    %v1268 = vpop.f32.mrf.mxu0
    %v1269 = vadd.f32 0.0, %v1268
    %v1270 = vpop.f32.mrf.mxu0
    %v1271 = vadd.f32 0.0, %v1270
    %1272 = vdwg.mxu0
    %v1273 = vadd.f32 %v1197, %v1269
    %v1274 = vadd.f32 %v1198, %v1271
    %v1275 = vxor.u32 %v1273, 2147483648
    %v1276 = vxor.u32 %v1274, 2147483648
    %v1277 = vmul.f32 %v1275, 1.442695
    %v1278 = vpow.pop %v1277
    %v1279 = vmul.f32 %v1276, 1.442695
    %v1280 = vpow.pop %v1279
    %v1281 = vadd.f32 %v1278, 1.0
    %v1282 = vadd.f32 %v1280, 1.0
    %v1283 = vrcp.pop %v1281
    %v1284 = vmul.f32 1.0, %v1283
    %v1285 = vrcp.pop %v1282
    %v1286 = vmul.f32 1.0, %v1285
    %v1287 = vtanh.pop %v1274
    %1289 = vrot.lane.b32.xlu0 %v1187, 64
    %v1290 = vpop.permute.xlu0 %1289
    %v1292 = vmul.f32 %v1284, %v1290
    %1294 = vrot.lane.b32.xlu0 %v1287, 64
    %v1295 = vpop.permute.xlu0 %1294
    %v1297 = vmul.f32 %v1284, %v1295
    %1299 = vrot.lane.b32.xlu0 %v1297, 64
    %v1300 = vpop.permute.xlu0 %1299
    %v1302 = vadd.f32 %v1292, %v1300
    %v1303 = vtanh.pop %v1302
    %1305 = vrot.lane.b32.xlu0 %v1303, 64
    %v1306 = vpop.permute.xlu0 %1305
    %v1308 = vmul.f32 %v1286, %v1306
    %v1309 = vsel %vm273, 0, 7
    %vm1310 = vcmp.lt.s32.totalorder %v1309, %v391
    %v1311 = vsel %vm1310, 1, 0
    %v1312 = vcvt.s32.f32 %v1311
    %v1313 = vmul.f32 %v1308, %v1312
    %1314 = vst.msk [vmem:[%s404] sm:$0xff] %vm402, %v1313
    %1315 = vst.msk [vmem:[%s5] sm:$0xff] %vm405, %v1313
    // Predicated region
    $region26: #{psifold_lstm_forward.3} parent=1 // pred_check
      _
    $region27: #{psifold_lstm_forward.3} parent=1 // pred_check_branch
      %1317 = sbr.rel (0) target = $region29
    $region28: #{psifold_lstm_forward.3} parent=1 // pred_region
      _
    $region29: #{psifold_lstm_forward.3} parent=1 // pred_fallthru
      _
    // Predicated region
    $region30: #{psifold_lstm_forward.3} parent=1 // pred_check
      _
    $region31: #{psifold_lstm_forward.3} parent=1 // pred_check_branch
      %1319 = sbr.rel (0) target = $region33
    $region32: #{psifold_lstm_forward.3} parent=1 // pred_region
      _
    $region33: #{psifold_lstm_forward.3} parent=1 // pred_fallthru
      _
    %1320 = vsyncpa [#allocation4], 1

// kernel: psifold_lstm_forward.4
$region0: #{psifold_lstm_forward.4}
  #allocation0 [shape = 'u32[]', space=smem, size = 0x4, offset = 0x4, fixed_abs, tag = 'smem constant byte address 0x4 - core index']
  #allocation1 [shape = 'u32[144,128]{1,0:T(1,128)}', space=vmem, size = 0x12000, scoped, tag = 'internal scratch']
  #allocation2 [shape = 'f32[8,8,256]{2,1,0:T(8,128)}', space=vmem, size = 0x10000, scoped, tag = 'scratch operand']
  %s0 = inlined_call_operand.vmem [shape: s32[8,1], index: 0, kind: input, shape index: {}]
  %s1 = inlined_call_operand.vmem [shape: f32[8,8,64], index: 1, kind: input, shape index: {}]
  %s2 = inlined_call_operand.vmem [shape: f32[64,256], index: 2, kind: input, shape index: {}]
  %s3 = inlined_call_operand.vmem [shape: f32[64,256], index: 3, kind: input, shape index: {}]
  %s4 = inlined_call_operand.vmem [shape: f32[1,256], index: 4, kind: input, shape index: {}]
  %s5 = inlined_call_operand.vmem [shape: f32[8,8,64], index: 5, kind: output, shape index: {}]
  %s6 = sld [smem:[#allocation0]]
  $region30: #{psifold_lstm_forward.4} parent=0
    _
  %s8 = ssub.s32 1, %s6
  %s9 = scalar_select 0, %s8, %s6
  // Predicated region
  $region2: #{psifold_lstm_forward.4} parent=0 // pred_check
    _
  $region3: #{psifold_lstm_forward.4} parent=0 // pred_check_branch
    %11 = sbr.rel (0) target = $region5
  $region4: #{psifold_lstm_forward.4} parent=0 // pred_region
    _
  $region5: #{psifold_lstm_forward.4} parent=0 // pred_fallthru
    _
  // Predicated region
  $region6: #{psifold_lstm_forward.4} parent=0 // pred_check
    _
  $region7: #{psifold_lstm_forward.4} parent=0 // pred_check_branch
    %13 = sbr.rel (0) target = $region9
  $region8: #{psifold_lstm_forward.4} parent=0 // pred_region
    _
  $region9: #{psifold_lstm_forward.4} parent=0 // pred_fallthru
    _
  // Predicated region
  $region10: #{psifold_lstm_forward.4} parent=0 // pred_check
    _
  $region11: #{psifold_lstm_forward.4} parent=0 // pred_check_branch
    %15 = sbr.rel (0) target = $region13
  $region12: #{psifold_lstm_forward.4} parent=0 // pred_region
    _
  $region13: #{psifold_lstm_forward.4} parent=0 // pred_fallthru
    _
  // Predicated region
  $region14: #{psifold_lstm_forward.4} parent=0 // pred_check
    _
  $region15: #{psifold_lstm_forward.4} parent=0 // pred_check_branch
    %17 = sbr.rel (0) target = $region17
  $region16: #{psifold_lstm_forward.4} parent=0 // pred_region
    _
  $region17: #{psifold_lstm_forward.4} parent=0 // pred_fallthru
    _
  // Predicated region
  $region18: #{psifold_lstm_forward.4} parent=0 // pred_check
    _
  $region19: #{psifold_lstm_forward.4} parent=0 // pred_check_branch
    %19 = sbr.rel (0) target = $region21
  $region20: #{psifold_lstm_forward.4} parent=0 // pred_region
    _
  $region21: #{psifold_lstm_forward.4} parent=0 // pred_fallthru
    _
  %v20 = vld [vmem:[%s1] sm:$0xff]
  %v21 = vld [vmem:[%s1 + $0x8] sm:$0xff]
  %v22 = vld [vmem:[%s1 + $0x10] sm:$0xff]
  %v23 = vld [vmem:[%s1 + $0x18] sm:$0xff]
  %v24 = vld [vmem:[%s1 + $0x20] sm:$0xff]
  %v25 = vld [vmem:[%s1 + $0x28] sm:$0xff]
  %v26 = vld [vmem:[%s1 + $0x30] sm:$0xff]
  %v27 = vld [vmem:[%s1 + $0x38] sm:$0xff]
  %v28 = vld [vmem:[%s2] sm:$0xff]
  %v29 = vld [vmem:[%s2 + $0x8] sm:$0xff]
  %v30 = vld [vmem:[%s2 + $0x10] sm:$0xff]
  %v31 = vld [vmem:[%s2 + $0x18] sm:$0xff]
  %v32 = vld [vmem:[%s2 + $0x20] sm:$0xff]
  %v33 = vld [vmem:[%s2 + $0x28] sm:$0xff]
  %v34 = vld [vmem:[%s2 + $0x30] sm:$0xff]
  %v35 = vld [vmem:[%s2 + $0x38] sm:$0xff]
  %v36 = vld [vmem:[%s2 + $0x40] sm:$0xff]
  %v37 = vld [vmem:[%s2 + $0x48] sm:$0xff]
  %v38 = vld [vmem:[%s2 + $0x50] sm:$0xff]
  %v39 = vld [vmem:[%s2 + $0x58] sm:$0xff]
  %v40 = vld [vmem:[%s2 + $0x60] sm:$0xff]
  %v41 = vld [vmem:[%s2 + $0x68] sm:$0xff]
  %v42 = vld [vmem:[%s2 + $0x70] sm:$0xff]
  %v43 = vld [vmem:[%s2 + $0x78] sm:$0xff]
  %v44 = vld [vmem:[%s4] sm:$0x3]
  %v46 = vlaneseq
  %v47 = vshrl.u32 %v46, 7
  %v48 = vsub.s32 0, %v47
  %v49 = vrot.slane %v44, %v48
  %v50 = vlaneseq
  %v51 = vshrl.u32 %v50, 7
  %v52 = vsub.s32 1, %v51
  %v53 = vrot.slane %v44, %v52
  %vm56 = vcmask 523264
  %v58 = vsel %vm56, %v20, 0
  %v61 = vsel %vm56, %v21, 0
  %v64 = vsel %vm56, %v22, 0
  %v67 = vsel %vm56, %v23, 0
  %v70 = vsel %vm56, %v24, 0
  %v73 = vsel %vm56, %v25, 0
  %v76 = vsel %vm56, %v26, 0
  %v79 = vsel %vm56, %v27, 0
  %81 = vmatprep.subr.mxu0 0.0
  %82 = vmatpush1.msra.mxu0 0.0
  %83 = vmatprep.subr.mxu0 0.0
  %84 = vmatpush1.msra.mxu0 0.0
  %85 = vmatprep.subr.mxu0 0.0
  %86 = vmatpush1.msra.mxu0 0.0
  %87 = vmatprep.subr.mxu0 0.0
  %88 = vmatpush1.msra.mxu0 0.0
  %89 = vmatprep.subr.mxu0 0.0
  %90 = vmatpush1.msra.mxu0 0.0
  %91 = vmatprep.subr.mxu0 0.0
  %92 = vmatpush1.msra.mxu0 0.0
  %93 = vmatprep.subr.mxu0 0.0
  %94 = vmatpush1.msra.mxu0 0.0
  %95 = vmatprep.subr.mxu0 0.0
  %96 = vmatpush1.msra.mxu0 0.0
  %97 = vmatprep.subr.mxu0 %v43
  %98 = vmatpush1.msra.mxu0 %v42
  %99 = vmatprep.subr.mxu0 %v41
  %100 = vmatpush1.msra.mxu0 %v40
  %101 = vmatprep.subr.mxu0 %v39
  %102 = vmatpush1.msra.mxu0 %v38
  %103 = vmatprep.subr.mxu0 %v37
  %104 = vmatpush1.msra.mxu0 %v36
  %105 = vmatprep.subr.mxu0 %v35
  %106 = vmatpush1.msra.mxu0 %v34
  %107 = vmatprep.subr.mxu0 %v33
  %108 = vmatpush1.msra.mxu0 %v32
  %109 = vmatprep.subr.mxu0 %v31
  %110 = vmatpush1.msra.mxu0 %v30
  %111 = vmatprep.subr.mxu0 %v29
  %112 = vmatpush1.msra.mxu0 %v28
  %113 = vmatprep.subr.mxu0 0.0
  %114 = vmatpush2.msra.mxu0 0.0
  %115 = vmatprep.subr.mxu0 0.0
  %116 = vmatpush2.msra.mxu0 0.0
  %117 = vmatprep.subr.mxu0 0.0
  %118 = vmatpush2.msra.mxu0 0.0
  %119 = vmatprep.subr.mxu0 0.0
  %120 = vmatpush2.msra.mxu0 0.0
  %121 = vmatprep.subr.mxu0 0.0
  %122 = vmatpush2.msra.mxu0 0.0
  %123 = vmatprep.subr.mxu0 0.0
  %124 = vmatpush2.msra.mxu0 0.0
  %125 = vmatprep.subr.mxu0 0.0
  %126 = vmatpush2.msra.mxu0 0.0
  %127 = vmatprep.subr.mxu0 0.0
  %128 = vmatpush2.msra.mxu0 0.0
  %129 = vmatprep.subr.mxu0 0.0
  %130 = vmatpush2.msra.mxu0 0.0
  %131 = vmatprep.subr.mxu0 0.0
  %132 = vmatpush2.msra.mxu0 0.0
  %133 = vmatprep.subr.mxu0 0.0
  %134 = vmatpush2.msra.mxu0 0.0
  %135 = vmatprep.subr.mxu0 0.0
  %136 = vmatpush2.msra.mxu0 0.0
  %137 = vmatprep.subr.mxu0 0.0
  %138 = vmatpush2.msra.mxu0 0.0
  %139 = vmatprep.subr.mxu0 0.0
  %140 = vmatpush2.msra.mxu0 0.0
  %141 = vmatprep.subr.mxu0 0.0
  %142 = vmatpush2.msra.mxu0 0.0
  %143 = vmatprep.subr.mxu0 0.0
  %144 = vmatpush2.msra.mxu0 0.0
  %145 = vmatprep.mubr.f32.mxu0 0.0
  %146 = vmatmul.mubr.f32.gmra.mxu0 %v58
  %v147 = vpop.f32.mrf.mxu0
  %v148 = vadd.f32 %v49, %v147
  %v149 = vpop.f32.mrf.mxu0
  %v150 = vadd.f32 %v53, %v149
  %151 = vmatprep.mubr.f32.mxu0 0.0
  %152 = vmatmul.mubr.f32.gmra.mxu0 %v61
  %v153 = vpop.f32.mrf.mxu0
  %v154 = vadd.f32 %v49, %v153
  %v155 = vpop.f32.mrf.mxu0
  %v156 = vadd.f32 %v53, %v155
  %157 = vmatprep.mubr.f32.mxu0 0.0
  %158 = vmatmul.mubr.f32.gmra.mxu0 %v64
  %v159 = vpop.f32.mrf.mxu0
  %v160 = vadd.f32 %v49, %v159
  %v161 = vpop.f32.mrf.mxu0
  %v162 = vadd.f32 %v53, %v161
  %163 = vmatprep.mubr.f32.mxu0 0.0
  %164 = vmatmul.mubr.f32.gmra.mxu0 %v67
  %v165 = vpop.f32.mrf.mxu0
  %v166 = vadd.f32 %v49, %v165
  %v167 = vpop.f32.mrf.mxu0
  %v168 = vadd.f32 %v53, %v167
  %169 = vmatprep.mubr.f32.mxu0 0.0
  %170 = vmatmul.mubr.f32.gmra.mxu0 %v70
  %v171 = vpop.f32.mrf.mxu0
  %v172 = vadd.f32 %v49, %v171
  %v173 = vpop.f32.mrf.mxu0
  %v174 = vadd.f32 %v53, %v173
  %175 = vmatprep.mubr.f32.mxu0 0.0
  %176 = vmatmul.mubr.f32.gmra.mxu0 %v73
  %v177 = vpop.f32.mrf.mxu0
  %v178 = vadd.f32 %v49, %v177
  %v179 = vpop.f32.mrf.mxu0
  %v180 = vadd.f32 %v53, %v179
  %181 = vmatprep.mubr.f32.mxu0 0.0
  %182 = vmatmul.mubr.f32.gmra.mxu0 %v76
  %v183 = vpop.f32.mrf.mxu0
  %v184 = vadd.f32 %v49, %v183
  %v185 = vpop.f32.mrf.mxu0
  %v186 = vadd.f32 %v53, %v185
  %187 = vmatprep.mubr.f32.mxu0 0.0
  %188 = vmatmul.mubr.f32.gmra.mxu0 %v79
  %v189 = vpop.f32.mrf.mxu0
  %v190 = vadd.f32 %v49, %v189
  %v191 = vpop.f32.mrf.mxu0
  %v192 = vadd.f32 %v53, %v191
  %193 = vdwg.mxu0
  %194 = vst [vmem:[#allocation2] sm:$0xff] %v148
  %195 = vst [vmem:[#allocation2 + $0x8] sm:$0xff] %v150
  %196 = vst [vmem:[#allocation2 + $0x10] sm:$0xff] %v154
  %197 = vst [vmem:[#allocation2 + $0x18] sm:$0xff] %v156
  %198 = vst [vmem:[#allocation2 + $0x20] sm:$0xff] %v160
  %199 = vst [vmem:[#allocation2 + $0x28] sm:$0xff] %v162
  %200 = vst [vmem:[#allocation2 + $0x30] sm:$0xff] %v166
  %201 = vst [vmem:[#allocation2 + $0x38] sm:$0xff] %v168
  %202 = vst [vmem:[#allocation2 + $0x40] sm:$0xff] %v172
  %203 = vst [vmem:[#allocation2 + $0x48] sm:$0xff] %v174
  %204 = vst [vmem:[#allocation2 + $0x50] sm:$0xff] %v178
  %205 = vst [vmem:[#allocation2 + $0x58] sm:$0xff] %v180
  %206 = vst [vmem:[#allocation2 + $0x60] sm:$0xff] %v184
  %207 = vst [vmem:[#allocation2 + $0x68] sm:$0xff] %v186
  %208 = vst [vmem:[#allocation2 + $0x70] sm:$0xff] %v190
  %209 = vst [vmem:[#allocation2 + $0x78] sm:$0xff] %v192
  %v210 = vld [vmem:[%s0] sm:$0xff]
  %v211 = vld [vmem:[%s3] sm:$0xff]
  %v212 = vld [vmem:[%s3 + $0x8] sm:$0xff]
  %v213 = vld [vmem:[%s3 + $0x10] sm:$0xff]
  %v214 = vld [vmem:[%s3 + $0x18] sm:$0xff]
  %v215 = vld [vmem:[%s3 + $0x20] sm:$0xff]
  %v216 = vld [vmem:[%s3 + $0x28] sm:$0xff]
  %v217 = vld [vmem:[%s3 + $0x30] sm:$0xff]
  %v218 = vld [vmem:[%s3 + $0x38] sm:$0xff]
  %v219 = vld [vmem:[%s3 + $0x40] sm:$0xff]
  %v220 = vld [vmem:[%s3 + $0x48] sm:$0xff]
  %v221 = vld [vmem:[%s3 + $0x50] sm:$0xff]
  %v222 = vld [vmem:[%s3 + $0x58] sm:$0xff]
  %v223 = vld [vmem:[%s3 + $0x60] sm:$0xff]
  %v224 = vld [vmem:[%s3 + $0x68] sm:$0xff]
  %v225 = vld [vmem:[%s3 + $0x70] sm:$0xff]
  %v226 = vld [vmem:[%s3 + $0x78] sm:$0xff]
  %v227 = vlaneseq
  %v228 = vand.u32 %v227, 127
  %v229 = vadd.s32 %v228, 128
  %vm230 = vcmp.lt.s32.totalorder %v228, 0
  %v231 = vsub.s32 0, %v228
  %v232 = vsel %vm230, %v231, %v228
  %v233 = vshrl.u32 %v232, 6
  %v234 = vand.u32 %v232, 63
  %v235 = vsub.s32 0, %v234
  %v236 = vsel %vm230, %v235, %v234
  %vm237 = vcmp.lt.s32.totalorder %v229, 0
  %v238 = vsub.s32 0, %v229
  %v239 = vsel %vm237, %v238, %v229
  %v240 = vshrl.u32 %v239, 6
  %v241 = vand.u32 %v239, 63
  %v242 = vsub.s32 0, %v241
  %v243 = vsel %vm237, %v242, %v241
  %vm244 = vcmp.ne.s32.totalorder %v236, 0
  %vm245 = vcmp.ne.s32.totalorder %v243, 0
  %vm246 = vcmp.lt.s32.totalorder %v236, 0
  %vm247 = vcmp.lt.s32.totalorder %v243, 0
  %vm248 = vmand %vm246, %vm244
  %vm249 = vmand %vm247, %vm245
  %v250 = vadd.s32 %v236, 64
  %v251 = vadd.s32 %v243, 64
  %v252 = vsel %vm248, %v250, %v236
  %v253 = vsel %vm249, %v251, %v243
  %vm254 = vcmp.ge.s32.totalorder %v252, 32
  %vm255 = vcmp.ge.s32.totalorder %v253, 32
  %vm256 = vcmp.ge.s32.totalorder %v228, 32
  %s257 = scalar_lea.vmem [#allocation2], 112
  %v258 = vld [vmem:[%s257] sm:$0xff]
  %v259 = vld [vmem:[%s257 + $0x8] sm:$0xff]
  %v260 = vld [vmem:[#allocation2] sm:$0xff]
  %v261 = vld [vmem:[#allocation2 + $0x8] sm:$0xff]
  %v262 = vsel %vm254, %v258, %v260
  %v263 = vsel %vm255, %v259, %v261
  %v265 = vsel %vm56, 0.0, 0
  %267 = vmatprep.subr.mxu0 0.0
  %268 = vmatpush1.msra.mxu0 0.0
  %269 = vmatprep.subr.mxu0 0.0
  %270 = vmatpush1.msra.mxu0 0.0
  %271 = vmatprep.subr.mxu0 0.0
  %272 = vmatpush1.msra.mxu0 0.0
  %273 = vmatprep.subr.mxu0 0.0
  %274 = vmatpush1.msra.mxu0 0.0
  %275 = vmatprep.subr.mxu0 0.0
  %276 = vmatpush1.msra.mxu0 0.0
  %277 = vmatprep.subr.mxu0 0.0
  %278 = vmatpush1.msra.mxu0 0.0
  %279 = vmatprep.subr.mxu0 0.0
  %280 = vmatpush1.msra.mxu0 0.0
  %281 = vmatprep.subr.mxu0 0.0
  %282 = vmatpush1.msra.mxu0 0.0
  %283 = vmatprep.subr.mxu0 %v226
  %284 = vmatpush1.msra.mxu0 %v225
  %285 = vmatprep.subr.mxu0 %v224
  %286 = vmatpush1.msra.mxu0 %v223
  %287 = vmatprep.subr.mxu0 %v222
  %288 = vmatpush1.msra.mxu0 %v221
  %289 = vmatprep.subr.mxu0 %v220
  %290 = vmatpush1.msra.mxu0 %v219
  %291 = vmatprep.subr.mxu0 %v218
  %292 = vmatpush1.msra.mxu0 %v217
  %293 = vmatprep.subr.mxu0 %v216
  %294 = vmatpush1.msra.mxu0 %v215
  %295 = vmatprep.subr.mxu0 %v214
  %296 = vmatpush1.msra.mxu0 %v213
  %297 = vmatprep.subr.mxu0 %v212
  %298 = vmatpush1.msra.mxu0 %v211
  %299 = vmatprep.subr.mxu0 0.0
  %300 = vmatpush2.msra.mxu0 0.0
  %301 = vmatprep.subr.mxu0 0.0
  %302 = vmatpush2.msra.mxu0 0.0
  %303 = vmatprep.subr.mxu0 0.0
  %304 = vmatpush2.msra.mxu0 0.0
  %305 = vmatprep.subr.mxu0 0.0
  %306 = vmatpush2.msra.mxu0 0.0
  %307 = vmatprep.subr.mxu0 0.0
  %308 = vmatpush2.msra.mxu0 0.0
  %309 = vmatprep.subr.mxu0 0.0
  %310 = vmatpush2.msra.mxu0 0.0
  %311 = vmatprep.subr.mxu0 0.0
  %312 = vmatpush2.msra.mxu0 0.0
  %313 = vmatprep.subr.mxu0 0.0
  %314 = vmatpush2.msra.mxu0 0.0
  %315 = vmatprep.subr.mxu0 0.0
  %316 = vmatpush2.msra.mxu0 0.0
  %317 = vmatprep.subr.mxu0 0.0
  %318 = vmatpush2.msra.mxu0 0.0
  %319 = vmatprep.subr.mxu0 0.0
  %320 = vmatpush2.msra.mxu0 0.0
  %321 = vmatprep.subr.mxu0 0.0
  %322 = vmatpush2.msra.mxu0 0.0
  %323 = vmatprep.subr.mxu0 0.0
  %324 = vmatpush2.msra.mxu0 0.0
  %325 = vmatprep.subr.mxu0 0.0
  %326 = vmatpush2.msra.mxu0 0.0
  %327 = vmatprep.subr.mxu0 0.0
  %328 = vmatpush2.msra.mxu0 0.0
  %329 = vmatprep.subr.mxu0 0.0
  %330 = vmatpush2.msra.mxu0 0.0
  %331 = vmatprep.mubr.f32.mxu0 0.0
  %332 = vmatmul.mubr.f32.gmra.mxu0 %v265
  %v333 = vpop.f32.mrf.mxu0
  %v334 = vadd.f32 0.0, %v333
  %v335 = vpop.f32.mrf.mxu0
  %v336 = vadd.f32 0.0, %v335
  %337 = vdwg.mxu0
  %v338 = vadd.f32 %v262, %v334
  %v339 = vadd.f32 %v263, %v336
  %v340 = vxor.u32 %v338, 2147483648
  %v341 = vxor.u32 %v339, 2147483648
  %v342 = vmul.f32 %v340, 1.442695
  %v343 = vpow.pop %v342
  %v344 = vmul.f32 %v341, 1.442695
  %v345 = vpow.pop %v344
  %v346 = vadd.f32 %v343, 1.0
  %v347 = vadd.f32 %v345, 1.0
  %v348 = vrcp.pop %v346
  %v349 = vmul.f32 1.0, %v348
  %v350 = vrcp.pop %v347
  %v351 = vmul.f32 1.0, %v350
  %v352 = vtanh.pop %v339
  %v353 = vmul.f32 %v349, 0.0
  %355 = vrot.lane.b32.xlu0 %v352, 64
  %v356 = vpop.permute.xlu0 %355
  %v358 = vmul.f32 %v349, %v356
  %360 = vrot.lane.b32.xlu0 %v358, 64
  %v361 = vpop.permute.xlu0 %360
  %v363 = vadd.f32 %v353, %v361
  %v364 = vtanh.pop %v363
  %366 = vrot.lane.b32.xlu0 %v364, 64
  %v367 = vpop.permute.xlu0 %366
  %v369 = vmul.f32 %v351, %v367
  %v370 = vsel %vm256, 7, 0
  %371 = vset.pattern.permute.xlu0 0
  %372 = vperm.xlu0 %371, %v210
  %v373 = vpop.permute.xlu0 %372
  %vm374 = vcmp.lt.s32.totalorder %v370, %v373
  %v375 = vsel %vm374, %v369, 0.0
  %377 = vrot.lane.b32.xlu0 %v363, 64
  %v378 = vpop.permute.xlu0 %377
  %v380 = vsel %vm374, %v378, 0.0
  %v381 = vsel %vm374, 1, 0
  %v382 = vcvt.s32.f32 %v381
  %v383 = vmul.f32 %v369, %v382
  %vm384 = vcmask 261120
  %385 = vst.msk [vmem:[%s5] sm:$0xff] %vm384, %v383
  %s386 = scalar_lea.vmem %s5, 56
  %vm387 = vcmask 523520
  %388 = vst.msk [vmem:[%s386] sm:$0xff] %vm387, %v383
  %s389 = scalar_lea.vmem [#allocation2], 96
  %v390 = vld [vmem:[%s389] sm:$0xff]
  %v391 = vld [vmem:[%s389 + $0x8] sm:$0xff]
  %s392 = scalar_lea.vmem [#allocation2], 16
  %v393 = vld [vmem:[%s392] sm:$0xff]
  %v394 = vld [vmem:[%s392 + $0x8] sm:$0xff]
  %v395 = vsel %vm254, %v390, %v393
  %v396 = vsel %vm255, %v391, %v394
  %v398 = vsel %vm56, %v375, 0
  %400 = vmatprep.subr.mxu0 0.0
  %401 = vmatpush1.msra.mxu0 0.0
  %402 = vmatprep.subr.mxu0 0.0
  %403 = vmatpush1.msra.mxu0 0.0
  %404 = vmatprep.subr.mxu0 0.0
  %405 = vmatpush1.msra.mxu0 0.0
  %406 = vmatprep.subr.mxu0 0.0
  %407 = vmatpush1.msra.mxu0 0.0
  %408 = vmatprep.subr.mxu0 0.0
  %409 = vmatpush1.msra.mxu0 0.0
  %410 = vmatprep.subr.mxu0 0.0
  %411 = vmatpush1.msra.mxu0 0.0
  %412 = vmatprep.subr.mxu0 0.0
  %413 = vmatpush1.msra.mxu0 0.0
  %414 = vmatprep.subr.mxu0 0.0
  %415 = vmatpush1.msra.mxu0 0.0
  %416 = vmatprep.subr.mxu0 %v226
  %417 = vmatpush1.msra.mxu0 %v225
  %418 = vmatprep.subr.mxu0 %v224
  %419 = vmatpush1.msra.mxu0 %v223
  %420 = vmatprep.subr.mxu0 %v222
  %421 = vmatpush1.msra.mxu0 %v221
  %422 = vmatprep.subr.mxu0 %v220
  %423 = vmatpush1.msra.mxu0 %v219
  %424 = vmatprep.subr.mxu0 %v218
  %425 = vmatpush1.msra.mxu0 %v217
  %426 = vmatprep.subr.mxu0 %v216
  %427 = vmatpush1.msra.mxu0 %v215
  %428 = vmatprep.subr.mxu0 %v214
  %429 = vmatpush1.msra.mxu0 %v213
  %430 = vmatprep.subr.mxu0 %v212
  %431 = vmatpush1.msra.mxu0 %v211
  %432 = vmatprep.subr.mxu0 0.0
  %433 = vmatpush2.msra.mxu0 0.0
  %434 = vmatprep.subr.mxu0 0.0
  %435 = vmatpush2.msra.mxu0 0.0
  %436 = vmatprep.subr.mxu0 0.0
  %437 = vmatpush2.msra.mxu0 0.0
  %438 = vmatprep.subr.mxu0 0.0
  %439 = vmatpush2.msra.mxu0 0.0
  %440 = vmatprep.subr.mxu0 0.0
  %441 = vmatpush2.msra.mxu0 0.0
  %442 = vmatprep.subr.mxu0 0.0
  %443 = vmatpush2.msra.mxu0 0.0
  %444 = vmatprep.subr.mxu0 0.0
  %445 = vmatpush2.msra.mxu0 0.0
  %446 = vmatprep.subr.mxu0 0.0
  %447 = vmatpush2.msra.mxu0 0.0
  %448 = vmatprep.subr.mxu0 0.0
  %449 = vmatpush2.msra.mxu0 0.0
  %450 = vmatprep.subr.mxu0 0.0
  %451 = vmatpush2.msra.mxu0 0.0
  %452 = vmatprep.subr.mxu0 0.0
  %453 = vmatpush2.msra.mxu0 0.0
  %454 = vmatprep.subr.mxu0 0.0
  %455 = vmatpush2.msra.mxu0 0.0
  %456 = vmatprep.subr.mxu0 0.0
  %457 = vmatpush2.msra.mxu0 0.0
  %458 = vmatprep.subr.mxu0 0.0
  %459 = vmatpush2.msra.mxu0 0.0
  %460 = vmatprep.subr.mxu0 0.0
  %461 = vmatpush2.msra.mxu0 0.0
  %462 = vmatprep.subr.mxu0 0.0
  %463 = vmatpush2.msra.mxu0 0.0
  %464 = vmatprep.mubr.f32.mxu0 0.0
  %465 = vmatmul.mubr.f32.gmra.mxu0 %v398
  %v466 = vpop.f32.mrf.mxu0
  %v467 = vadd.f32 0.0, %v466
  %v468 = vpop.f32.mrf.mxu0
  %v469 = vadd.f32 0.0, %v468
  %470 = vdwg.mxu0
  %v471 = vadd.f32 %v395, %v467
  %v472 = vadd.f32 %v396, %v469
  %v473 = vxor.u32 %v471, 2147483648
  %v474 = vxor.u32 %v472, 2147483648
  %v475 = vmul.f32 %v473, 1.442695
  %v476 = vpow.pop %v475
  %v477 = vmul.f32 %v474, 1.442695
  %v478 = vpow.pop %v477
  %v479 = vadd.f32 %v476, 1.0
  %v480 = vadd.f32 %v478, 1.0
  %v481 = vrcp.pop %v479
  %v482 = vmul.f32 1.0, %v481
  %v483 = vrcp.pop %v480
  %v484 = vmul.f32 1.0, %v483
  %v485 = vtanh.pop %v472
  %487 = vrot.lane.b32.xlu0 %v380, 64
  %v488 = vpop.permute.xlu0 %487
  %v490 = vmul.f32 %v482, %v488
  %492 = vrot.lane.b32.xlu0 %v485, 64
  %v493 = vpop.permute.xlu0 %492
  %v495 = vmul.f32 %v482, %v493
  %497 = vrot.lane.b32.xlu0 %v495, 64
  %v498 = vpop.permute.xlu0 %497
  %v500 = vadd.f32 %v490, %v498
  %v501 = vtanh.pop %v500
  %503 = vrot.lane.b32.xlu0 %v501, 64
  %v504 = vpop.permute.xlu0 %503
  %v506 = vmul.f32 %v484, %v504
  %v507 = vsel %vm256, 6, 1
  %vm508 = vcmp.lt.s32.totalorder %v507, %v373
  %v509 = vsel %vm508, %v506, %v375
  %511 = vrot.lane.b32.xlu0 %v500, 64
  %v512 = vpop.permute.xlu0 %511
  %v514 = vsel %vm508, %v512, %v380
  %v515 = vsel %vm508, 1, 0
  %v516 = vcvt.s32.f32 %v515
  %v517 = vmul.f32 %v506, %v516
  %s518 = scalar_lea.vmem %s5, 8
  %519 = vst.msk [vmem:[%s518] sm:$0xff] %vm384, %v517
  %s520 = scalar_lea.vmem %s5, 48
  %521 = vst.msk [vmem:[%s520] sm:$0xff] %vm387, %v517
  %s522 = scalar_lea.vmem [#allocation2], 80
  %v523 = vld [vmem:[%s522] sm:$0xff]
  %v524 = vld [vmem:[%s522 + $0x8] sm:$0xff]
  %s525 = scalar_lea.vmem [#allocation2], 32
  %v526 = vld [vmem:[%s525] sm:$0xff]
  %v527 = vld [vmem:[%s525 + $0x8] sm:$0xff]
  %v528 = vsel %vm254, %v523, %v526
  %v529 = vsel %vm255, %v524, %v527
  %v531 = vsel %vm56, %v509, 0
  %533 = vmatprep.subr.mxu0 0.0
  %534 = vmatpush1.msra.mxu0 0.0
  %535 = vmatprep.subr.mxu0 0.0
  %536 = vmatpush1.msra.mxu0 0.0
  %537 = vmatprep.subr.mxu0 0.0
  %538 = vmatpush1.msra.mxu0 0.0
  %539 = vmatprep.subr.mxu0 0.0
  %540 = vmatpush1.msra.mxu0 0.0
  %541 = vmatprep.subr.mxu0 0.0
  %542 = vmatpush1.msra.mxu0 0.0
  %543 = vmatprep.subr.mxu0 0.0
  %544 = vmatpush1.msra.mxu0 0.0
  %545 = vmatprep.subr.mxu0 0.0
  %546 = vmatpush1.msra.mxu0 0.0
  %547 = vmatprep.subr.mxu0 0.0
  %548 = vmatpush1.msra.mxu0 0.0
  %549 = vmatprep.subr.mxu0 %v226
  %550 = vmatpush1.msra.mxu0 %v225
  %551 = vmatprep.subr.mxu0 %v224
  %552 = vmatpush1.msra.mxu0 %v223
  %553 = vmatprep.subr.mxu0 %v222
  %554 = vmatpush1.msra.mxu0 %v221
  %555 = vmatprep.subr.mxu0 %v220
  %556 = vmatpush1.msra.mxu0 %v219
  %557 = vmatprep.subr.mxu0 %v218
  %558 = vmatpush1.msra.mxu0 %v217
  %559 = vmatprep.subr.mxu0 %v216
  %560 = vmatpush1.msra.mxu0 %v215
  %561 = vmatprep.subr.mxu0 %v214
  %562 = vmatpush1.msra.mxu0 %v213
  %563 = vmatprep.subr.mxu0 %v212
  %564 = vmatpush1.msra.mxu0 %v211
  %565 = vmatprep.subr.mxu0 0.0
  %566 = vmatpush2.msra.mxu0 0.0
  %567 = vmatprep.subr.mxu0 0.0
  %568 = vmatpush2.msra.mxu0 0.0
  %569 = vmatprep.subr.mxu0 0.0
  %570 = vmatpush2.msra.mxu0 0.0
  %571 = vmatprep.subr.mxu0 0.0
  %572 = vmatpush2.msra.mxu0 0.0
  %573 = vmatprep.subr.mxu0 0.0
  %574 = vmatpush2.msra.mxu0 0.0
  %575 = vmatprep.subr.mxu0 0.0
  %576 = vmatpush2.msra.mxu0 0.0
  %577 = vmatprep.subr.mxu0 0.0
  %578 = vmatpush2.msra.mxu0 0.0
  %579 = vmatprep.subr.mxu0 0.0
  %580 = vmatpush2.msra.mxu0 0.0
  %581 = vmatprep.subr.mxu0 0.0
  %582 = vmatpush2.msra.mxu0 0.0
  %583 = vmatprep.subr.mxu0 0.0
  %584 = vmatpush2.msra.mxu0 0.0
  %585 = vmatprep.subr.mxu0 0.0
  %586 = vmatpush2.msra.mxu0 0.0
  %587 = vmatprep.subr.mxu0 0.0
  %588 = vmatpush2.msra.mxu0 0.0
  %589 = vmatprep.subr.mxu0 0.0
  %590 = vmatpush2.msra.mxu0 0.0
  %591 = vmatprep.subr.mxu0 0.0
  %592 = vmatpush2.msra.mxu0 0.0
  %593 = vmatprep.subr.mxu0 0.0
  %594 = vmatpush2.msra.mxu0 0.0
  %595 = vmatprep.subr.mxu0 0.0
  %596 = vmatpush2.msra.mxu0 0.0
  %597 = vmatprep.mubr.f32.mxu0 0.0
  %598 = vmatmul.mubr.f32.gmra.mxu0 %v531
  %v599 = vpop.f32.mrf.mxu0
  %v600 = vadd.f32 0.0, %v599
  %v601 = vpop.f32.mrf.mxu0
  %v602 = vadd.f32 0.0, %v601
  %603 = vdwg.mxu0
  %v604 = vadd.f32 %v528, %v600
  %v605 = vadd.f32 %v529, %v602
  %v606 = vxor.u32 %v604, 2147483648
  %v607 = vxor.u32 %v605, 2147483648
  %v608 = vmul.f32 %v606, 1.442695
  %v609 = vpow.pop %v608
  %v610 = vmul.f32 %v607, 1.442695
  %v611 = vpow.pop %v610
  %v612 = vadd.f32 %v609, 1.0
  %v613 = vadd.f32 %v611, 1.0
  %v614 = vrcp.pop %v612
  %v615 = vmul.f32 1.0, %v614
  %v616 = vrcp.pop %v613
  %v617 = vmul.f32 1.0, %v616
  %v618 = vtanh.pop %v605
  %620 = vrot.lane.b32.xlu0 %v514, 64
  %v621 = vpop.permute.xlu0 %620
  %v623 = vmul.f32 %v615, %v621
  %625 = vrot.lane.b32.xlu0 %v618, 64
  %v626 = vpop.permute.xlu0 %625
  %v628 = vmul.f32 %v615, %v626
  %630 = vrot.lane.b32.xlu0 %v628, 64
  %v631 = vpop.permute.xlu0 %630
  %v633 = vadd.f32 %v623, %v631
  %v634 = vtanh.pop %v633
  %636 = vrot.lane.b32.xlu0 %v634, 64
  %v637 = vpop.permute.xlu0 %636
  %v639 = vmul.f32 %v617, %v637
  %v640 = vsel %vm256, 5, 2
  %vm641 = vcmp.lt.s32.totalorder %v640, %v373
  %v642 = vsel %vm641, %v639, %v509
  %644 = vrot.lane.b32.xlu0 %v633, 64
  %v645 = vpop.permute.xlu0 %644
  %v647 = vsel %vm641, %v645, %v514
  %v648 = vsel %vm641, 1, 0
  %v649 = vcvt.s32.f32 %v648
  %v650 = vmul.f32 %v639, %v649
  %s651 = scalar_lea.vmem %s5, 16
  %652 = vst.msk [vmem:[%s651] sm:$0xff] %vm384, %v650
  %s653 = scalar_lea.vmem %s5, 40
  %654 = vst.msk [vmem:[%s653] sm:$0xff] %vm387, %v650
  %s655 = scalar_lea.vmem [#allocation2], 64
  %v656 = vld [vmem:[%s655] sm:$0xff]
  %v657 = vld [vmem:[%s655 + $0x8] sm:$0xff]
  %s658 = scalar_lea.vmem [#allocation2], 48
  %v659 = vld [vmem:[%s658] sm:$0xff]
  %v660 = vld [vmem:[%s658 + $0x8] sm:$0xff]
  %v661 = vsel %vm254, %v656, %v659
  %v662 = vsel %vm255, %v657, %v660
  %v664 = vsel %vm56, %v642, 0
  %666 = vmatprep.subr.mxu0 0.0
  %667 = vmatpush1.msra.mxu0 0.0
  %668 = vmatprep.subr.mxu0 0.0
  %669 = vmatpush1.msra.mxu0 0.0
  %670 = vmatprep.subr.mxu0 0.0
  %671 = vmatpush1.msra.mxu0 0.0
  %672 = vmatprep.subr.mxu0 0.0
  %673 = vmatpush1.msra.mxu0 0.0
  %674 = vmatprep.subr.mxu0 0.0
  %675 = vmatpush1.msra.mxu0 0.0
  %676 = vmatprep.subr.mxu0 0.0
  %677 = vmatpush1.msra.mxu0 0.0
  %678 = vmatprep.subr.mxu0 0.0
  %679 = vmatpush1.msra.mxu0 0.0
  %680 = vmatprep.subr.mxu0 0.0
  %681 = vmatpush1.msra.mxu0 0.0
  %682 = vmatprep.subr.mxu0 %v226
  %683 = vmatpush1.msra.mxu0 %v225
  %684 = vmatprep.subr.mxu0 %v224
  %685 = vmatpush1.msra.mxu0 %v223
  %686 = vmatprep.subr.mxu0 %v222
  %687 = vmatpush1.msra.mxu0 %v221
  %688 = vmatprep.subr.mxu0 %v220
  %689 = vmatpush1.msra.mxu0 %v219
  %690 = vmatprep.subr.mxu0 %v218
  %691 = vmatpush1.msra.mxu0 %v217
  %692 = vmatprep.subr.mxu0 %v216
  %693 = vmatpush1.msra.mxu0 %v215
  %694 = vmatprep.subr.mxu0 %v214
  %695 = vmatpush1.msra.mxu0 %v213
  %696 = vmatprep.subr.mxu0 %v212
  %697 = vmatpush1.msra.mxu0 %v211
  %698 = vmatprep.subr.mxu0 0.0
  %699 = vmatpush2.msra.mxu0 0.0
  %700 = vmatprep.subr.mxu0 0.0
  %701 = vmatpush2.msra.mxu0 0.0
  %702 = vmatprep.subr.mxu0 0.0
  %703 = vmatpush2.msra.mxu0 0.0
  %704 = vmatprep.subr.mxu0 0.0
  %705 = vmatpush2.msra.mxu0 0.0
  %706 = vmatprep.subr.mxu0 0.0
  %707 = vmatpush2.msra.mxu0 0.0
  %708 = vmatprep.subr.mxu0 0.0
  %709 = vmatpush2.msra.mxu0 0.0
  %710 = vmatprep.subr.mxu0 0.0
  %711 = vmatpush2.msra.mxu0 0.0
  %712 = vmatprep.subr.mxu0 0.0
  %713 = vmatpush2.msra.mxu0 0.0
  %714 = vmatprep.subr.mxu0 0.0
  %715 = vmatpush2.msra.mxu0 0.0
  %716 = vmatprep.subr.mxu0 0.0
  %717 = vmatpush2.msra.mxu0 0.0
  %718 = vmatprep.subr.mxu0 0.0
  %719 = vmatpush2.msra.mxu0 0.0
  %720 = vmatprep.subr.mxu0 0.0
  %721 = vmatpush2.msra.mxu0 0.0
  %722 = vmatprep.subr.mxu0 0.0
  %723 = vmatpush2.msra.mxu0 0.0
  %724 = vmatprep.subr.mxu0 0.0
  %725 = vmatpush2.msra.mxu0 0.0
  %726 = vmatprep.subr.mxu0 0.0
  %727 = vmatpush2.msra.mxu0 0.0
  %728 = vmatprep.subr.mxu0 0.0
  %729 = vmatpush2.msra.mxu0 0.0
  %730 = vmatprep.mubr.f32.mxu0 0.0
  %731 = vmatmul.mubr.f32.gmra.mxu0 %v664
  %v732 = vpop.f32.mrf.mxu0
  %v733 = vadd.f32 0.0, %v732
  %v734 = vpop.f32.mrf.mxu0
  %v735 = vadd.f32 0.0, %v734
  %736 = vdwg.mxu0
  %v737 = vadd.f32 %v661, %v733
  %v738 = vadd.f32 %v662, %v735
  %v739 = vxor.u32 %v737, 2147483648
  %v740 = vxor.u32 %v738, 2147483648
  %v741 = vmul.f32 %v739, 1.442695
  %v742 = vpow.pop %v741
  %v743 = vmul.f32 %v740, 1.442695
  %v744 = vpow.pop %v743
  %v745 = vadd.f32 %v742, 1.0
  %v746 = vadd.f32 %v744, 1.0
  %v747 = vrcp.pop %v745
  %v748 = vmul.f32 1.0, %v747
  %v749 = vrcp.pop %v746
  %v750 = vmul.f32 1.0, %v749
  %v751 = vtanh.pop %v738
  %753 = vrot.lane.b32.xlu0 %v647, 64
  %v754 = vpop.permute.xlu0 %753
  %v756 = vmul.f32 %v748, %v754
  %758 = vrot.lane.b32.xlu0 %v751, 64
  %v759 = vpop.permute.xlu0 %758
  %v761 = vmul.f32 %v748, %v759
  %763 = vrot.lane.b32.xlu0 %v761, 64
  %v764 = vpop.permute.xlu0 %763
  %v766 = vadd.f32 %v756, %v764
  %v767 = vtanh.pop %v766
  %769 = vrot.lane.b32.xlu0 %v767, 64
  %v770 = vpop.permute.xlu0 %769
  %v772 = vmul.f32 %v750, %v770
  %v773 = vsel %vm256, 4, 3
  %vm774 = vcmp.lt.s32.totalorder %v773, %v373
  %v775 = vsel %vm774, %v772, %v642
  %777 = vrot.lane.b32.xlu0 %v766, 64
  %v778 = vpop.permute.xlu0 %777
  %v780 = vsel %vm774, %v778, %v647
  %v781 = vsel %vm774, 1, 0
  %v782 = vcvt.s32.f32 %v781
  %v783 = vmul.f32 %v772, %v782
  %s784 = scalar_lea.vmem %s5, 24
  %785 = vst.msk [vmem:[%s784] sm:$0xff] %vm384, %v783
  %s786 = scalar_lea.vmem %s5, 32
  %787 = vst.msk [vmem:[%s786] sm:$0xff] %vm387, %v783
  %v788 = vld [vmem:[%s658] sm:$0xff]
  %v789 = vld [vmem:[%s658 + $0x8] sm:$0xff]
  %v790 = vld [vmem:[%s655] sm:$0xff]
  %v791 = vld [vmem:[%s655 + $0x8] sm:$0xff]
  %v792 = vsel %vm254, %v788, %v790
  %v793 = vsel %vm255, %v789, %v791
  %v795 = vsel %vm56, %v775, 0
  %797 = vmatprep.subr.mxu0 0.0
  %798 = vmatpush1.msra.mxu0 0.0
  %799 = vmatprep.subr.mxu0 0.0
  %800 = vmatpush1.msra.mxu0 0.0
  %801 = vmatprep.subr.mxu0 0.0
  %802 = vmatpush1.msra.mxu0 0.0
  %803 = vmatprep.subr.mxu0 0.0
  %804 = vmatpush1.msra.mxu0 0.0
  %805 = vmatprep.subr.mxu0 0.0
  %806 = vmatpush1.msra.mxu0 0.0
  %807 = vmatprep.subr.mxu0 0.0
  %808 = vmatpush1.msra.mxu0 0.0
  %809 = vmatprep.subr.mxu0 0.0
  %810 = vmatpush1.msra.mxu0 0.0
  %811 = vmatprep.subr.mxu0 0.0
  %812 = vmatpush1.msra.mxu0 0.0
  %813 = vmatprep.subr.mxu0 %v226
  %814 = vmatpush1.msra.mxu0 %v225
  %815 = vmatprep.subr.mxu0 %v224
  %816 = vmatpush1.msra.mxu0 %v223
  %817 = vmatprep.subr.mxu0 %v222
  %818 = vmatpush1.msra.mxu0 %v221
  %819 = vmatprep.subr.mxu0 %v220
  %820 = vmatpush1.msra.mxu0 %v219
  %821 = vmatprep.subr.mxu0 %v218
  %822 = vmatpush1.msra.mxu0 %v217
  %823 = vmatprep.subr.mxu0 %v216
  %824 = vmatpush1.msra.mxu0 %v215
  %825 = vmatprep.subr.mxu0 %v214
  %826 = vmatpush1.msra.mxu0 %v213
  %827 = vmatprep.subr.mxu0 %v212
  %828 = vmatpush1.msra.mxu0 %v211
  %829 = vmatprep.subr.mxu0 0.0
  %830 = vmatpush2.msra.mxu0 0.0
  %831 = vmatprep.subr.mxu0 0.0
  %832 = vmatpush2.msra.mxu0 0.0
  %833 = vmatprep.subr.mxu0 0.0
  %834 = vmatpush2.msra.mxu0 0.0
  %835 = vmatprep.subr.mxu0 0.0
  %836 = vmatpush2.msra.mxu0 0.0
  %837 = vmatprep.subr.mxu0 0.0
  %838 = vmatpush2.msra.mxu0 0.0
  %839 = vmatprep.subr.mxu0 0.0
  %840 = vmatpush2.msra.mxu0 0.0
  %841 = vmatprep.subr.mxu0 0.0
  %842 = vmatpush2.msra.mxu0 0.0
  %843 = vmatprep.subr.mxu0 0.0
  %844 = vmatpush2.msra.mxu0 0.0
  %845 = vmatprep.subr.mxu0 0.0
  %846 = vmatpush2.msra.mxu0 0.0
  %847 = vmatprep.subr.mxu0 0.0
  %848 = vmatpush2.msra.mxu0 0.0
  %849 = vmatprep.subr.mxu0 0.0
  %850 = vmatpush2.msra.mxu0 0.0
  %851 = vmatprep.subr.mxu0 0.0
  %852 = vmatpush2.msra.mxu0 0.0
  %853 = vmatprep.subr.mxu0 0.0
  %854 = vmatpush2.msra.mxu0 0.0
  %855 = vmatprep.subr.mxu0 0.0
  %856 = vmatpush2.msra.mxu0 0.0
  %857 = vmatprep.subr.mxu0 0.0
  %858 = vmatpush2.msra.mxu0 0.0
  %859 = vmatprep.subr.mxu0 0.0
  %860 = vmatpush2.msra.mxu0 0.0
  %861 = vmatprep.mubr.f32.mxu0 0.0
  %862 = vmatmul.mubr.f32.gmra.mxu0 %v795
  %v863 = vpop.f32.mrf.mxu0
  %v864 = vadd.f32 0.0, %v863
  %v865 = vpop.f32.mrf.mxu0
  %v866 = vadd.f32 0.0, %v865
  %867 = vdwg.mxu0
  %v868 = vadd.f32 %v792, %v864
  %v869 = vadd.f32 %v793, %v866
  %v870 = vxor.u32 %v868, 2147483648
  %v871 = vxor.u32 %v869, 2147483648
  %v872 = vmul.f32 %v870, 1.442695
  %v873 = vpow.pop %v872
  %v874 = vmul.f32 %v871, 1.442695
  %v875 = vpow.pop %v874
  %v876 = vadd.f32 %v873, 1.0
  %v877 = vadd.f32 %v875, 1.0
  %v878 = vrcp.pop %v876
  %v879 = vmul.f32 1.0, %v878
  %v880 = vrcp.pop %v877
  %v881 = vmul.f32 1.0, %v880
  %v882 = vtanh.pop %v869
  %884 = vrot.lane.b32.xlu0 %v780, 64
  %v885 = vpop.permute.xlu0 %884
  %v887 = vmul.f32 %v879, %v885
  %889 = vrot.lane.b32.xlu0 %v882, 64
  %v890 = vpop.permute.xlu0 %889
  %v892 = vmul.f32 %v879, %v890
  %894 = vrot.lane.b32.xlu0 %v892, 64
  %v895 = vpop.permute.xlu0 %894
  %v897 = vadd.f32 %v887, %v895
  %v898 = vtanh.pop %v897
  %900 = vrot.lane.b32.xlu0 %v898, 64
  %v901 = vpop.permute.xlu0 %900
  %v903 = vmul.f32 %v881, %v901
  %v904 = vsel %vm256, 3, 4
  %vm905 = vcmp.lt.s32.totalorder %v904, %v373
  %v906 = vsel %vm905, %v903, %v775
  %908 = vrot.lane.b32.xlu0 %v897, 64
  %v909 = vpop.permute.xlu0 %908
  %v911 = vsel %vm905, %v909, %v780
  %v912 = vsel %vm905, 1, 0
  %v913 = vcvt.s32.f32 %v912
  %v914 = vmul.f32 %v903, %v913
  %915 = vst.msk [vmem:[%s786] sm:$0xff] %vm384, %v914
  %916 = vst.msk [vmem:[%s784] sm:$0xff] %vm387, %v914
  %v917 = vld [vmem:[%s525] sm:$0xff]
  %v918 = vld [vmem:[%s525 + $0x8] sm:$0xff]
  %v919 = vld [vmem:[%s522] sm:$0xff]
  %v920 = vld [vmem:[%s522 + $0x8] sm:$0xff]
  %v921 = vsel %vm254, %v917, %v919
  %v922 = vsel %vm255, %v918, %v920
  %v924 = vsel %vm56, %v906, 0
  %926 = vmatprep.subr.mxu0 0.0
  %927 = vmatpush1.msra.mxu0 0.0
  %928 = vmatprep.subr.mxu0 0.0
  %929 = vmatpush1.msra.mxu0 0.0
  %930 = vmatprep.subr.mxu0 0.0
  %931 = vmatpush1.msra.mxu0 0.0
  %932 = vmatprep.subr.mxu0 0.0
  %933 = vmatpush1.msra.mxu0 0.0
  %934 = vmatprep.subr.mxu0 0.0
  %935 = vmatpush1.msra.mxu0 0.0
  %936 = vmatprep.subr.mxu0 0.0
  %937 = vmatpush1.msra.mxu0 0.0
  %938 = vmatprep.subr.mxu0 0.0
  %939 = vmatpush1.msra.mxu0 0.0
  %940 = vmatprep.subr.mxu0 0.0
  %941 = vmatpush1.msra.mxu0 0.0
  %942 = vmatprep.subr.mxu0 %v226
  %943 = vmatpush1.msra.mxu0 %v225
  %944 = vmatprep.subr.mxu0 %v224
  %945 = vmatpush1.msra.mxu0 %v223
  %946 = vmatprep.subr.mxu0 %v222
  %947 = vmatpush1.msra.mxu0 %v221
  %948 = vmatprep.subr.mxu0 %v220
  %949 = vmatpush1.msra.mxu0 %v219
  %950 = vmatprep.subr.mxu0 %v218
  %951 = vmatpush1.msra.mxu0 %v217
  %952 = vmatprep.subr.mxu0 %v216
  %953 = vmatpush1.msra.mxu0 %v215
  %954 = vmatprep.subr.mxu0 %v214
  %955 = vmatpush1.msra.mxu0 %v213
  %956 = vmatprep.subr.mxu0 %v212
  %957 = vmatpush1.msra.mxu0 %v211
  %958 = vmatprep.subr.mxu0 0.0
  %959 = vmatpush2.msra.mxu0 0.0
  %960 = vmatprep.subr.mxu0 0.0
  %961 = vmatpush2.msra.mxu0 0.0
  %962 = vmatprep.subr.mxu0 0.0
  %963 = vmatpush2.msra.mxu0 0.0
  %964 = vmatprep.subr.mxu0 0.0
  %965 = vmatpush2.msra.mxu0 0.0
  %966 = vmatprep.subr.mxu0 0.0
  %967 = vmatpush2.msra.mxu0 0.0
  %968 = vmatprep.subr.mxu0 0.0
  %969 = vmatpush2.msra.mxu0 0.0
  %970 = vmatprep.subr.mxu0 0.0
  %971 = vmatpush2.msra.mxu0 0.0
  %972 = vmatprep.subr.mxu0 0.0
  %973 = vmatpush2.msra.mxu0 0.0
  %974 = vmatprep.subr.mxu0 0.0
  %975 = vmatpush2.msra.mxu0 0.0
  %976 = vmatprep.subr.mxu0 0.0
  %977 = vmatpush2.msra.mxu0 0.0
  %978 = vmatprep.subr.mxu0 0.0
  %979 = vmatpush2.msra.mxu0 0.0
  %980 = vmatprep.subr.mxu0 0.0
  %981 = vmatpush2.msra.mxu0 0.0
  %982 = vmatprep.subr.mxu0 0.0
  %983 = vmatpush2.msra.mxu0 0.0
  %984 = vmatprep.subr.mxu0 0.0
  %985 = vmatpush2.msra.mxu0 0.0
  %986 = vmatprep.subr.mxu0 0.0
  %987 = vmatpush2.msra.mxu0 0.0
  %988 = vmatprep.subr.mxu0 0.0
  %989 = vmatpush2.msra.mxu0 0.0
  %990 = vmatprep.mubr.f32.mxu0 0.0
  %991 = vmatmul.mubr.f32.gmra.mxu0 %v924
  %v992 = vpop.f32.mrf.mxu0
  %v993 = vadd.f32 0.0, %v992
  %v994 = vpop.f32.mrf.mxu0
  %v995 = vadd.f32 0.0, %v994
  %996 = vdwg.mxu0
  %v997 = vadd.f32 %v921, %v993
  %v998 = vadd.f32 %v922, %v995
  %v999 = vxor.u32 %v997, 2147483648
  %v1000 = vxor.u32 %v998, 2147483648
  %v1001 = vmul.f32 %v999, 1.442695
  %v1002 = vpow.pop %v1001
  %v1003 = vmul.f32 %v1000, 1.442695
  %v1004 = vpow.pop %v1003
  %v1005 = vadd.f32 %v1002, 1.0
  %v1006 = vadd.f32 %v1004, 1.0
  %v1007 = vrcp.pop %v1005
  %v1008 = vmul.f32 1.0, %v1007
  %v1009 = vrcp.pop %v1006
  %v1010 = vmul.f32 1.0, %v1009
  %v1011 = vtanh.pop %v998
  %1013 = vrot.lane.b32.xlu0 %v911, 64
  %v1014 = vpop.permute.xlu0 %1013
  %v1016 = vmul.f32 %v1008, %v1014
  %1018 = vrot.lane.b32.xlu0 %v1011, 64
  %v1019 = vpop.permute.xlu0 %1018
  %v1021 = vmul.f32 %v1008, %v1019
  %1023 = vrot.lane.b32.xlu0 %v1021, 64
  %v1024 = vpop.permute.xlu0 %1023
  %v1026 = vadd.f32 %v1016, %v1024
  %v1027 = vtanh.pop %v1026
  %1029 = vrot.lane.b32.xlu0 %v1027, 64
  %v1030 = vpop.permute.xlu0 %1029
  %v1032 = vmul.f32 %v1010, %v1030
  %v1033 = vsel %vm256, 2, 5
  %vm1034 = vcmp.lt.s32.totalorder %v1033, %v373
  %v1035 = vsel %vm1034, %v1032, %v906
  %1037 = vrot.lane.b32.xlu0 %v1026, 64
  %v1038 = vpop.permute.xlu0 %1037
  %v1040 = vsel %vm1034, %v1038, %v911
  %v1041 = vsel %vm1034, 1, 0
  %v1042 = vcvt.s32.f32 %v1041
  %v1043 = vmul.f32 %v1032, %v1042
  %1044 = vst.msk [vmem:[%s653] sm:$0xff] %vm384, %v1043
  %1045 = vst.msk [vmem:[%s651] sm:$0xff] %vm387, %v1043
  %v1046 = vld [vmem:[%s392] sm:$0xff]
  %v1047 = vld [vmem:[%s392 + $0x8] sm:$0xff]
  %v1048 = vld [vmem:[%s389] sm:$0xff]
  %v1049 = vld [vmem:[%s389 + $0x8] sm:$0xff]
  %v1050 = vsel %vm254, %v1046, %v1048
  %v1051 = vsel %vm255, %v1047, %v1049
  %v1053 = vsel %vm56, %v1035, 0
  %1055 = vmatprep.subr.mxu0 0.0
  %1056 = vmatpush1.msra.mxu0 0.0
  %1057 = vmatprep.subr.mxu0 0.0
  %1058 = vmatpush1.msra.mxu0 0.0
  %1059 = vmatprep.subr.mxu0 0.0
  %1060 = vmatpush1.msra.mxu0 0.0
  %1061 = vmatprep.subr.mxu0 0.0
  %1062 = vmatpush1.msra.mxu0 0.0
  %1063 = vmatprep.subr.mxu0 0.0
  %1064 = vmatpush1.msra.mxu0 0.0
  %1065 = vmatprep.subr.mxu0 0.0
  %1066 = vmatpush1.msra.mxu0 0.0
  %1067 = vmatprep.subr.mxu0 0.0
  %1068 = vmatpush1.msra.mxu0 0.0
  %1069 = vmatprep.subr.mxu0 0.0
  %1070 = vmatpush1.msra.mxu0 0.0
  %1071 = vmatprep.subr.mxu0 %v226
  %1072 = vmatpush1.msra.mxu0 %v225
  %1073 = vmatprep.subr.mxu0 %v224
  %1074 = vmatpush1.msra.mxu0 %v223
  %1075 = vmatprep.subr.mxu0 %v222
  %1076 = vmatpush1.msra.mxu0 %v221
  %1077 = vmatprep.subr.mxu0 %v220
  %1078 = vmatpush1.msra.mxu0 %v219
  %1079 = vmatprep.subr.mxu0 %v218
  %1080 = vmatpush1.msra.mxu0 %v217
  %1081 = vmatprep.subr.mxu0 %v216
  %1082 = vmatpush1.msra.mxu0 %v215
  %1083 = vmatprep.subr.mxu0 %v214
  %1084 = vmatpush1.msra.mxu0 %v213
  %1085 = vmatprep.subr.mxu0 %v212
  %1086 = vmatpush1.msra.mxu0 %v211
  %1087 = vmatprep.subr.mxu0 0.0
  %1088 = vmatpush2.msra.mxu0 0.0
  %1089 = vmatprep.subr.mxu0 0.0
  %1090 = vmatpush2.msra.mxu0 0.0
  %1091 = vmatprep.subr.mxu0 0.0
  %1092 = vmatpush2.msra.mxu0 0.0
  %1093 = vmatprep.subr.mxu0 0.0
  %1094 = vmatpush2.msra.mxu0 0.0
  %1095 = vmatprep.subr.mxu0 0.0
  %1096 = vmatpush2.msra.mxu0 0.0
  %1097 = vmatprep.subr.mxu0 0.0
  %1098 = vmatpush2.msra.mxu0 0.0
  %1099 = vmatprep.subr.mxu0 0.0
  %1100 = vmatpush2.msra.mxu0 0.0
  %1101 = vmatprep.subr.mxu0 0.0
  %1102 = vmatpush2.msra.mxu0 0.0
  %1103 = vmatprep.subr.mxu0 0.0
  %1104 = vmatpush2.msra.mxu0 0.0
  %1105 = vmatprep.subr.mxu0 0.0
  %1106 = vmatpush2.msra.mxu0 0.0
  %1107 = vmatprep.subr.mxu0 0.0
  %1108 = vmatpush2.msra.mxu0 0.0
  %1109 = vmatprep.subr.mxu0 0.0
  %1110 = vmatpush2.msra.mxu0 0.0
  %1111 = vmatprep.subr.mxu0 0.0
  %1112 = vmatpush2.msra.mxu0 0.0
  %1113 = vmatprep.subr.mxu0 0.0
  %1114 = vmatpush2.msra.mxu0 0.0
  %1115 = vmatprep.subr.mxu0 0.0
  %1116 = vmatpush2.msra.mxu0 0.0
  %1117 = vmatprep.subr.mxu0 0.0
  %1118 = vmatpush2.msra.mxu0 0.0
  %1119 = vmatprep.mubr.f32.mxu0 0.0
  %1120 = vmatmul.mubr.f32.gmra.mxu0 %v1053
  %v1121 = vpop.f32.mrf.mxu0
  %v1122 = vadd.f32 0.0, %v1121
  %v1123 = vpop.f32.mrf.mxu0
  %v1124 = vadd.f32 0.0, %v1123
  %1125 = vdwg.mxu0
  %v1126 = vadd.f32 %v1050, %v1122
  %v1127 = vadd.f32 %v1051, %v1124
  %v1128 = vxor.u32 %v1126, 2147483648
  %v1129 = vxor.u32 %v1127, 2147483648
  %v1130 = vmul.f32 %v1128, 1.442695
  %v1131 = vpow.pop %v1130
  %v1132 = vmul.f32 %v1129, 1.442695
  %v1133 = vpow.pop %v1132
  %v1134 = vadd.f32 %v1131, 1.0
  %v1135 = vadd.f32 %v1133, 1.0
  %v1136 = vrcp.pop %v1134
  %v1137 = vmul.f32 1.0, %v1136
  %v1138 = vrcp.pop %v1135
  %v1139 = vmul.f32 1.0, %v1138
  %v1140 = vtanh.pop %v1127
  %1142 = vrot.lane.b32.xlu0 %v1040, 64
  %v1143 = vpop.permute.xlu0 %1142
  %v1145 = vmul.f32 %v1137, %v1143
  %1147 = vrot.lane.b32.xlu0 %v1140, 64
  %v1148 = vpop.permute.xlu0 %1147
  %v1150 = vmul.f32 %v1137, %v1148
  %1152 = vrot.lane.b32.xlu0 %v1150, 64
  %v1153 = vpop.permute.xlu0 %1152
  %v1155 = vadd.f32 %v1145, %v1153
  %v1156 = vtanh.pop %v1155
  %1158 = vrot.lane.b32.xlu0 %v1156, 64
  %v1159 = vpop.permute.xlu0 %1158
  %v1161 = vmul.f32 %v1139, %v1159
  %v1162 = vsel %vm256, 1, 6
  %vm1163 = vcmp.lt.s32.totalorder %v1162, %v373
  %v1164 = vsel %vm1163, %v1161, %v1035
  %1166 = vrot.lane.b32.xlu0 %v1155, 64
  %v1167 = vpop.permute.xlu0 %1166
  %v1169 = vsel %vm1163, %v1167, %v1040
  %v1170 = vsel %vm1163, 1, 0
  %v1171 = vcvt.s32.f32 %v1170
  %v1172 = vmul.f32 %v1161, %v1171
  %1173 = vst.msk [vmem:[%s520] sm:$0xff] %vm384, %v1172
  %1174 = vst.msk [vmem:[%s518] sm:$0xff] %vm387, %v1172
  %v1175 = vld [vmem:[#allocation2] sm:$0xff]
  %v1176 = vld [vmem:[#allocation2 + $0x8] sm:$0xff]
  %v1177 = vld [vmem:[%s257] sm:$0xff]
  %v1178 = vld [vmem:[%s257 + $0x8] sm:$0xff]
  %v1179 = vsel %vm254, %v1175, %v1177
  %v1180 = vsel %vm255, %v1176, %v1178
  %v1182 = vsel %vm56, %v1164, 0
  %1184 = vmatprep.subr.mxu0 0.0
  %1185 = vmatpush1.msra.mxu0 0.0
  %1186 = vmatprep.subr.mxu0 0.0
  %1187 = vmatpush1.msra.mxu0 0.0
  %1188 = vmatprep.subr.mxu0 0.0
  %1189 = vmatpush1.msra.mxu0 0.0
  %1190 = vmatprep.subr.mxu0 0.0
  %1191 = vmatpush1.msra.mxu0 0.0
  %1192 = vmatprep.subr.mxu0 0.0
  %1193 = vmatpush1.msra.mxu0 0.0
  %1194 = vmatprep.subr.mxu0 0.0
  %1195 = vmatpush1.msra.mxu0 0.0
  %1196 = vmatprep.subr.mxu0 0.0
  %1197 = vmatpush1.msra.mxu0 0.0
  %1198 = vmatprep.subr.mxu0 0.0
  %1199 = vmatpush1.msra.mxu0 0.0
  %1200 = vmatprep.subr.mxu0 %v226
  %1201 = vmatpush1.msra.mxu0 %v225
  %1202 = vmatprep.subr.mxu0 %v224
  %1203 = vmatpush1.msra.mxu0 %v223
  %1204 = vmatprep.subr.mxu0 %v222
  %1205 = vmatpush1.msra.mxu0 %v221
  %1206 = vmatprep.subr.mxu0 %v220
  %1207 = vmatpush1.msra.mxu0 %v219
  %1208 = vmatprep.subr.mxu0 %v218
  %1209 = vmatpush1.msra.mxu0 %v217
  %1210 = vmatprep.subr.mxu0 %v216
  %1211 = vmatpush1.msra.mxu0 %v215
  %1212 = vmatprep.subr.mxu0 %v214
  %1213 = vmatpush1.msra.mxu0 %v213
  %1214 = vmatprep.subr.mxu0 %v212
  %1215 = vmatpush1.msra.mxu0 %v211
  %1216 = vmatprep.subr.mxu0 0.0
  %1217 = vmatpush2.msra.mxu0 0.0
  %1218 = vmatprep.subr.mxu0 0.0
  %1219 = vmatpush2.msra.mxu0 0.0
  %1220 = vmatprep.subr.mxu0 0.0
  %1221 = vmatpush2.msra.mxu0 0.0
  %1222 = vmatprep.subr.mxu0 0.0
  %1223 = vmatpush2.msra.mxu0 0.0
  %1224 = vmatprep.subr.mxu0 0.0
  %1225 = vmatpush2.msra.mxu0 0.0
  %1226 = vmatprep.subr.mxu0 0.0
  %1227 = vmatpush2.msra.mxu0 0.0
  %1228 = vmatprep.subr.mxu0 0.0
  %1229 = vmatpush2.msra.mxu0 0.0
  %1230 = vmatprep.subr.mxu0 0.0
  %1231 = vmatpush2.msra.mxu0 0.0
  %1232 = vmatprep.subr.mxu0 0.0
  %1233 = vmatpush2.msra.mxu0 0.0
  %1234 = vmatprep.subr.mxu0 0.0
  %1235 = vmatpush2.msra.mxu0 0.0
  %1236 = vmatprep.subr.mxu0 0.0
  %1237 = vmatpush2.msra.mxu0 0.0
  %1238 = vmatprep.subr.mxu0 0.0
  %1239 = vmatpush2.msra.mxu0 0.0
  %1240 = vmatprep.subr.mxu0 0.0
  %1241 = vmatpush2.msra.mxu0 0.0
  %1242 = vmatprep.subr.mxu0 0.0
  %1243 = vmatpush2.msra.mxu0 0.0
  %1244 = vmatprep.subr.mxu0 0.0
  %1245 = vmatpush2.msra.mxu0 0.0
  %1246 = vmatprep.subr.mxu0 0.0
  %1247 = vmatpush2.msra.mxu0 0.0
  %1248 = vmatprep.mubr.f32.mxu0 0.0
  %1249 = vmatmul.mubr.f32.gmra.mxu0 %v1182
  %v1250 = vpop.f32.mrf.mxu0
  %v1251 = vadd.f32 0.0, %v1250
  %v1252 = vpop.f32.mrf.mxu0
  %v1253 = vadd.f32 0.0, %v1252
  %1254 = vdwg.mxu0
  %v1255 = vadd.f32 %v1179, %v1251
  %v1256 = vadd.f32 %v1180, %v1253
  %v1257 = vxor.u32 %v1255, 2147483648
  %v1258 = vxor.u32 %v1256, 2147483648
  %v1259 = vmul.f32 %v1257, 1.442695
  %v1260 = vpow.pop %v1259
  %v1261 = vmul.f32 %v1258, 1.442695
  %v1262 = vpow.pop %v1261
  %v1263 = vadd.f32 %v1260, 1.0
  %v1264 = vadd.f32 %v1262, 1.0
  %v1265 = vrcp.pop %v1263
  %v1266 = vmul.f32 1.0, %v1265
  %v1267 = vrcp.pop %v1264
  %v1268 = vmul.f32 1.0, %v1267
  %v1269 = vtanh.pop %v1256
  %1271 = vrot.lane.b32.xlu0 %v1169, 64
  %v1272 = vpop.permute.xlu0 %1271
  %v1274 = vmul.f32 %v1266, %v1272
  %1276 = vrot.lane.b32.xlu0 %v1269, 64
  %v1277 = vpop.permute.xlu0 %1276
  %v1279 = vmul.f32 %v1266, %v1277
  %1281 = vrot.lane.b32.xlu0 %v1279, 64
  %v1282 = vpop.permute.xlu0 %1281
  %v1284 = vadd.f32 %v1274, %v1282
  %v1285 = vtanh.pop %v1284
  %1287 = vrot.lane.b32.xlu0 %v1285, 64
  %v1288 = vpop.permute.xlu0 %1287
  %v1290 = vmul.f32 %v1268, %v1288
  %v1291 = vsel %vm256, 0, 7
  %vm1292 = vcmp.lt.s32.totalorder %v1291, %v373
  %v1293 = vsel %vm1292, 1, 0
  %v1294 = vcvt.s32.f32 %v1293
  %v1295 = vmul.f32 %v1290, %v1294
  %1296 = vst.msk [vmem:[%s386] sm:$0xff] %vm384, %v1295
  %1297 = vst.msk [vmem:[%s5] sm:$0xff] %vm387, %v1295
  // Predicated region
  $region22: #{psifold_lstm_forward.4} parent=0 // pred_check
    _
  $region23: #{psifold_lstm_forward.4} parent=0 // pred_check_branch
    %1299 = sbr.rel (0) target = $region25
  $region24: #{psifold_lstm_forward.4} parent=0 // pred_region
    _
  $region25: #{psifold_lstm_forward.4} parent=0 // pred_fallthru
    _
  // Predicated region
  $region26: #{psifold_lstm_forward.4} parent=0 // pred_check
    _
  $region27: #{psifold_lstm_forward.4} parent=0 // pred_check_branch
    %1301 = sbr.rel (0) target = $region29
  $region28: #{psifold_lstm_forward.4} parent=0 // pred_region
    _
  $region29: #{psifold_lstm_forward.4} parent=0 // pred_fallthru
    _

</llo_original>
